<compile_context>
chip_gen: v7x
topology: tpu7x:2x2x1
jax: 0.10.0
libtpu: 0.0.40
codegen_flags: <defaults>
</compile_context>

<pallas_src>
import numpy as np
import jax
import jax.numpy as jnp
from jax import lax
from jax.experimental import pallas as pl
from jax.experimental.pallas import tpu as pltpu


# Geometry specialised to the input size the module was designed for:
# (N, 4, 64, 128) NCHW  ->  flattened features (N, 576).
BH, BW = 8, 16               # super-pixel block (absorbs every stride in the net)
R0 = 80                      # raster rows per sample (64 real + 16 zero pad)
R1, R2, R3 = 56, 38, 11      # raster rows computed per layer
OFF1 = (0, 1, 8, 9)                                            # conv1  (A*8 + B)
OFF2 = tuple(du * 8 + dv for du in range(3) for dv in range(3))  # conv2' (du*8+dv)
OFF3 = tuple(u * 8 + v for u in range(4) for v in range(4))      # conv3' (u*8+v)


# ----------------------------------------------------------------------------
# Fused Pallas kernel: one grid step == B samples, 3 GEMMs total.
# ----------------------------------------------------------------------------
def _encoder_kernel(xb_ref, w1_ref, w2_ref, w3_ref, b3_ref, o_ref):
    f32, bf16 = jnp.float32, jnp.bfloat16
    B = xb_ref.shape[0]

    x0 = xb_ref[...]                       # (B, 80, 512) bf16 super-pixel raster
    w1 = w1_ref[...]                       # (2048, 256) bf16
    w2 = w2_ref[...]                       # (2304,  64) bf16
    w3 = w3_ref[...]                       # (1024,  96) bf16

    # ---- conv1 (12x12, stride 4): phase-concat (N=256) + k-concat (K=2048) ----
    # x1[56*b + he*8+we, (ph*4+pw)*32 + co] == conv1_nobias[b, co, 2he+ph, 4we+pw]
    lhs1 = jnp.concatenate(
        [jnp.concatenate([x0[b, o:o + R1, :] for o in OFF1], axis=1)
         for b in range(B)], axis=0)                       # (B*56, 2048) bf16
    x1 = jnp.dot(lhs1, w1, preferred_element_type=f32).astype(bf16)

    # ---- conv2' = pool1 (4,s2) folded into conv2 (2x4,s(1,2)): one GEMM -------
    # x2[38*b + h2*8+w2, d] == (pool1 o conv2)_nobias[b, d, h2, w2]
    lhs2 = jnp.concatenate(
        [jnp.concatenate([x1[R1 * b + o:R1 * b + o + R2, :] for o in OFF2], axis=1)
         for b in range(B)], axis=0)                       # (B*38, 2304) bf16
    x2 = jnp.dot(lhs2, w2, preferred_element_type=f32).astype(bf16)

    # ---- conv3' = pool2 (3,s1) folded into conv3 (2x2): one GEMM --------------
    # x3[11*b + h4*8+w4, e] == encoder_out[b, e, h4, w4] (bias added once, here)
    lhs3 = jnp.concatenate(
        [jnp.concatenate([x2[R2 * b + o:R2 * b + o + R3, :] for o in OFF3], axis=1)
         for b in range(B)], axis=0)                       # (B*11, 1024) bf16
    x3 = jnp.dot(lhs3, w3, preferred_element_type=f32) + b3_ref[...]

    # Valid output positions per sample: raster rows {0,1,2} (h4=0), {8,9,10} (h4=1).
    for b in range(B):
        o_ref[b] = jnp.concatenate(
            [x3[R3 * b + 0:R3 * b + 3, :], x3[R3 * b + 8:R3 * b + 11, :]], axis=0)


# ----------------------------------------------------------------------------
# Host-side, one-time weight re-packing (pool folding + phase/K concatenation)
# ----------------------------------------------------------------------------
def prep_weights(p):
    w1 = np.asarray(p["w1"], np.float32)   # (32, 4, 12, 12)
    b1 = np.asarray(p["b1"], np.float32)   # (32,)
    w2 = np.asarray(p["w2"], np.float32)   # (64, 32, 2, 4)
    b2 = np.asarray(p["b2"], np.float32)   # (64,)
    w3 = np.asarray(p["w3"], np.float32)   # (96, 64, 2, 2)
    b3 = np.asarray(p["b3"], np.float32)   # (96,)

    # conv1: raster channel g = (dy*16+dx)*4 + c; output column n = (ph*4+pw)*32 + co;
    # K block = A*2+B  <->  raster row offset A*8+B in OFF1.
    W1 = np.zeros((4, BH * BW * 4, 256), np.float32)
    for ph in range(2):
        for pw in range(4):
            n0 = (ph * 4 + pw) * 32
            for i in range(12):
                for j in range(12):
                    A, dy = divmod(4 * ph + i, BH)
                    Bb, dx = divmod(4 * pw + j, BW)
                    g0 = (dy * BW + dx) * 4
                    W1[A * 2 + Bb, g0:g0 + 4, n0:n0 + 32] = w1[:, :, i, j].T
    W1 = W1.reshape(4 * 512, 256)                          # (2048, 256)

    # pool1(4,s2) o conv2(2x4,s(1,2))  ==  conv(32->64, k=(6,10), s=(2,4)) on conv1 out.
    w2p = np.zeros((64, 32, 6, 10), np.float32)
    for i2 in range(2):
        for j2 in range(4):
            w2p[:, :, 2 * i2:2 * i2 + 4, 2 * j2:2 * j2 + 4] += \
                w2[:, :, i2, j2][:, :, None, None]
    w2p /= 16.0
    b2_eff = b2 + np.einsum("dcuv,c->d", w2p, b1)          # fold b1 forward

    # repack conv2' per raster row-offset block (du, dv); column m = (ph*4+pw)*32 + c.
    W2 = np.zeros((9, 256, 64), np.float32)
    for du in range(3):
        for dv in range(3):
            for ph in range(2):
                for pw in range(4):
                    u, v = 2 * du + ph, 4 * dv + pw
                    if u < 6 and v < 10:
                        m0 = (ph * 4 + pw) * 32
                        W2[du * 3 + dv, m0:m0 + 32, :] = w2p[:, :, u, v].T
    W2 = W2.reshape(9 * 256, 64)                           # (2304, 64)

    # pool2(3,s1) o conv3(2x2)  ==  conv(64->96, k=(4,4), s=1) on conv2' out.
    w3p = np.zeros((96, 64, 4, 4), np.float32)
    for i3 in range(2):
        for j3 in range(2):
            w3p[:, :, i3:i3 + 3, j3:j3 + 3] += w3[:, :, i3, j3][:, :, None, None]
    w3p /= 9.0
    b3_eff = b3 + np.einsum("eduv,d->e", w3p, b2_eff)      # fold b2_eff forward

    W3 = np.zeros((16, 64, 96), np.float32)
    for u in range(4):
        for v in range(4):
            W3[u * 4 + v] = w3p[:, :, u, v].T
    W3 = W3.reshape(16 * 64, 96)                           # (1024, 96)

    return {
        "w1": jnp.asarray(W1, jnp.bfloat16),
        "w2": jnp.asarray(W2, jnp.bfloat16),
        "w3": jnp.asarray(W3, jnp.bfloat16),
        "b3": jnp.asarray(b3_eff.reshape(1, 96), jnp.float32),
    }


def _space_to_depth(maps):
    """(N, 4, 64, 128) NCHW f32 -> (N, 80, 512) bf16 super-pixel raster."""
    N = maps.shape[0]
    x = maps.astype(jnp.bfloat16).transpose(0, 2, 3, 1)    # NHWC, bf16 host-side
    x = x.reshape(N, 8, BH, 8, BW, 4)                      # [n, hb, dy, wb, dx, c]
    x = x.transpose(0, 1, 3, 2, 4, 5)                      # [n, hb, wb, dy, dx, c]
    x = x.reshape(N, 64, BH * BW * 4)                      # row = hb*8 + wb
    return jnp.pad(x, ((0, 0), (0, R0 - 64), (0, 0)))      # zero pad rows 64..79


# ----------------------------------------------------------------------------
# Encoder forward (matches the PyTorch module's forward)
# ----------------------------------------------------------------------------
@jax.jit
def encoder_forward(maps, params, w):
    del params  # TODO(synk): param_encoder output is never used by the reference forward.
    N, C, H, W = maps.shape
    assert (C, H, W) == (4, 64, 128), "kernel geometry specialised to 4x64x128"

    # B samples per grid step (fills MXU M); always keep >= 2 grid steps (v7x 2 TCs).
    B = max(1, min(4, N // 2))
    n_pad = -(-N // B) * B

    xb = _space_to_depth(maps)                             # (N, 80, 512) bf16
    if n_pad != N:
        xb = jnp.pad(xb, ((0, n_pad - N), (0, 0), (0, 0)))

    out = pl.pallas_call(
        _encoder_kernel,
        out_shape=jax.ShapeDtypeStruct((n_pad, 6, 96), jnp.float32),
        grid=(n_pad // B,),
        in_specs=[
            pl.BlockSpec((B, R0, 512), lambda n: (n, 0, 0)),   # input raster
            pl.BlockSpec((2048, 256), lambda n: (0, 0)),       # conv1  weights
            pl.BlockSpec((2304, 64), lambda n: (0, 0)),        # conv2' weights
            pl.BlockSpec((1024, 96), lambda n: (0, 0)),        # conv3' weights
            pl.BlockSpec((1, 96), lambda n: (0, 0)),           # folded bias
        ],
        out_specs=pl.BlockSpec((B, 6, 96), lambda n: (n, 0, 0)),
        compiler_params=pltpu.CompilerParams(
            dimension_semantics=("parallel",)),
    )(xb, w["w1"], w["w2"], w["w3"], w["b3"])

    out = out[:N]
    # out[n, h4*3 + w4, co]; PyTorch .view(N, -1) on NCHW == co*6 + h4*3 + w4.
    return out.transpose(0, 2, 1).reshape(N, 576)


# ----------------------------------------------------------------------------
# Pure-JAX reference (sanity check only)
# ----------------------------------------------------------------------------
def reference_forward(maps, p):
    dn = ("NCHW", "OIHW", "NCHW")
    x = lax.conv_general_dilated(maps, p["w1"], (4, 4), "VALID",
                                 dimension_numbers=dn) + p["b1"][None, :, None, None]
    x = lax.reduce_window(x, 0.0, lax.add, (1, 1, 4, 4), (1, 1, 2, 2), "VALID") / 16.0
    x = lax.conv_general_dilated(x, p["w2"], (1, 2), "VALID",
                                 dimension_numbers=dn) + p["b2"][None, :, None, None]
    x = lax.reduce_window(x, 0.0, lax.add, (1, 1, 3, 3), (1, 1, 1, 1), "VALID") / 9.0
    x = lax.conv_general_dilated(x, p["w3"], (1, 1), "VALID",
                                 dimension_numbers=dn) + p["b3"][None, :, None, None]
    return x.reshape(x.shape[0], -1)


def init_params(key):
    def uinit(k, shape, fan_in):
        bound = 1.0 / np.sqrt(fan_in)
        return jax.random.uniform(k, shape, jnp.float32, -bound, bound)

    ks = jax.random.split(key, 6)
    return {
        "w1": uinit(ks[0], (32, 4, 12, 12), 4 * 12 * 12),
        "b1": uinit(ks[1], (32,), 4 * 12 * 12),
        "w2": uinit(ks[2], (64, 32, 2, 4), 32 * 2 * 4),
        "b2": uinit(ks[3], (64,), 32 * 2 * 4),
        "w3": uinit(ks[4], (96, 64, 2, 2), 64 * 2 * 2),
        "b3": uinit(ks[5], (96,), 64 * 2 * 2),
    }


if __name__ == "__main__":
    key = jax.random.PRNGKey(0)
    k_maps, k_params, k_w = jax.random.split(key, 3)

    p = init_params(k_w)
    w = prep_weights(p)                                    # once, host-side

    # Primary small case (batch=2, B=1 per step, 2 grid steps) and a second case
    # exercising M-stacking (B=2) plus the batch-padding path (N=5 -> 6).
    for N in (2, 5):
        maps = jax.random.normal(k_maps, (N, 4, 64, 128), jnp.float32)   # NCHW
        params = jax.random.normal(k_params, (N, 3), jnp.float32)        # unused
        out = jax.block_until_ready(encoder_forward(maps, params, w))
        assert out.shape == (N, 576), out.shape
        ref = jax.block_until_ready(reference_forward(maps, p))
        np.testing.assert_allclose(np.asarray(out), np.asarray(ref),
                                   rtol=2e-2, atol=2e-2)

    print("KERNEL_OK")
</pallas_src>

<mosaic_0001>
module attributes {stable_mosaic.version = 11 : i64} {
  func.func @_encoder_kernel(%arg0: i32, %arg1: memref<1x80x512xbf16, #tpu.memory_space<vmem>>, %arg2: memref<2048x256xbf16, #tpu.memory_space<vmem>>, %arg3: memref<2304x64xbf16, #tpu.memory_space<vmem>>, %arg4: memref<1024x96xbf16, #tpu.memory_space<vmem>>, %arg5: memref<1x96xf32, #tpu.memory_space<vmem>>, %arg6: memref<1x6x96xf32, #tpu.memory_space<vmem>>) attributes {dimension_semantics = [#tpu.dimension_semantics<parallel>], iteration_bounds = array<i64: 2>, scalar_prefetch = 0 : i64, scratch_operands = 0 : i64, tpu.core_type = #tpu.core_type<tc>, window_params = [{transform_indices = @transform_0, window_bounds = array<i64: 1, 80, 512>}, {pipeline_mode = #tpu.pipeline_mode<synchronous>, transform_indices = @transform_1, window_bounds = array<i64: 2048, 256>}, {pipeline_mode = #tpu.pipeline_mode<synchronous>, transform_indices = @transform_2, window_bounds = array<i64: 2304, 64>}, {pipeline_mode = #tpu.pipeline_mode<synchronous>, transform_indices = @transform_3, window_bounds = array<i64: 1024, 96>}, {pipeline_mode = #tpu.pipeline_mode<synchronous>, transform_indices = @transform_4, window_bounds = array<i64: 1, 96>}, {transform_indices = @transform_5, window_bounds = array<i64: 1, 6, 96>}]} {
    %c0 = arith.constant 0 : index
    %c0_0 = arith.constant 0 : index
    %c0_1 = arith.constant 0 : index
    %0 = vector.load %arg1[%c0, %c0_0, %c0_1] : memref<1x80x512xbf16, #tpu.memory_space<vmem>>, vector<1x80x512xbf16>
    %c0_2 = arith.constant 0 : index
    %c0_3 = arith.constant 0 : index
    %1 = vector.load %arg2[%c0_2, %c0_3] : memref<2048x256xbf16, #tpu.memory_space<vmem>>, vector<2048x256xbf16>
    %c0_4 = arith.constant 0 : index
    %c0_5 = arith.constant 0 : index
    %2 = vector.load %arg3[%c0_4, %c0_5] : memref<2304x64xbf16, #tpu.memory_space<vmem>>, vector<2304x64xbf16>
    %c0_6 = arith.constant 0 : index
    %c0_7 = arith.constant 0 : index
    %3 = vector.load %arg4[%c0_6, %c0_7] : memref<1024x96xbf16, #tpu.memory_space<vmem>>, vector<1024x96xbf16>
    %4 = vector.extract_strided_slice %0 {offsets = [0, 0, 0], sizes = [1, 56, 512], strides = [1, 1, 1]} : vector<1x80x512xbf16> to vector<1x56x512xbf16>
    %5 = vector.shape_cast %4 : vector<1x56x512xbf16> to vector<56x512xbf16>
    %6 = vector.extract_strided_slice %0 {offsets = [0, 1, 0], sizes = [1, 56, 512], strides = [1, 1, 1]} : vector<1x80x512xbf16> to vector<1x56x512xbf16>
    %7 = vector.shape_cast %6 : vector<1x56x512xbf16> to vector<56x512xbf16>
    %8 = vector.extract_strided_slice %0 {offsets = [0, 8, 0], sizes = [1, 56, 512], strides = [1, 1, 1]} : vector<1x80x512xbf16> to vector<1x56x512xbf16>
    %9 = vector.shape_cast %8 : vector<1x56x512xbf16> to vector<56x512xbf16>
    %10 = vector.extract_strided_slice %0 {offsets = [0, 9, 0], sizes = [1, 56, 512], strides = [1, 1, 1]} : vector<1x80x512xbf16> to vector<1x56x512xbf16>
    %11 = vector.shape_cast %10 : vector<1x56x512xbf16> to vector<56x512xbf16>
    %12 = tpu.concatenate %5, %7, %9, %11 in 1 : vector<56x512xbf16>, vector<56x512xbf16>, vector<56x512xbf16>, vector<56x512xbf16> -> vector<56x2048xbf16>
    %cst = arith.constant dense<0.000000e+00> : vector<56x256xf32>
    %13 = tpu.matmul %12, %1, %cst {dimension_numbers = #tpu.dot_dimension_numbers<[1], [0], [0], [1], [0, 0, 1, 1], [], []>} : vector<56x2048xbf16>, vector<2048x256xbf16>, vector<56x256xf32> -> vector<56x256xf32>
    %14 = arith.truncf %13 : vector<56x256xf32> to vector<56x256xbf16>
    %15 = vector.extract_strided_slice %14 {offsets = [0, 0], sizes = [38, 256], strides = [1, 1]} : vector<56x256xbf16> to vector<38x256xbf16>
    %16 = vector.extract_strided_slice %14 {offsets = [1, 0], sizes = [38, 256], strides = [1, 1]} : vector<56x256xbf16> to vector<38x256xbf16>
    %17 = vector.extract_strided_slice %14 {offsets = [2, 0], sizes = [38, 256], strides = [1, 1]} : vector<56x256xbf16> to vector<38x256xbf16>
    %18 = vector.extract_strided_slice %14 {offsets = [8, 0], sizes = [38, 256], strides = [1, 1]} : vector<56x256xbf16> to vector<38x256xbf16>
    %19 = vector.extract_strided_slice %14 {offsets = [9, 0], sizes = [38, 256], strides = [1, 1]} : vector<56x256xbf16> to vector<38x256xbf16>
    %20 = vector.extract_strided_slice %14 {offsets = [10, 0], sizes = [38, 256], strides = [1, 1]} : vector<56x256xbf16> to vector<38x256xbf16>
    %21 = vector.extract_strided_slice %14 {offsets = [16, 0], sizes = [38, 256], strides = [1, 1]} : vector<56x256xbf16> to vector<38x256xbf16>
    %22 = vector.extract_strided_slice %14 {offsets = [17, 0], sizes = [38, 256], strides = [1, 1]} : vector<56x256xbf16> to vector<38x256xbf16>
    %23 = vector.extract_strided_slice %14 {offsets = [18, 0], sizes = [38, 256], strides = [1, 1]} : vector<56x256xbf16> to vector<38x256xbf16>
    %24 = tpu.concatenate %15, %16, %17, %18, %19, %20, %21, %22, %23 in 1 : vector<38x256xbf16>, vector<38x256xbf16>, vector<38x256xbf16>, vector<38x256xbf16>, vector<38x256xbf16>, vector<38x256xbf16>, vector<38x256xbf16>, vector<38x256xbf16>, vector<38x256xbf16> -> vector<38x2304xbf16>
    %cst_8 = arith.constant dense<0.000000e+00> : vector<38x64xf32>
    %25 = tpu.matmul %24, %2, %cst_8 {dimension_numbers = #tpu.dot_dimension_numbers<[1], [0], [0], [1], [0, 0, 1, 1], [], []>} : vector<38x2304xbf16>, vector<2304x64xbf16>, vector<38x64xf32> -> vector<38x64xf32>
    %26 = arith.truncf %25 : vector<38x64xf32> to vector<38x64xbf16>
    %27 = vector.extract_strided_slice %26 {offsets = [0, 0], sizes = [11, 64], strides = [1, 1]} : vector<38x64xbf16> to vector<11x64xbf16>
    %28 = vector.extract_strided_slice %26 {offsets = [1, 0], sizes = [11, 64], strides = [1, 1]} : vector<38x64xbf16> to vector<11x64xbf16>
    %29 = vector.extract_strided_slice %26 {offsets = [2, 0], sizes = [11, 64], strides = [1, 1]} : vector<38x64xbf16> to vector<11x64xbf16>
    %30 = vector.extract_strided_slice %26 {offsets = [3, 0], sizes = [11, 64], strides = [1, 1]} : vector<38x64xbf16> to vector<11x64xbf16>
    %31 = vector.extract_strided_slice %26 {offsets = [8, 0], sizes = [11, 64], strides = [1, 1]} : vector<38x64xbf16> to vector<11x64xbf16>
    %32 = vector.extract_strided_slice %26 {offsets = [9, 0], sizes = [11, 64], strides = [1, 1]} : vector<38x64xbf16> to vector<11x64xbf16>
    %33 = vector.extract_strided_slice %26 {offsets = [10, 0], sizes = [11, 64], strides = [1, 1]} : vector<38x64xbf16> to vector<11x64xbf16>
    %34 = vector.extract_strided_slice %26 {offsets = [11, 0], sizes = [11, 64], strides = [1, 1]} : vector<38x64xbf16> to vector<11x64xbf16>
    %35 = vector.extract_strided_slice %26 {offsets = [16, 0], sizes = [11, 64], strides = [1, 1]} : vector<38x64xbf16> to vector<11x64xbf16>
    %36 = vector.extract_strided_slice %26 {offsets = [17, 0], sizes = [11, 64], strides = [1, 1]} : vector<38x64xbf16> to vector<11x64xbf16>
    %37 = vector.extract_strided_slice %26 {offsets = [18, 0], sizes = [11, 64], strides = [1, 1]} : vector<38x64xbf16> to vector<11x64xbf16>
    %38 = vector.extract_strided_slice %26 {offsets = [19, 0], sizes = [11, 64], strides = [1, 1]} : vector<38x64xbf16> to vector<11x64xbf16>
    %39 = vector.extract_strided_slice %26 {offsets = [24, 0], sizes = [11, 64], strides = [1, 1]} : vector<38x64xbf16> to vector<11x64xbf16>
    %40 = vector.extract_strided_slice %26 {offsets = [25, 0], sizes = [11, 64], strides = [1, 1]} : vector<38x64xbf16> to vector<11x64xbf16>
    %41 = vector.extract_strided_slice %26 {offsets = [26, 0], sizes = [11, 64], strides = [1, 1]} : vector<38x64xbf16> to vector<11x64xbf16>
    %42 = vector.extract_strided_slice %26 {offsets = [27, 0], sizes = [11, 64], strides = [1, 1]} : vector<38x64xbf16> to vector<11x64xbf16>
    %43 = tpu.concatenate %27, %28, %29, %30, %31, %32, %33, %34, %35, %36, %37, %38, %39, %40, %41, %42 in 1 : vector<11x64xbf16>, vector<11x64xbf16>, vector<11x64xbf16>, vector<11x64xbf16>, vector<11x64xbf16>, vector<11x64xbf16>, vector<11x64xbf16>, vector<11x64xbf16>, vector<11x64xbf16>, vector<11x64xbf16>, vector<11x64xbf16>, vector<11x64xbf16>, vector<11x64xbf16>, vector<11x64xbf16>, vector<11x64xbf16>, vector<11x64xbf16> -> vector<11x1024xbf16>
    %cst_9 = arith.constant dense<0.000000e+00> : vector<11x96xf32>
    %44 = tpu.matmul %43, %3, %cst_9 {dimension_numbers = #tpu.dot_dimension_numbers<[1], [0], [0], [1], [0, 0, 1, 1], [], []>} : vector<11x1024xbf16>, vector<1024x96xbf16>, vector<11x96xf32> -> vector<11x96xf32>
    %c0_10 = arith.constant 0 : index
    %c0_11 = arith.constant 0 : index
    %45 = vector.load %arg5[%c0_10, %c0_11] : memref<1x96xf32, #tpu.memory_space<vmem>>, vector<1x96xf32>
    %46 = vector.broadcast %45 : vector<1x96xf32> to vector<11x96xf32>
    %47 = arith.addf %44, %46 : vector<11x96xf32>
    %48 = vector.extract_strided_slice %47 {offsets = [0, 0], sizes = [3, 96], strides = [1, 1]} : vector<11x96xf32> to vector<3x96xf32>
    %49 = vector.extract_strided_slice %47 {offsets = [8, 0], sizes = [3, 96], strides = [1, 1]} : vector<11x96xf32> to vector<3x96xf32>
    %50 = tpu.concatenate %48, %49 in 0 : vector<3x96xf32>, vector<3x96xf32> -> vector<6x96xf32>
    %c0_12 = arith.constant 0 : index
    %c0_13 = arith.constant 0 : index
    %c0_14 = arith.constant 0 : index
    %51 = vector.load %arg6[%c0_12, %c0_13, %c0_14] : memref<1x6x96xf32, #tpu.memory_space<vmem>>, vector<1x6x96xf32>
    %52 = vector.shape_cast %51 : vector<1x6x96xf32> to vector<6x96xf32>
    %53 = vector.shape_cast %50 : vector<6x96xf32> to vector<1x6x96xf32>
    tpu.vector_store %arg6[%c0_12, %c0_13, %c0_14], %53 {strides = array<i32>} : memref<1x6x96xf32, #tpu.memory_space<vmem>>, vector<1x6x96xf32>,
    return
  }
  func.func @transform_0(%arg0: i32) -> (i32, i32, i32) {
    %c0_i32 = arith.constant 0 : i32
    %c0_i32_0 = arith.constant 0 : i32
    %c0_i32_1 = arith.constant 0 : i32
    return %arg0, %c0_i32, %c0_i32_0 : i32, i32, i32
  }
  func.func @transform_1(%arg0: i32) -> (i32, i32) {
    %c0_i32 = arith.constant 0 : i32
    %c0_i32_0 = arith.constant 0 : i32
    %c0_i32_1 = arith.constant 0 : i32
    return %c0_i32, %c0_i32_0 : i32, i32
  }
  func.func @transform_2(%arg0: i32) -> (i32, i32) {
    %c0_i32 = arith.constant 0 : i32
    %c0_i32_0 = arith.constant 0 : i32
    %c0_i32_1 = arith.constant 0 : i32
    return %c0_i32, %c0_i32_0 : i32, i32
  }
  func.func @transform_3(%arg0: i32) -> (i32, i32) {
    %c0_i32 = arith.constant 0 : i32
    %c0_i32_0 = arith.constant 0 : i32
    %c0_i32_1 = arith.constant 0 : i32
    return %c0_i32, %c0_i32_0 : i32, i32
  }
  func.func @transform_4(%arg0: i32) -> (i32, i32) {
    %c0_i32 = arith.constant 0 : i32
    %c0_i32_0 = arith.constant 0 : i32
    %c0_i32_1 = arith.constant 0 : i32
    return %c0_i32, %c0_i32_0 : i32, i32
  }
  func.func @transform_5(%arg0: i32) -> (i32, i32, i32) {
    %c0_i32 = arith.constant 0 : i32
    %c0_i32_0 = arith.constant 0 : i32
    %c0_i32_1 = arith.constant 0 : i32
    return %arg0, %c0_i32, %c0_i32_0 : i32, i32, i32
  }
}

</mosaic_0001>

<llo_original>
// kernel: encoder_forward.1
$region0: #{encoder_forward.1}
  #allocation0 [shape = 'u32[]', space=smem, size = 0x4, offset = 0x4, fixed_abs, tag = 'smem constant byte address 0x4 - core index']
  #allocation1 [shape = 'u32[144,128]{1,0:T(1,128)}', space=vmem, size = 0x12000, scoped, tag = 'internal scratch']
  %s0 = inlined_call_operand.vmem [shape: bf16[2,80,512], index: 0, kind: input, shape index: {}]
  %s1 = inlined_call_operand.vmem [shape: bf16[2048,256], index: 1, kind: input, shape index: {}]
  %s2 = inlined_call_operand.vmem [shape: bf16[2304,64], index: 2, kind: input, shape index: {}]
  %s3 = inlined_call_operand.vmem [shape: bf16[1024,96], index: 3, kind: input, shape index: {}]
  %s4 = inlined_call_operand.vmem [shape: f32[1,96], index: 4, kind: input, shape index: {}]
  %s5 = inlined_call_operand.vmem [shape: f32[2,6,96], index: 5, kind: output, shape index: {}]
  %s6 = sld [smem:[#allocation0]]
  $region53: #{encoder_forward.1} parent=0
    _
  %s8 = ssub.s32 1, %s6
  %s9 = scalar_select 0, %s8, %s6
  loop: start=0, step=1, limit=4
  $region2: #{encoder_forward.1} parent=0 // loop_pre_header
    _
  $region3: #{encoder_forward.1} parent=0 // loop_header
    %s11 = sphi 0, %s15
    %p12 = scmp.ge.s32.totalorder %s11, 4
    %s21 = sphi 0, %s23
    %s24 = sphi 0, %s21
    %s25 = sphi 0, %s24
    %s41 = sphi 0, %s25
    %s45 = sphi 0, %s45
    %s47 = sphi 0, %s45
    %s48 = sphi 0, %s47
    %s62 = sphi 0, %s48
    %s66 = sphi 0, %s66
    %s68 = sphi 0, %s66
    %s69 = sphi 0, %s68
    %s83 = sphi 0, %s69
    %s87 = sphi 0, %s87
    %s89 = sphi 0, %s87
    %s90 = sphi 0, %s89
    %s104 = sphi 0, %s90
    %s108 = sphi 0, %s108
    %s110 = sphi 0, %s108
    %s111 = sphi 0, %s110
    %s125 = sphi 0, %s111
    %s131 = sphi 0, %s133
    %s134 = sphi 0, %s131
    %s135 = sphi 0, %s134
    %s151 = sphi 0, %s135
  $region4: #{encoder_forward.1} parent=0 // loop_header_branch
    %14 = sbr.rel (%p12) target = $region8
  $region5: #{encoder_forward.1} parent=0 // loop_body
    %s16 = ssub.s32 %s11, 1
    %s17 = ssub.s32 %s11, 2
    %s18 = sadd.s32 %s11, 1
    %s19 = ssub.s32 %s11, %s18
    %p20 = scmp.eq.s32.totalorder %s19, 0
    %s22 = sadd.s32 %s21, 1
    %s23 = scalar_select %p20, %s21, %s22
    %p26 = pneg %p20
    %p27 = scmp.eq.s32.totalorder %s11, 1
    %p28 = por %p26, %p27
    %p29 = scmp.ne.s32.totalorder %s21, %s24
    %p30 = scmp.eq.s32.totalorder %s11, 0
    %p31 = por %p29, %p30
    %p32 = scmp.ne.s32.totalorder %s21, %s24
    %p33 = scmp.eq.s32.totalorder %s16, 1
    %p34 = por %p32, %p33
    %p35 = scmp.ne.s32.totalorder %s24, %s25
    %p36 = scmp.eq.s32.totalorder %s16, 0
    %p37 = por %p35, %p36
    %p38 = scmp.ne.s32.totalorder %s24, %s25
    %p39 = scmp.eq.s32.totalorder %s17, 1
    %p40 = por %p38, %p39
    %p42 = scmp.ne.s32.totalorder %s25, %s41
    %p43 = scmp.eq.s32.totalorder %s17, 0
    %p44 = por %p42, %p43
    %s46 = sadd.s32 %s45, 1
    %p49 = scmp.eq.s32.totalorder %s11, 1
    %p50 = scmp.ne.s32.totalorder %s45, %s47
    %p51 = scmp.eq.s32.totalorder %s11, 0
    %p52 = por %p50, %p51
    %p53 = scmp.ne.s32.totalorder %s45, %s47
    %p54 = scmp.eq.s32.totalorder %s16, 1
    %p55 = por %p53, %p54
    %p56 = scmp.ne.s32.totalorder %s47, %s48
    %p57 = scmp.eq.s32.totalorder %s16, 0
    %p58 = por %p56, %p57
    %p59 = scmp.ne.s32.totalorder %s47, %s48
    %p60 = scmp.eq.s32.totalorder %s17, 1
    %p61 = por %p59, %p60
    %p63 = scmp.ne.s32.totalorder %s48, %s62
    %p64 = scmp.eq.s32.totalorder %s17, 0
    %p65 = por %p63, %p64
    %s67 = sadd.s32 %s66, 1
    %p70 = scmp.eq.s32.totalorder %s11, 1
    %p71 = scmp.ne.s32.totalorder %s66, %s68
    %p72 = scmp.eq.s32.totalorder %s11, 0
    %p73 = por %p71, %p72
    %p74 = scmp.ne.s32.totalorder %s66, %s68
    %p75 = scmp.eq.s32.totalorder %s16, 1
    %p76 = por %p74, %p75
    %p77 = scmp.ne.s32.totalorder %s68, %s69
    %p78 = scmp.eq.s32.totalorder %s16, 0
    %p79 = por %p77, %p78
    %p80 = scmp.ne.s32.totalorder %s68, %s69
    %p81 = scmp.eq.s32.totalorder %s17, 1
    %p82 = por %p80, %p81
    %p84 = scmp.ne.s32.totalorder %s69, %s83
    %p85 = scmp.eq.s32.totalorder %s17, 0
    %p86 = por %p84, %p85
    %s88 = sadd.s32 %s87, 1
    %p91 = scmp.eq.s32.totalorder %s11, 1
    %p92 = scmp.ne.s32.totalorder %s87, %s89
    %p93 = scmp.eq.s32.totalorder %s11, 0
    %p94 = por %p92, %p93
    %p95 = scmp.ne.s32.totalorder %s87, %s89
    %p96 = scmp.eq.s32.totalorder %s16, 1
    %p97 = por %p95, %p96
    %p98 = scmp.ne.s32.totalorder %s89, %s90
    %p99 = scmp.eq.s32.totalorder %s16, 0
    %p100 = por %p98, %p99
    %p101 = scmp.ne.s32.totalorder %s89, %s90
    %p102 = scmp.eq.s32.totalorder %s17, 1
    %p103 = por %p101, %p102
    %p105 = scmp.ne.s32.totalorder %s90, %s104
    %p106 = scmp.eq.s32.totalorder %s17, 0
    %p107 = por %p105, %p106
    %s109 = sadd.s32 %s108, 1
    %p112 = scmp.eq.s32.totalorder %s11, 1
    %p113 = scmp.ne.s32.totalorder %s108, %s110
    %p114 = scmp.eq.s32.totalorder %s11, 0
    %p115 = por %p113, %p114
    %p116 = scmp.ne.s32.totalorder %s108, %s110
    %p117 = scmp.eq.s32.totalorder %s16, 1
    %p118 = por %p116, %p117
    %p119 = scmp.ne.s32.totalorder %s110, %s111
    %p120 = scmp.eq.s32.totalorder %s16, 0
    %p121 = por %p119, %p120
    %p122 = scmp.ne.s32.totalorder %s110, %s111
    %p123 = scmp.eq.s32.totalorder %s17, 1
    %p124 = por %p122, %p123
    %p126 = scmp.ne.s32.totalorder %s111, %s125
    %p127 = scmp.eq.s32.totalorder %s17, 0
    %p128 = por %p126, %p127
    %s129 = ssub.s32 %s11, %s18
    %p130 = scmp.eq.s32.totalorder %s129, 0
    %s132 = sadd.s32 %s131, 1
    %s133 = scalar_select %p130, %s131, %s132
    %p136 = pneg %p130
    %p137 = scmp.eq.s32.totalorder %s11, 1
    %p138 = por %p136, %p137
    %p139 = scmp.ne.s32.totalorder %s131, %s134
    %p140 = scmp.eq.s32.totalorder %s11, 0
    %p141 = por %p139, %p140
    %p142 = scmp.ne.s32.totalorder %s131, %s134
    %p143 = scmp.eq.s32.totalorder %s16, 1
    %p144 = por %p142, %p143
    %p145 = scmp.ne.s32.totalorder %s134, %s135
    %p146 = scmp.eq.s32.totalorder %s16, 0
    %p147 = por %p145, %p146
    %p148 = scmp.ne.s32.totalorder %s134, %s135
    %p149 = scmp.eq.s32.totalorder %s17, 1
    %p150 = por %p148, %p149
    %p152 = scmp.ne.s32.totalorder %s135, %s151
    %p153 = scmp.eq.s32.totalorder %s17, 0
    %p154 = por %p152, %p153
    %p155 = scmp.le.s32.totalorder 1, %s11
    %p156 = scmp.lt.s32.totalorder %s11, 3
    %p157 = pnand %p155, %p156
    %p158 = pneg %p157
    // Predicated region
    $region9: #{encoder_forward.1} parent=5 // pred_check
      _
    $region10: #{encoder_forward.1} parent=5 // pred_check_branch
      %160 = sbr.rel (%p157) target = $region12
    $region11: #{encoder_forward.1} parent=5 // pred_region
      %s161 = ssub.s32 %s11, 1
      // Predicated region
      $region13: #{encoder_forward.1} parent=11 // pred_check
        %p162 = pneg %p58
      $region14: #{encoder_forward.1} parent=11 // pred_check_branch
        %164 = sbr.rel (%p162) target = $region16
      $region15: #{encoder_forward.1} parent=11 // pred_region
        _
      $region16: #{encoder_forward.1} parent=11 // pred_fallthru
        _
      // Predicated region
      $region17: #{encoder_forward.1} parent=11 // pred_check
        %p165 = pneg %p79
      $region18: #{encoder_forward.1} parent=11 // pred_check_branch
        %167 = sbr.rel (%p165) target = $region20
      $region19: #{encoder_forward.1} parent=11 // pred_region
        _
      $region20: #{encoder_forward.1} parent=11 // pred_fallthru
        _
      // Predicated region
      $region21: #{encoder_forward.1} parent=11 // pred_check
        %p168 = pneg %p100
      $region22: #{encoder_forward.1} parent=11 // pred_check_branch
        %170 = sbr.rel (%p168) target = $region24
      $region23: #{encoder_forward.1} parent=11 // pred_region
        _
      $region24: #{encoder_forward.1} parent=11 // pred_fallthru
        _
      // Predicated region
      $region25: #{encoder_forward.1} parent=11 // pred_check
        %p171 = pneg %p121
      $region26: #{encoder_forward.1} parent=11 // pred_check_branch
        %173 = sbr.rel (%p171) target = $region28
      $region27: #{encoder_forward.1} parent=11 // pred_region
        _
      $region28: #{encoder_forward.1} parent=11 // pred_fallthru
        _
    $region12: #{encoder_forward.1} parent=5 // pred_fallthru
      _
    %p174 = scmp.lt.s32.totalorder %s11, 2
    // Predicated region
    $region29: #{encoder_forward.1} parent=5 // pred_check
      %p175 = pneg %p174
    $region30: #{encoder_forward.1} parent=5 // pred_check_branch
      %177 = sbr.rel (%p175) target = $region32
    $region31: #{encoder_forward.1} parent=5 // pred_region
      // Predicated region
      $region33: #{encoder_forward.1} parent=31 // pred_check
        %p178 = pneg %p31
      $region34: #{encoder_forward.1} parent=31 // pred_check_branch
        %180 = sbr.rel (%p178) target = $region36
      $region35: #{encoder_forward.1} parent=31 // pred_region
        %p181 = scmp.lt.s32.totalorder %s11, 1
        %s182 = scalar_select %p181, %s11, 1
        %s183 = smul.addr %s182, 40
        %s184 = smul.addr %s183, 4
        %s185 = scalar_lea.vmem %s0, %s184
      $region36: #{encoder_forward.1} parent=31 // pred_fallthru
        _
    $region32: #{encoder_forward.1} parent=5 // pred_fallthru
      _
    %p186 = scmp.le.s32.totalorder 1, %s11
    %p187 = scmp.lt.s32.totalorder %s11, 3
    %p188 = pnand %p186, %p187
    %p189 = pneg %p188
    // Predicated region
    $region37: #{encoder_forward.1} parent=5 // pred_check
      _
    $region38: #{encoder_forward.1} parent=5 // pred_check_branch
      %191 = sbr.rel (%p188) target = $region40
    $region39: #{encoder_forward.1} parent=5 // pred_region
      %s192 = ssub.s32 %s11, 1
      %p193 = scmp.lt.s32.totalorder %s16, 1
      %s194 = scalar_select %p193, %s16, 1
      %s195 = smul.addr %s194, 40
      %s196 = smul.addr %s195, 4
      %s197 = scalar_lea.vmem %s0, %s196
      %p198 = pneg %p37
      %p199 = pneg %p34
      %p200 = pneg %p58
      %p201 = pneg %p55
      %p202 = pneg %p79
      %p203 = pneg %p76
      %p204 = pneg %p100
      %p205 = pneg %p97
      %p206 = pneg %p121
      %p207 = pneg %p118
      %p208 = pneg %p147
      %p209 = pneg %p144
      %p210 = scmp.lt.s32.totalorder %s16, 1
      %s211 = scalar_select %p210, %s16, 1
      %s212 = smul.addr %s211, 8
      %s213 = scalar_lea.vmem %s5, %s212
      %p214 = scmp.lt.s32.totalorder %s16, 1
      %s215 = scalar_select %p214, %s16, 1
      %s216 = smul.addr %s215, 40
      %s217 = smul.addr %s216, 4
      %s218 = scalar_lea.vmem %s0, %s217
      %p219 = scmp.lt.s32.totalorder %s16, 1
      %s220 = scalar_select %p219, %s16, 1
      %s221 = smul.addr %s220, 8
      %s222 = scalar_lea.vmem %s5, %s221
      %v224 = vld [vmem:[%s218] sm:$0xff]
      %v225 = vld [vmem:[%s218 + $0x8] sm:$0xff]
      %v226 = vld [vmem:[%s218 + $0x10] sm:$0xff]
      %v227 = vld [vmem:[%s218 + $0x18] sm:$0xff]
      %v228 = vld [vmem:[%s218 + $0x20] sm:$0xff]
      %v229 = vld [vmem:[%s218 + $0x28] sm:$0xff]
      %v230 = vld [vmem:[%s218 + $0x30] sm:$0xff]
      %v231 = vld [vmem:[%s218 + $0x38] sm:$0xff]
      %v232 = vld [vmem:[%s218 + $0x40] sm:$0xff]
      %v233 = vld [vmem:[%s218 + $0x48] sm:$0xff]
      %v234 = vld [vmem:[%s218 + $0x50] sm:$0xff]
      %v235 = vld [vmem:[%s218 + $0x58] sm:$0xff]
      %v236 = vld [vmem:[%s218 + $0x60] sm:$0xff]
      %v237 = vld [vmem:[%s218 + $0x68] sm:$0xff]
      %v238 = vld [vmem:[%s218 + $0x70] sm:$0xff]
      %v239 = vld [vmem:[%s218 + $0x78] sm:$0xff]
      %v240 = vld [vmem:[%s218 + $0x80] sm:$0xff]
      %v241 = vld [vmem:[%s218 + $0x88] sm:$0xff]
      %v242 = vld [vmem:[%s1] sm:$0xff]
      %v243 = vld [vmem:[%s1 + $0x8] sm:$0xff]
      %v244 = vld [vmem:[%s1 + $0x10] sm:$0xff]
      %v245 = vld [vmem:[%s1 + $0x18] sm:$0xff]
      %v246 = vld [vmem:[%s1 + $0x20] sm:$0xff]
      %v247 = vld [vmem:[%s1 + $0x28] sm:$0xff]
      %v248 = vld [vmem:[%s1 + $0x30] sm:$0xff]
      %v249 = vld [vmem:[%s1 + $0x38] sm:$0xff]
      %v250 = vld [vmem:[%s1 + $0x40] sm:$0xff]
      %v251 = vld [vmem:[%s1 + $0x48] sm:$0xff]
      %v252 = vld [vmem:[%s1 + $0x50] sm:$0xff]
      %v253 = vld [vmem:[%s1 + $0x58] sm:$0xff]
      %v254 = vld [vmem:[%s1 + $0x60] sm:$0xff]
      %v255 = vld [vmem:[%s1 + $0x68] sm:$0xff]
      %v256 = vld [vmem:[%s1 + $0x70] sm:$0xff]
      %v257 = vld [vmem:[%s1 + $0x78] sm:$0xff]
      %v258 = vld [vmem:[%s1 + $0x80] sm:$0xff]
      %v259 = vld [vmem:[%s1 + $0x88] sm:$0xff]
      %v260 = vld [vmem:[%s1 + $0x90] sm:$0xff]
      %v261 = vld [vmem:[%s1 + $0x98] sm:$0xff]
      %v262 = vld [vmem:[%s1 + $0xa0] sm:$0xff]
      %v263 = vld [vmem:[%s1 + $0xa8] sm:$0xff]
      %v264 = vld [vmem:[%s1 + $0xb0] sm:$0xff]
      %v265 = vld [vmem:[%s1 + $0xb8] sm:$0xff]
      %v266 = vld [vmem:[%s1 + $0xc0] sm:$0xff]
      %v267 = vld [vmem:[%s1 + $0xc8] sm:$0xff]
      %v268 = vld [vmem:[%s1 + $0xd0] sm:$0xff]
      %v269 = vld [vmem:[%s1 + $0xd8] sm:$0xff]
      %v270 = vld [vmem:[%s1 + $0xe0] sm:$0xff]
      %v271 = vld [vmem:[%s1 + $0xe8] sm:$0xff]
      %v272 = vld [vmem:[%s1 + $0xf0] sm:$0xff]
      %v273 = vld [vmem:[%s1 + $0xf8] sm:$0xff]
      %v274 = vld [vmem:[%s1 + $0x100] sm:$0xff]
      %v275 = vld [vmem:[%s1 + $0x108] sm:$0xff]
      %v276 = vld [vmem:[%s1 + $0x110] sm:$0xff]
      %v277 = vld [vmem:[%s1 + $0x118] sm:$0xff]
      %v278 = vld [vmem:[%s1 + $0x120] sm:$0xff]
      %v279 = vld [vmem:[%s1 + $0x128] sm:$0xff]
      %v280 = vld [vmem:[%s1 + $0x130] sm:$0xff]
      %v281 = vld [vmem:[%s1 + $0x138] sm:$0xff]
      %v282 = vld [vmem:[%s1 + $0x140] sm:$0xff]
      %v283 = vld [vmem:[%s1 + $0x148] sm:$0xff]
      %v284 = vld [vmem:[%s1 + $0x150] sm:$0xff]
      %v285 = vld [vmem:[%s1 + $0x158] sm:$0xff]
      %v286 = vld [vmem:[%s1 + $0x160] sm:$0xff]
      %v287 = vld [vmem:[%s1 + $0x168] sm:$0xff]
      %v288 = vld [vmem:[%s1 + $0x170] sm:$0xff]
      %v289 = vld [vmem:[%s1 + $0x178] sm:$0xff]
      %v290 = vld [vmem:[%s1 + $0x180] sm:$0xff]
      %v291 = vld [vmem:[%s1 + $0x188] sm:$0xff]
      %v292 = vld [vmem:[%s1 + $0x190] sm:$0xff]
      %v293 = vld [vmem:[%s1 + $0x198] sm:$0xff]
      %v294 = vld [vmem:[%s1 + $0x1a0] sm:$0xff]
      %v295 = vld [vmem:[%s1 + $0x1a8] sm:$0xff]
      %v296 = vld [vmem:[%s1 + $0x1b0] sm:$0xff]
      %v297 = vld [vmem:[%s1 + $0x1b8] sm:$0xff]
      %v298 = vld [vmem:[%s1 + $0x1c0] sm:$0xff]
      %v299 = vld [vmem:[%s1 + $0x1c8] sm:$0xff]
      %v300 = vld [vmem:[%s1 + $0x1d0] sm:$0xff]
      %v301 = vld [vmem:[%s1 + $0x1d8] sm:$0xff]
      %v302 = vld [vmem:[%s1 + $0x1e0] sm:$0xff]
      %v303 = vld [vmem:[%s1 + $0x1e8] sm:$0xff]
      %v304 = vld [vmem:[%s1 + $0x1f0] sm:$0xff]
      %v305 = vld [vmem:[%s1 + $0x1f8] sm:$0xff]
      %v306 = vld [vmem:[%s1 + $0x200] sm:$0xff]
      %v307 = vld [vmem:[%s1 + $0x208] sm:$0xff]
      %v308 = vld [vmem:[%s1 + $0x210] sm:$0xff]
      %v309 = vld [vmem:[%s1 + $0x218] sm:$0xff]
      %v310 = vld [vmem:[%s1 + $0x220] sm:$0xff]
      %v311 = vld [vmem:[%s1 + $0x228] sm:$0xff]
      %v312 = vld [vmem:[%s1 + $0x230] sm:$0xff]
      %v313 = vld [vmem:[%s1 + $0x238] sm:$0xff]
      %v314 = vld [vmem:[%s1 + $0x240] sm:$0xff]
      %v315 = vld [vmem:[%s1 + $0x248] sm:$0xff]
      %v316 = vld [vmem:[%s1 + $0x250] sm:$0xff]
      %v317 = vld [vmem:[%s1 + $0x258] sm:$0xff]
      %v318 = vld [vmem:[%s1 + $0x260] sm:$0xff]
      %v319 = vld [vmem:[%s1 + $0x268] sm:$0xff]
      %v320 = vld [vmem:[%s1 + $0x270] sm:$0xff]
      %v321 = vld [vmem:[%s1 + $0x278] sm:$0xff]
      %v322 = vld [vmem:[%s1 + $0x280] sm:$0xff]
      %v323 = vld [vmem:[%s1 + $0x288] sm:$0xff]
      %v324 = vld [vmem:[%s1 + $0x290] sm:$0xff]
      %v325 = vld [vmem:[%s1 + $0x298] sm:$0xff]
      %v326 = vld [vmem:[%s1 + $0x2a0] sm:$0xff]
      %v327 = vld [vmem:[%s1 + $0x2a8] sm:$0xff]
      %v328 = vld [vmem:[%s1 + $0x2b0] sm:$0xff]
      %v329 = vld [vmem:[%s1 + $0x2b8] sm:$0xff]
      %v330 = vld [vmem:[%s1 + $0x2c0] sm:$0xff]
      %v331 = vld [vmem:[%s1 + $0x2c8] sm:$0xff]
      %v332 = vld [vmem:[%s1 + $0x2d0] sm:$0xff]
      %v333 = vld [vmem:[%s1 + $0x2d8] sm:$0xff]
      %v334 = vld [vmem:[%s1 + $0x2e0] sm:$0xff]
      %v335 = vld [vmem:[%s1 + $0x2e8] sm:$0xff]
      %v336 = vld [vmem:[%s1 + $0x2f0] sm:$0xff]
      %v337 = vld [vmem:[%s1 + $0x2f8] sm:$0xff]
      %v338 = vld [vmem:[%s1 + $0x300] sm:$0xff]
      %v339 = vld [vmem:[%s1 + $0x308] sm:$0xff]
      %v340 = vld [vmem:[%s1 + $0x310] sm:$0xff]
      %v341 = vld [vmem:[%s1 + $0x318] sm:$0xff]
      %v342 = vld [vmem:[%s1 + $0x320] sm:$0xff]
      %v343 = vld [vmem:[%s1 + $0x328] sm:$0xff]
      %v344 = vld [vmem:[%s1 + $0x330] sm:$0xff]
      %v345 = vld [vmem:[%s1 + $0x338] sm:$0xff]
      %v346 = vld [vmem:[%s1 + $0x340] sm:$0xff]
      %v347 = vld [vmem:[%s1 + $0x348] sm:$0xff]
      %v348 = vld [vmem:[%s1 + $0x350] sm:$0xff]
      %v349 = vld [vmem:[%s1 + $0x358] sm:$0xff]
      %v350 = vld [vmem:[%s1 + $0x360] sm:$0xff]
      %v351 = vld [vmem:[%s1 + $0x368] sm:$0xff]
      %v352 = vld [vmem:[%s1 + $0x370] sm:$0xff]
      %v353 = vld [vmem:[%s1 + $0x378] sm:$0xff]
      %v354 = vld [vmem:[%s1 + $0x380] sm:$0xff]
      %v355 = vld [vmem:[%s1 + $0x388] sm:$0xff]
      %v356 = vld [vmem:[%s1 + $0x390] sm:$0xff]
      %v357 = vld [vmem:[%s1 + $0x398] sm:$0xff]
      %v358 = vld [vmem:[%s1 + $0x3a0] sm:$0xff]
      %v359 = vld [vmem:[%s1 + $0x3a8] sm:$0xff]
      %v360 = vld [vmem:[%s1 + $0x3b0] sm:$0xff]
      %v361 = vld [vmem:[%s1 + $0x3b8] sm:$0xff]
      %v362 = vld [vmem:[%s1 + $0x3c0] sm:$0xff]
      %v363 = vld [vmem:[%s1 + $0x3c8] sm:$0xff]
      %v364 = vld [vmem:[%s1 + $0x3d0] sm:$0xff]
      %v365 = vld [vmem:[%s1 + $0x3d8] sm:$0xff]
      %v366 = vld [vmem:[%s1 + $0x3e0] sm:$0xff]
      %v367 = vld [vmem:[%s1 + $0x3e8] sm:$0xff]
      %v368 = vld [vmem:[%s1 + $0x3f0] sm:$0xff]
      %v369 = vld [vmem:[%s1 + $0x3f8] sm:$0xff]
      %v370 = vld [vmem:[%s1 + $0x400] sm:$0xff]
      %v371 = vld [vmem:[%s1 + $0x408] sm:$0xff]
      %v372 = vld [vmem:[%s1 + $0x410] sm:$0xff]
      %v373 = vld [vmem:[%s1 + $0x418] sm:$0xff]
      %v374 = vld [vmem:[%s1 + $0x420] sm:$0xff]
      %v375 = vld [vmem:[%s1 + $0x428] sm:$0xff]
      %v376 = vld [vmem:[%s1 + $0x430] sm:$0xff]
      %v377 = vld [vmem:[%s1 + $0x438] sm:$0xff]
      %v378 = vld [vmem:[%s1 + $0x440] sm:$0xff]
      %v379 = vld [vmem:[%s1 + $0x448] sm:$0xff]
      %v380 = vld [vmem:[%s1 + $0x450] sm:$0xff]
      %v381 = vld [vmem:[%s1 + $0x458] sm:$0xff]
      %v382 = vld [vmem:[%s1 + $0x460] sm:$0xff]
      %v383 = vld [vmem:[%s1 + $0x468] sm:$0xff]
      %v384 = vld [vmem:[%s1 + $0x470] sm:$0xff]
      %v385 = vld [vmem:[%s1 + $0x478] sm:$0xff]
      %v386 = vld [vmem:[%s1 + $0x480] sm:$0xff]
      %v387 = vld [vmem:[%s1 + $0x488] sm:$0xff]
      %v388 = vld [vmem:[%s1 + $0x490] sm:$0xff]
      %v389 = vld [vmem:[%s1 + $0x498] sm:$0xff]
      %v390 = vld [vmem:[%s1 + $0x4a0] sm:$0xff]
      %v391 = vld [vmem:[%s1 + $0x4a8] sm:$0xff]
      %v392 = vld [vmem:[%s1 + $0x4b0] sm:$0xff]
      %v393 = vld [vmem:[%s1 + $0x4b8] sm:$0xff]
      %v394 = vld [vmem:[%s1 + $0x4c0] sm:$0xff]
      %v395 = vld [vmem:[%s1 + $0x4c8] sm:$0xff]
      %v396 = vld [vmem:[%s1 + $0x4d0] sm:$0xff]
      %v397 = vld [vmem:[%s1 + $0x4d8] sm:$0xff]
      %v398 = vld [vmem:[%s1 + $0x4e0] sm:$0xff]
      %v399 = vld [vmem:[%s1 + $0x4e8] sm:$0xff]
      %v400 = vld [vmem:[%s1 + $0x4f0] sm:$0xff]
      %v401 = vld [vmem:[%s1 + $0x4f8] sm:$0xff]
      %v402 = vld [vmem:[%s1 + $0x500] sm:$0xff]
      %v403 = vld [vmem:[%s1 + $0x508] sm:$0xff]
      %v404 = vld [vmem:[%s1 + $0x510] sm:$0xff]
      %v405 = vld [vmem:[%s1 + $0x518] sm:$0xff]
      %v406 = vld [vmem:[%s1 + $0x520] sm:$0xff]
      %v407 = vld [vmem:[%s1 + $0x528] sm:$0xff]
      %v408 = vld [vmem:[%s1 + $0x530] sm:$0xff]
      %v409 = vld [vmem:[%s1 + $0x538] sm:$0xff]
      %v410 = vld [vmem:[%s1 + $0x540] sm:$0xff]
      %v411 = vld [vmem:[%s1 + $0x548] sm:$0xff]
      %v412 = vld [vmem:[%s1 + $0x550] sm:$0xff]
      %v413 = vld [vmem:[%s1 + $0x558] sm:$0xff]
      %v414 = vld [vmem:[%s1 + $0x560] sm:$0xff]
      %v415 = vld [vmem:[%s1 + $0x568] sm:$0xff]
      %v416 = vld [vmem:[%s1 + $0x570] sm:$0xff]
      %v417 = vld [vmem:[%s1 + $0x578] sm:$0xff]
      %v418 = vld [vmem:[%s1 + $0x580] sm:$0xff]
      %v419 = vld [vmem:[%s1 + $0x588] sm:$0xff]
      %v420 = vld [vmem:[%s1 + $0x590] sm:$0xff]
      %v421 = vld [vmem:[%s1 + $0x598] sm:$0xff]
      %v422 = vld [vmem:[%s1 + $0x5a0] sm:$0xff]
      %v423 = vld [vmem:[%s1 + $0x5a8] sm:$0xff]
      %v424 = vld [vmem:[%s1 + $0x5b0] sm:$0xff]
      %v425 = vld [vmem:[%s1 + $0x5b8] sm:$0xff]
      %v426 = vld [vmem:[%s1 + $0x5c0] sm:$0xff]
      %v427 = vld [vmem:[%s1 + $0x5c8] sm:$0xff]
      %v428 = vld [vmem:[%s1 + $0x5d0] sm:$0xff]
      %v429 = vld [vmem:[%s1 + $0x5d8] sm:$0xff]
      %v430 = vld [vmem:[%s1 + $0x5e0] sm:$0xff]
      %v431 = vld [vmem:[%s1 + $0x5e8] sm:$0xff]
      %v432 = vld [vmem:[%s1 + $0x5f0] sm:$0xff]
      %v433 = vld [vmem:[%s1 + $0x5f8] sm:$0xff]
      %v434 = vld [vmem:[%s1 + $0x600] sm:$0xff]
      %v435 = vld [vmem:[%s1 + $0x608] sm:$0xff]
      %v436 = vld [vmem:[%s1 + $0x610] sm:$0xff]
      %v437 = vld [vmem:[%s1 + $0x618] sm:$0xff]
      %v438 = vld [vmem:[%s1 + $0x620] sm:$0xff]
      %v439 = vld [vmem:[%s1 + $0x628] sm:$0xff]
      %v440 = vld [vmem:[%s1 + $0x630] sm:$0xff]
      %v441 = vld [vmem:[%s1 + $0x638] sm:$0xff]
      %v442 = vld [vmem:[%s1 + $0x640] sm:$0xff]
      %v443 = vld [vmem:[%s1 + $0x648] sm:$0xff]
      %v444 = vld [vmem:[%s1 + $0x650] sm:$0xff]
      %v445 = vld [vmem:[%s1 + $0x658] sm:$0xff]
      %v446 = vld [vmem:[%s1 + $0x660] sm:$0xff]
      %v447 = vld [vmem:[%s1 + $0x668] sm:$0xff]
      %v448 = vld [vmem:[%s1 + $0x670] sm:$0xff]
      %v449 = vld [vmem:[%s1 + $0x678] sm:$0xff]
      %v450 = vld [vmem:[%s1 + $0x680] sm:$0xff]
      %v451 = vld [vmem:[%s1 + $0x688] sm:$0xff]
      %v452 = vld [vmem:[%s1 + $0x690] sm:$0xff]
      %v453 = vld [vmem:[%s1 + $0x698] sm:$0xff]
      %v454 = vld [vmem:[%s1 + $0x6a0] sm:$0xff]
      %v455 = vld [vmem:[%s1 + $0x6a8] sm:$0xff]
      %v456 = vld [vmem:[%s1 + $0x6b0] sm:$0xff]
      %v457 = vld [vmem:[%s1 + $0x6b8] sm:$0xff]
      %v458 = vld [vmem:[%s1 + $0x6c0] sm:$0xff]
      %v459 = vld [vmem:[%s1 + $0x6c8] sm:$0xff]
      %v460 = vld [vmem:[%s1 + $0x6d0] sm:$0xff]
      %v461 = vld [vmem:[%s1 + $0x6d8] sm:$0xff]
      %v462 = vld [vmem:[%s1 + $0x6e0] sm:$0xff]
      %v463 = vld [vmem:[%s1 + $0x6e8] sm:$0xff]
      %v464 = vld [vmem:[%s1 + $0x6f0] sm:$0xff]
      %v465 = vld [vmem:[%s1 + $0x6f8] sm:$0xff]
      %v466 = vld [vmem:[%s1 + $0x700] sm:$0xff]
      %v467 = vld [vmem:[%s1 + $0x708] sm:$0xff]
      %v468 = vld [vmem:[%s1 + $0x710] sm:$0xff]
      %v469 = vld [vmem:[%s1 + $0x718] sm:$0xff]
      %v470 = vld [vmem:[%s1 + $0x720] sm:$0xff]
      %v471 = vld [vmem:[%s1 + $0x728] sm:$0xff]
      %v472 = vld [vmem:[%s1 + $0x730] sm:$0xff]
      %v473 = vld [vmem:[%s1 + $0x738] sm:$0xff]
      %v474 = vld [vmem:[%s1 + $0x740] sm:$0xff]
      %v475 = vld [vmem:[%s1 + $0x748] sm:$0xff]
      %v476 = vld [vmem:[%s1 + $0x750] sm:$0xff]
      %v477 = vld [vmem:[%s1 + $0x758] sm:$0xff]
      %v478 = vld [vmem:[%s1 + $0x760] sm:$0xff]
      %v479 = vld [vmem:[%s1 + $0x768] sm:$0xff]
      %v480 = vld [vmem:[%s1 + $0x770] sm:$0xff]
      %v481 = vld [vmem:[%s1 + $0x778] sm:$0xff]
      %v482 = vld [vmem:[%s1 + $0x780] sm:$0xff]
      %v483 = vld [vmem:[%s1 + $0x788] sm:$0xff]
      %v484 = vld [vmem:[%s1 + $0x790] sm:$0xff]
      %v485 = vld [vmem:[%s1 + $0x798] sm:$0xff]
      %v486 = vld [vmem:[%s1 + $0x7a0] sm:$0xff]
      %v487 = vld [vmem:[%s1 + $0x7a8] sm:$0xff]
      %v488 = vld [vmem:[%s1 + $0x7b0] sm:$0xff]
      %v489 = vld [vmem:[%s1 + $0x7b8] sm:$0xff]
      %v490 = vld [vmem:[%s1 + $0x7c0] sm:$0xff]
      %v491 = vld [vmem:[%s1 + $0x7c8] sm:$0xff]
      %v492 = vld [vmem:[%s1 + $0x7d0] sm:$0xff]
      %v493 = vld [vmem:[%s1 + $0x7d8] sm:$0xff]
      %v494 = vld [vmem:[%s1 + $0x7e0] sm:$0xff]
      %v495 = vld [vmem:[%s1 + $0x7e8] sm:$0xff]
      %v496 = vld [vmem:[%s1 + $0x7f0] sm:$0xff]
      %v497 = vld [vmem:[%s1 + $0x7f8] sm:$0xff]
      %v498 = vld [vmem:[%s2] sm:$0xf]
      %v499 = vld [vmem:[%s2 + $0x4] sm:$0xf]
      %v500 = vld [vmem:[%s2 + $0x8] sm:$0xf]
      %v501 = vld [vmem:[%s2 + $0xc] sm:$0xf]
      %v502 = vld [vmem:[%s2 + $0x10] sm:$0xf]
      %v503 = vld [vmem:[%s2 + $0x14] sm:$0xf]
      %v504 = vld [vmem:[%s2 + $0x18] sm:$0xf]
      %v505 = vld [vmem:[%s2 + $0x1c] sm:$0xf]
      %v506 = vld [vmem:[%s2 + $0x20] sm:$0xf]
      %v507 = vld [vmem:[%s2 + $0x24] sm:$0xf]
      %v508 = vld [vmem:[%s2 + $0x28] sm:$0xf]
      %v509 = vld [vmem:[%s2 + $0x2c] sm:$0xf]
      %v510 = vld [vmem:[%s2 + $0x30] sm:$0xf]
      %v511 = vld [vmem:[%s2 + $0x34] sm:$0xf]
      %v512 = vld [vmem:[%s2 + $0x38] sm:$0xf]
      %v513 = vld [vmem:[%s2 + $0x3c] sm:$0xf]
      %v514 = vld [vmem:[%s2 + $0x40] sm:$0xf]
      %v515 = vld [vmem:[%s2 + $0x44] sm:$0xf]
      %v516 = vld [vmem:[%s2 + $0x48] sm:$0xf]
      %v517 = vld [vmem:[%s2 + $0x4c] sm:$0xf]
      %v518 = vld [vmem:[%s2 + $0x50] sm:$0xf]
      %v519 = vld [vmem:[%s2 + $0x54] sm:$0xf]
      %v520 = vld [vmem:[%s2 + $0x58] sm:$0xf]
      %v521 = vld [vmem:[%s2 + $0x5c] sm:$0xf]
      %v522 = vld [vmem:[%s2 + $0x60] sm:$0xf]
      %v523 = vld [vmem:[%s2 + $0x64] sm:$0xf]
      %v524 = vld [vmem:[%s2 + $0x68] sm:$0xf]
      %v525 = vld [vmem:[%s2 + $0x6c] sm:$0xf]
      %v526 = vld [vmem:[%s2 + $0x70] sm:$0xf]
      %v527 = vld [vmem:[%s2 + $0x74] sm:$0xf]
      %v528 = vld [vmem:[%s2 + $0x78] sm:$0xf]
      %v529 = vld [vmem:[%s2 + $0x7c] sm:$0xf]
      %v530 = vld [vmem:[%s2 + $0x80] sm:$0xf]
      %v531 = vld [vmem:[%s2 + $0x84] sm:$0xf]
      %v532 = vld [vmem:[%s2 + $0x88] sm:$0xf]
      %v533 = vld [vmem:[%s2 + $0x8c] sm:$0xf]
      %v534 = vld [vmem:[%s2 + $0x90] sm:$0xf]
      %v535 = vld [vmem:[%s2 + $0x94] sm:$0xf]
      %v536 = vld [vmem:[%s2 + $0x98] sm:$0xf]
      %v537 = vld [vmem:[%s2 + $0x9c] sm:$0xf]
      %v538 = vld [vmem:[%s2 + $0xa0] sm:$0xf]
      %v539 = vld [vmem:[%s2 + $0xa4] sm:$0xf]
      %v540 = vld [vmem:[%s2 + $0xa8] sm:$0xf]
      %v541 = vld [vmem:[%s2 + $0xac] sm:$0xf]
      %v542 = vld [vmem:[%s2 + $0xb0] sm:$0xf]
      %v543 = vld [vmem:[%s2 + $0xb4] sm:$0xf]
      %v544 = vld [vmem:[%s2 + $0xb8] sm:$0xf]
      %v545 = vld [vmem:[%s2 + $0xbc] sm:$0xf]
      %v546 = vld [vmem:[%s2 + $0xc0] sm:$0xf]
      %v547 = vld [vmem:[%s2 + $0xc4] sm:$0xf]
      %v548 = vld [vmem:[%s2 + $0xc8] sm:$0xf]
      %v549 = vld [vmem:[%s2 + $0xcc] sm:$0xf]
      %v550 = vld [vmem:[%s2 + $0xd0] sm:$0xf]
      %v551 = vld [vmem:[%s2 + $0xd4] sm:$0xf]
      %v552 = vld [vmem:[%s2 + $0xd8] sm:$0xf]
      %v553 = vld [vmem:[%s2 + $0xdc] sm:$0xf]
      %v554 = vld [vmem:[%s2 + $0xe0] sm:$0xf]
      %v555 = vld [vmem:[%s2 + $0xe4] sm:$0xf]
      %v556 = vld [vmem:[%s2 + $0xe8] sm:$0xf]
      %v557 = vld [vmem:[%s2 + $0xec] sm:$0xf]
      %v558 = vld [vmem:[%s2 + $0xf0] sm:$0xf]
      %v559 = vld [vmem:[%s2 + $0xf4] sm:$0xf]
      %v560 = vld [vmem:[%s2 + $0xf8] sm:$0xf]
      %v561 = vld [vmem:[%s2 + $0xfc] sm:$0xf]
      %v562 = vld [vmem:[%s2 + $0x100] sm:$0xf]
      %v563 = vld [vmem:[%s2 + $0x104] sm:$0xf]
      %v564 = vld [vmem:[%s2 + $0x108] sm:$0xf]
      %v565 = vld [vmem:[%s2 + $0x10c] sm:$0xf]
      %v566 = vld [vmem:[%s2 + $0x110] sm:$0xf]
      %v567 = vld [vmem:[%s2 + $0x114] sm:$0xf]
      %v568 = vld [vmem:[%s2 + $0x118] sm:$0xf]
      %v569 = vld [vmem:[%s2 + $0x11c] sm:$0xf]
      %v570 = vld [vmem:[%s2 + $0x120] sm:$0xf]
      %v571 = vld [vmem:[%s2 + $0x124] sm:$0xf]
      %v572 = vld [vmem:[%s2 + $0x128] sm:$0xf]
      %v573 = vld [vmem:[%s2 + $0x12c] sm:$0xf]
      %v574 = vld [vmem:[%s2 + $0x130] sm:$0xf]
      %v575 = vld [vmem:[%s2 + $0x134] sm:$0xf]
      %v576 = vld [vmem:[%s2 + $0x138] sm:$0xf]
      %v577 = vld [vmem:[%s2 + $0x13c] sm:$0xf]
      %v578 = vld [vmem:[%s2 + $0x140] sm:$0xf]
      %v579 = vld [vmem:[%s2 + $0x144] sm:$0xf]
      %v580 = vld [vmem:[%s2 + $0x148] sm:$0xf]
      %v581 = vld [vmem:[%s2 + $0x14c] sm:$0xf]
      %v582 = vld [vmem:[%s2 + $0x150] sm:$0xf]
      %v583 = vld [vmem:[%s2 + $0x154] sm:$0xf]
      %v584 = vld [vmem:[%s2 + $0x158] sm:$0xf]
      %v585 = vld [vmem:[%s2 + $0x15c] sm:$0xf]
      %v586 = vld [vmem:[%s2 + $0x160] sm:$0xf]
      %v587 = vld [vmem:[%s2 + $0x164] sm:$0xf]
      %v588 = vld [vmem:[%s2 + $0x168] sm:$0xf]
      %v589 = vld [vmem:[%s2 + $0x16c] sm:$0xf]
      %v590 = vld [vmem:[%s2 + $0x170] sm:$0xf]
      %v591 = vld [vmem:[%s2 + $0x174] sm:$0xf]
      %v592 = vld [vmem:[%s2 + $0x178] sm:$0xf]
      %v593 = vld [vmem:[%s2 + $0x17c] sm:$0xf]
      %v594 = vld [vmem:[%s2 + $0x180] sm:$0xf]
      %v595 = vld [vmem:[%s2 + $0x184] sm:$0xf]
      %v596 = vld [vmem:[%s2 + $0x188] sm:$0xf]
      %v597 = vld [vmem:[%s2 + $0x18c] sm:$0xf]
      %v598 = vld [vmem:[%s2 + $0x190] sm:$0xf]
      %v599 = vld [vmem:[%s2 + $0x194] sm:$0xf]
      %v600 = vld [vmem:[%s2 + $0x198] sm:$0xf]
      %v601 = vld [vmem:[%s2 + $0x19c] sm:$0xf]
      %v602 = vld [vmem:[%s2 + $0x1a0] sm:$0xf]
      %v603 = vld [vmem:[%s2 + $0x1a4] sm:$0xf]
      %v604 = vld [vmem:[%s2 + $0x1a8] sm:$0xf]
      %v605 = vld [vmem:[%s2 + $0x1ac] sm:$0xf]
      %v606 = vld [vmem:[%s2 + $0x1b0] sm:$0xf]
      %v607 = vld [vmem:[%s2 + $0x1b4] sm:$0xf]
      %v608 = vld [vmem:[%s2 + $0x1b8] sm:$0xf]
      %v609 = vld [vmem:[%s2 + $0x1bc] sm:$0xf]
      %v610 = vld [vmem:[%s2 + $0x1c0] sm:$0xf]
      %v611 = vld [vmem:[%s2 + $0x1c4] sm:$0xf]
      %v612 = vld [vmem:[%s2 + $0x1c8] sm:$0xf]
      %v613 = vld [vmem:[%s2 + $0x1cc] sm:$0xf]
      %v614 = vld [vmem:[%s2 + $0x1d0] sm:$0xf]
      %v615 = vld [vmem:[%s2 + $0x1d4] sm:$0xf]
      %v616 = vld [vmem:[%s2 + $0x1d8] sm:$0xf]
      %v617 = vld [vmem:[%s2 + $0x1dc] sm:$0xf]
      %v618 = vld [vmem:[%s2 + $0x1e0] sm:$0xf]
      %v619 = vld [vmem:[%s2 + $0x1e4] sm:$0xf]
      %v620 = vld [vmem:[%s2 + $0x1e8] sm:$0xf]
      %v621 = vld [vmem:[%s2 + $0x1ec] sm:$0xf]
      %v622 = vld [vmem:[%s2 + $0x1f0] sm:$0xf]
      %v623 = vld [vmem:[%s2 + $0x1f4] sm:$0xf]
      %v624 = vld [vmem:[%s2 + $0x1f8] sm:$0xf]
      %v625 = vld [vmem:[%s2 + $0x1fc] sm:$0xf]
      %v626 = vld [vmem:[%s2 + $0x200] sm:$0xf]
      %v627 = vld [vmem:[%s2 + $0x204] sm:$0xf]
      %v628 = vld [vmem:[%s2 + $0x208] sm:$0xf]
      %v629 = vld [vmem:[%s2 + $0x20c] sm:$0xf]
      %v630 = vld [vmem:[%s2 + $0x210] sm:$0xf]
      %v631 = vld [vmem:[%s2 + $0x214] sm:$0xf]
      %v632 = vld [vmem:[%s2 + $0x218] sm:$0xf]
      %v633 = vld [vmem:[%s2 + $0x21c] sm:$0xf]
      %v634 = vld [vmem:[%s2 + $0x220] sm:$0xf]
      %v635 = vld [vmem:[%s2 + $0x224] sm:$0xf]
      %v636 = vld [vmem:[%s2 + $0x228] sm:$0xf]
      %v637 = vld [vmem:[%s2 + $0x22c] sm:$0xf]
      %v638 = vld [vmem:[%s2 + $0x230] sm:$0xf]
      %v639 = vld [vmem:[%s2 + $0x234] sm:$0xf]
      %v640 = vld [vmem:[%s2 + $0x238] sm:$0xf]
      %v641 = vld [vmem:[%s2 + $0x23c] sm:$0xf]
      %v642 = vld [vmem:[%s2 + $0x240] sm:$0xf]
      %v643 = vld [vmem:[%s2 + $0x244] sm:$0xf]
      %v644 = vld [vmem:[%s2 + $0x248] sm:$0xf]
      %v645 = vld [vmem:[%s2 + $0x24c] sm:$0xf]
      %v646 = vld [vmem:[%s2 + $0x250] sm:$0xf]
      %v647 = vld [vmem:[%s2 + $0x254] sm:$0xf]
      %v648 = vld [vmem:[%s2 + $0x258] sm:$0xf]
      %v649 = vld [vmem:[%s2 + $0x25c] sm:$0xf]
      %v650 = vld [vmem:[%s2 + $0x260] sm:$0xf]
      %v651 = vld [vmem:[%s2 + $0x264] sm:$0xf]
      %v652 = vld [vmem:[%s2 + $0x268] sm:$0xf]
      %v653 = vld [vmem:[%s2 + $0x26c] sm:$0xf]
      %v654 = vld [vmem:[%s2 + $0x270] sm:$0xf]
      %v655 = vld [vmem:[%s2 + $0x274] sm:$0xf]
      %v656 = vld [vmem:[%s2 + $0x278] sm:$0xf]
      %v657 = vld [vmem:[%s2 + $0x27c] sm:$0xf]
      %v658 = vld [vmem:[%s2 + $0x280] sm:$0xf]
      %v659 = vld [vmem:[%s2 + $0x284] sm:$0xf]
      %v660 = vld [vmem:[%s2 + $0x288] sm:$0xf]
      %v661 = vld [vmem:[%s2 + $0x28c] sm:$0xf]
      %v662 = vld [vmem:[%s2 + $0x290] sm:$0xf]
      %v663 = vld [vmem:[%s2 + $0x294] sm:$0xf]
      %v664 = vld [vmem:[%s2 + $0x298] sm:$0xf]
      %v665 = vld [vmem:[%s2 + $0x29c] sm:$0xf]
      %v666 = vld [vmem:[%s2 + $0x2a0] sm:$0xf]
      %v667 = vld [vmem:[%s2 + $0x2a4] sm:$0xf]
      %v668 = vld [vmem:[%s2 + $0x2a8] sm:$0xf]
      %v669 = vld [vmem:[%s2 + $0x2ac] sm:$0xf]
      %v670 = vld [vmem:[%s2 + $0x2b0] sm:$0xf]
      %v671 = vld [vmem:[%s2 + $0x2b4] sm:$0xf]
      %v672 = vld [vmem:[%s2 + $0x2b8] sm:$0xf]
      %v673 = vld [vmem:[%s2 + $0x2bc] sm:$0xf]
      %v674 = vld [vmem:[%s2 + $0x2c0] sm:$0xf]
      %v675 = vld [vmem:[%s2 + $0x2c4] sm:$0xf]
      %v676 = vld [vmem:[%s2 + $0x2c8] sm:$0xf]
      %v677 = vld [vmem:[%s2 + $0x2cc] sm:$0xf]
      %v678 = vld [vmem:[%s2 + $0x2d0] sm:$0xf]
      %v679 = vld [vmem:[%s2 + $0x2d4] sm:$0xf]
      %v680 = vld [vmem:[%s2 + $0x2d8] sm:$0xf]
      %v681 = vld [vmem:[%s2 + $0x2dc] sm:$0xf]
      %v682 = vld [vmem:[%s2 + $0x2e0] sm:$0xf]
      %v683 = vld [vmem:[%s2 + $0x2e4] sm:$0xf]
      %v684 = vld [vmem:[%s2 + $0x2e8] sm:$0xf]
      %v685 = vld [vmem:[%s2 + $0x2ec] sm:$0xf]
      %v686 = vld [vmem:[%s2 + $0x2f0] sm:$0xf]
      %v687 = vld [vmem:[%s2 + $0x2f4] sm:$0xf]
      %v688 = vld [vmem:[%s2 + $0x2f8] sm:$0xf]
      %v689 = vld [vmem:[%s2 + $0x2fc] sm:$0xf]
      %v690 = vld [vmem:[%s2 + $0x300] sm:$0xf]
      %v691 = vld [vmem:[%s2 + $0x304] sm:$0xf]
      %v692 = vld [vmem:[%s2 + $0x308] sm:$0xf]
      %v693 = vld [vmem:[%s2 + $0x30c] sm:$0xf]
      %v694 = vld [vmem:[%s2 + $0x310] sm:$0xf]
      %v695 = vld [vmem:[%s2 + $0x314] sm:$0xf]
      %v696 = vld [vmem:[%s2 + $0x318] sm:$0xf]
      %v697 = vld [vmem:[%s2 + $0x31c] sm:$0xf]
      %v698 = vld [vmem:[%s2 + $0x320] sm:$0xf]
      %v699 = vld [vmem:[%s2 + $0x324] sm:$0xf]
      %v700 = vld [vmem:[%s2 + $0x328] sm:$0xf]
      %v701 = vld [vmem:[%s2 + $0x32c] sm:$0xf]
      %v702 = vld [vmem:[%s2 + $0x330] sm:$0xf]
      %v703 = vld [vmem:[%s2 + $0x334] sm:$0xf]
      %v704 = vld [vmem:[%s2 + $0x338] sm:$0xf]
      %v705 = vld [vmem:[%s2 + $0x33c] sm:$0xf]
      %v706 = vld [vmem:[%s2 + $0x340] sm:$0xf]
      %v707 = vld [vmem:[%s2 + $0x344] sm:$0xf]
      %v708 = vld [vmem:[%s2 + $0x348] sm:$0xf]
      %v709 = vld [vmem:[%s2 + $0x34c] sm:$0xf]
      %v710 = vld [vmem:[%s2 + $0x350] sm:$0xf]
      %v711 = vld [vmem:[%s2 + $0x354] sm:$0xf]
      %v712 = vld [vmem:[%s2 + $0x358] sm:$0xf]
      %v713 = vld [vmem:[%s2 + $0x35c] sm:$0xf]
      %v714 = vld [vmem:[%s2 + $0x360] sm:$0xf]
      %v715 = vld [vmem:[%s2 + $0x364] sm:$0xf]
      %v716 = vld [vmem:[%s2 + $0x368] sm:$0xf]
      %v717 = vld [vmem:[%s2 + $0x36c] sm:$0xf]
      %v718 = vld [vmem:[%s2 + $0x370] sm:$0xf]
      %v719 = vld [vmem:[%s2 + $0x374] sm:$0xf]
      %v720 = vld [vmem:[%s2 + $0x378] sm:$0xf]
      %v721 = vld [vmem:[%s2 + $0x37c] sm:$0xf]
      %v722 = vld [vmem:[%s2 + $0x380] sm:$0xf]
      %v723 = vld [vmem:[%s2 + $0x384] sm:$0xf]
      %v724 = vld [vmem:[%s2 + $0x388] sm:$0xf]
      %v725 = vld [vmem:[%s2 + $0x38c] sm:$0xf]
      %v726 = vld [vmem:[%s2 + $0x390] sm:$0xf]
      %v727 = vld [vmem:[%s2 + $0x394] sm:$0xf]
      %v728 = vld [vmem:[%s2 + $0x398] sm:$0xf]
      %v729 = vld [vmem:[%s2 + $0x39c] sm:$0xf]
      %v730 = vld [vmem:[%s2 + $0x3a0] sm:$0xf]
      %v731 = vld [vmem:[%s2 + $0x3a4] sm:$0xf]
      %v732 = vld [vmem:[%s2 + $0x3a8] sm:$0xf]
      %v733 = vld [vmem:[%s2 + $0x3ac] sm:$0xf]
      %v734 = vld [vmem:[%s2 + $0x3b0] sm:$0xf]
      %v735 = vld [vmem:[%s2 + $0x3b4] sm:$0xf]
      %v736 = vld [vmem:[%s2 + $0x3b8] sm:$0xf]
      %v737 = vld [vmem:[%s2 + $0x3bc] sm:$0xf]
      %v738 = vld [vmem:[%s2 + $0x3c0] sm:$0xf]
      %v739 = vld [vmem:[%s2 + $0x3c4] sm:$0xf]
      %v740 = vld [vmem:[%s2 + $0x3c8] sm:$0xf]
      %v741 = vld [vmem:[%s2 + $0x3cc] sm:$0xf]
      %v742 = vld [vmem:[%s2 + $0x3d0] sm:$0xf]
      %v743 = vld [vmem:[%s2 + $0x3d4] sm:$0xf]
      %v744 = vld [vmem:[%s2 + $0x3d8] sm:$0xf]
      %v745 = vld [vmem:[%s2 + $0x3dc] sm:$0xf]
      %v746 = vld [vmem:[%s2 + $0x3e0] sm:$0xf]
      %v747 = vld [vmem:[%s2 + $0x3e4] sm:$0xf]
      %v748 = vld [vmem:[%s2 + $0x3e8] sm:$0xf]
      %v749 = vld [vmem:[%s2 + $0x3ec] sm:$0xf]
      %v750 = vld [vmem:[%s2 + $0x3f0] sm:$0xf]
      %v751 = vld [vmem:[%s2 + $0x3f4] sm:$0xf]
      %v752 = vld [vmem:[%s2 + $0x3f8] sm:$0xf]
      %v753 = vld [vmem:[%s2 + $0x3fc] sm:$0xf]
      %v754 = vld [vmem:[%s2 + $0x400] sm:$0xf]
      %v755 = vld [vmem:[%s2 + $0x404] sm:$0xf]
      %v756 = vld [vmem:[%s2 + $0x408] sm:$0xf]
      %v757 = vld [vmem:[%s2 + $0x40c] sm:$0xf]
      %v758 = vld [vmem:[%s2 + $0x410] sm:$0xf]
      %v759 = vld [vmem:[%s2 + $0x414] sm:$0xf]
      %v760 = vld [vmem:[%s2 + $0x418] sm:$0xf]
      %v761 = vld [vmem:[%s2 + $0x41c] sm:$0xf]
      %v762 = vld [vmem:[%s2 + $0x420] sm:$0xf]
      %v763 = vld [vmem:[%s2 + $0x424] sm:$0xf]
      %v764 = vld [vmem:[%s2 + $0x428] sm:$0xf]
      %v765 = vld [vmem:[%s2 + $0x42c] sm:$0xf]
      %v766 = vld [vmem:[%s2 + $0x430] sm:$0xf]
      %v767 = vld [vmem:[%s2 + $0x434] sm:$0xf]
      %v768 = vld [vmem:[%s2 + $0x438] sm:$0xf]
      %v769 = vld [vmem:[%s2 + $0x43c] sm:$0xf]
      %v770 = vld [vmem:[%s2 + $0x440] sm:$0xf]
      %v771 = vld [vmem:[%s2 + $0x444] sm:$0xf]
      %v772 = vld [vmem:[%s2 + $0x448] sm:$0xf]
      %v773 = vld [vmem:[%s2 + $0x44c] sm:$0xf]
      %v774 = vld [vmem:[%s2 + $0x450] sm:$0xf]
      %v775 = vld [vmem:[%s2 + $0x454] sm:$0xf]
      %v776 = vld [vmem:[%s2 + $0x458] sm:$0xf]
      %v777 = vld [vmem:[%s2 + $0x45c] sm:$0xf]
      %v778 = vld [vmem:[%s2 + $0x460] sm:$0xf]
      %v779 = vld [vmem:[%s2 + $0x464] sm:$0xf]
      %v780 = vld [vmem:[%s2 + $0x468] sm:$0xf]
      %v781 = vld [vmem:[%s2 + $0x46c] sm:$0xf]
      %v782 = vld [vmem:[%s2 + $0x470] sm:$0xf]
      %v783 = vld [vmem:[%s2 + $0x474] sm:$0xf]
      %v784 = vld [vmem:[%s2 + $0x478] sm:$0xf]
      %v785 = vld [vmem:[%s2 + $0x47c] sm:$0xf]
      %v786 = vld [vmem:[%s3] sm:$0xf]
      %v787 = vld [vmem:[%s3 + $0x4] sm:$0xf]
      %v788 = vld [vmem:[%s3 + $0x8] sm:$0xf]
      %v789 = vld [vmem:[%s3 + $0xc] sm:$0xf]
      %v790 = vld [vmem:[%s3 + $0x10] sm:$0xf]
      %v791 = vld [vmem:[%s3 + $0x14] sm:$0xf]
      %v792 = vld [vmem:[%s3 + $0x18] sm:$0xf]
      %v793 = vld [vmem:[%s3 + $0x1c] sm:$0xf]
      %v794 = vld [vmem:[%s3 + $0x20] sm:$0xf]
      %v795 = vld [vmem:[%s3 + $0x24] sm:$0xf]
      %v796 = vld [vmem:[%s3 + $0x28] sm:$0xf]
      %v797 = vld [vmem:[%s3 + $0x2c] sm:$0xf]
      %v798 = vld [vmem:[%s3 + $0x30] sm:$0xf]
      %v799 = vld [vmem:[%s3 + $0x34] sm:$0xf]
      %v800 = vld [vmem:[%s3 + $0x38] sm:$0xf]
      %v801 = vld [vmem:[%s3 + $0x3c] sm:$0xf]
      %v802 = vld [vmem:[%s3 + $0x40] sm:$0xf]
      %v803 = vld [vmem:[%s3 + $0x44] sm:$0xf]
      %v804 = vld [vmem:[%s3 + $0x48] sm:$0xf]
      %v805 = vld [vmem:[%s3 + $0x4c] sm:$0xf]
      %v806 = vld [vmem:[%s3 + $0x50] sm:$0xf]
      %v807 = vld [vmem:[%s3 + $0x54] sm:$0xf]
      %v808 = vld [vmem:[%s3 + $0x58] sm:$0xf]
      %v809 = vld [vmem:[%s3 + $0x5c] sm:$0xf]
      %v810 = vld [vmem:[%s3 + $0x60] sm:$0xf]
      %v811 = vld [vmem:[%s3 + $0x64] sm:$0xf]
      %v812 = vld [vmem:[%s3 + $0x68] sm:$0xf]
      %v813 = vld [vmem:[%s3 + $0x6c] sm:$0xf]
      %v814 = vld [vmem:[%s3 + $0x70] sm:$0xf]
      %v815 = vld [vmem:[%s3 + $0x74] sm:$0xf]
      %v816 = vld [vmem:[%s3 + $0x78] sm:$0xf]
      %v817 = vld [vmem:[%s3 + $0x7c] sm:$0xf]
      %v818 = vld [vmem:[%s3 + $0x80] sm:$0xf]
      %v819 = vld [vmem:[%s3 + $0x84] sm:$0xf]
      %v820 = vld [vmem:[%s3 + $0x88] sm:$0xf]
      %v821 = vld [vmem:[%s3 + $0x8c] sm:$0xf]
      %v822 = vld [vmem:[%s3 + $0x90] sm:$0xf]
      %v823 = vld [vmem:[%s3 + $0x94] sm:$0xf]
      %v824 = vld [vmem:[%s3 + $0x98] sm:$0xf]
      %v825 = vld [vmem:[%s3 + $0x9c] sm:$0xf]
      %v826 = vld [vmem:[%s3 + $0xa0] sm:$0xf]
      %v827 = vld [vmem:[%s3 + $0xa4] sm:$0xf]
      %v828 = vld [vmem:[%s3 + $0xa8] sm:$0xf]
      %v829 = vld [vmem:[%s3 + $0xac] sm:$0xf]
      %v830 = vld [vmem:[%s3 + $0xb0] sm:$0xf]
      %v831 = vld [vmem:[%s3 + $0xb4] sm:$0xf]
      %v832 = vld [vmem:[%s3 + $0xb8] sm:$0xf]
      %v833 = vld [vmem:[%s3 + $0xbc] sm:$0xf]
      %v834 = vld [vmem:[%s3 + $0xc0] sm:$0xf]
      %v835 = vld [vmem:[%s3 + $0xc4] sm:$0xf]
      %v836 = vld [vmem:[%s3 + $0xc8] sm:$0xf]
      %v837 = vld [vmem:[%s3 + $0xcc] sm:$0xf]
      %v838 = vld [vmem:[%s3 + $0xd0] sm:$0xf]
      %v839 = vld [vmem:[%s3 + $0xd4] sm:$0xf]
      %v840 = vld [vmem:[%s3 + $0xd8] sm:$0xf]
      %v841 = vld [vmem:[%s3 + $0xdc] sm:$0xf]
      %v842 = vld [vmem:[%s3 + $0xe0] sm:$0xf]
      %v843 = vld [vmem:[%s3 + $0xe4] sm:$0xf]
      %v844 = vld [vmem:[%s3 + $0xe8] sm:$0xf]
      %v845 = vld [vmem:[%s3 + $0xec] sm:$0xf]
      %v846 = vld [vmem:[%s3 + $0xf0] sm:$0xf]
      %v847 = vld [vmem:[%s3 + $0xf4] sm:$0xf]
      %v848 = vld [vmem:[%s3 + $0xf8] sm:$0xf]
      %v849 = vld [vmem:[%s3 + $0xfc] sm:$0xf]
      %v850 = vld [vmem:[%s3 + $0x100] sm:$0xf]
      %v851 = vld [vmem:[%s3 + $0x104] sm:$0xf]
      %v852 = vld [vmem:[%s3 + $0x108] sm:$0xf]
      %v853 = vld [vmem:[%s3 + $0x10c] sm:$0xf]
      %v854 = vld [vmem:[%s3 + $0x110] sm:$0xf]
      %v855 = vld [vmem:[%s3 + $0x114] sm:$0xf]
      %v856 = vld [vmem:[%s3 + $0x118] sm:$0xf]
      %v857 = vld [vmem:[%s3 + $0x11c] sm:$0xf]
      %v858 = vld [vmem:[%s3 + $0x120] sm:$0xf]
      %v859 = vld [vmem:[%s3 + $0x124] sm:$0xf]
      %v860 = vld [vmem:[%s3 + $0x128] sm:$0xf]
      %v861 = vld [vmem:[%s3 + $0x12c] sm:$0xf]
      %v862 = vld [vmem:[%s3 + $0x130] sm:$0xf]
      %v863 = vld [vmem:[%s3 + $0x134] sm:$0xf]
      %v864 = vld [vmem:[%s3 + $0x138] sm:$0xf]
      %v865 = vld [vmem:[%s3 + $0x13c] sm:$0xf]
      %v866 = vld [vmem:[%s3 + $0x140] sm:$0xf]
      %v867 = vld [vmem:[%s3 + $0x144] sm:$0xf]
      %v868 = vld [vmem:[%s3 + $0x148] sm:$0xf]
      %v869 = vld [vmem:[%s3 + $0x14c] sm:$0xf]
      %v870 = vld [vmem:[%s3 + $0x150] sm:$0xf]
      %v871 = vld [vmem:[%s3 + $0x154] sm:$0xf]
      %v872 = vld [vmem:[%s3 + $0x158] sm:$0xf]
      %v873 = vld [vmem:[%s3 + $0x15c] sm:$0xf]
      %v874 = vld [vmem:[%s3 + $0x160] sm:$0xf]
      %v875 = vld [vmem:[%s3 + $0x164] sm:$0xf]
      %v876 = vld [vmem:[%s3 + $0x168] sm:$0xf]
      %v877 = vld [vmem:[%s3 + $0x16c] sm:$0xf]
      %v878 = vld [vmem:[%s3 + $0x170] sm:$0xf]
      %v879 = vld [vmem:[%s3 + $0x174] sm:$0xf]
      %v880 = vld [vmem:[%s3 + $0x178] sm:$0xf]
      %v881 = vld [vmem:[%s3 + $0x17c] sm:$0xf]
      %v882 = vld [vmem:[%s3 + $0x180] sm:$0xf]
      %v883 = vld [vmem:[%s3 + $0x184] sm:$0xf]
      %v884 = vld [vmem:[%s3 + $0x188] sm:$0xf]
      %v885 = vld [vmem:[%s3 + $0x18c] sm:$0xf]
      %v886 = vld [vmem:[%s3 + $0x190] sm:$0xf]
      %v887 = vld [vmem:[%s3 + $0x194] sm:$0xf]
      %v888 = vld [vmem:[%s3 + $0x198] sm:$0xf]
      %v889 = vld [vmem:[%s3 + $0x19c] sm:$0xf]
      %v890 = vld [vmem:[%s3 + $0x1a0] sm:$0xf]
      %v891 = vld [vmem:[%s3 + $0x1a4] sm:$0xf]
      %v892 = vld [vmem:[%s3 + $0x1a8] sm:$0xf]
      %v893 = vld [vmem:[%s3 + $0x1ac] sm:$0xf]
      %v894 = vld [vmem:[%s3 + $0x1b0] sm:$0xf]
      %v895 = vld [vmem:[%s3 + $0x1b4] sm:$0xf]
      %v896 = vld [vmem:[%s3 + $0x1b8] sm:$0xf]
      %v897 = vld [vmem:[%s3 + $0x1bc] sm:$0xf]
      %v898 = vld [vmem:[%s3 + $0x1c0] sm:$0xf]
      %v899 = vld [vmem:[%s3 + $0x1c4] sm:$0xf]
      %v900 = vld [vmem:[%s3 + $0x1c8] sm:$0xf]
      %v901 = vld [vmem:[%s3 + $0x1cc] sm:$0xf]
      %v902 = vld [vmem:[%s3 + $0x1d0] sm:$0xf]
      %v903 = vld [vmem:[%s3 + $0x1d4] sm:$0xf]
      %v904 = vld [vmem:[%s3 + $0x1d8] sm:$0xf]
      %v905 = vld [vmem:[%s3 + $0x1dc] sm:$0xf]
      %v906 = vld [vmem:[%s3 + $0x1e0] sm:$0xf]
      %v907 = vld [vmem:[%s3 + $0x1e4] sm:$0xf]
      %v908 = vld [vmem:[%s3 + $0x1e8] sm:$0xf]
      %v909 = vld [vmem:[%s3 + $0x1ec] sm:$0xf]
      %v910 = vld [vmem:[%s3 + $0x1f0] sm:$0xf]
      %v911 = vld [vmem:[%s3 + $0x1f4] sm:$0xf]
      %v912 = vld [vmem:[%s3 + $0x1f8] sm:$0xf]
      %v913 = vld [vmem:[%s3 + $0x1fc] sm:$0xf]
      %v928 = vunpack.c.l.b16 %v224
      %v929 = vunpack.c.h.b16 %v224
      %v930 = vunpack.c.l.b16 %v225
      %v931 = vunpack.c.h.b16 %v225
      %v932 = vunpack.c.l.b16 %v226
      %v933 = vunpack.c.h.b16 %v226
      %v934 = vunpack.c.l.b16 %v227
      %v935 = vunpack.c.h.b16 %v227
      %v936 = vunpack.c.l.b16 %v228
      %v937 = vunpack.c.h.b16 %v228
      %v938 = vunpack.c.l.b16 %v229
      %v939 = vunpack.c.h.b16 %v229
      %v940 = vunpack.c.l.b16 %v230
      %v941 = vunpack.c.h.b16 %v230
      %v942 = vunpack.c.l.b16 %v231
      %v943 = vunpack.c.h.b16 %v231
      %v944 = vunpack.c.l.b16 %v232
      %v945 = vunpack.c.h.b16 %v232
      %v946 = vunpack.c.l.b16 %v233
      %v947 = vunpack.c.h.b16 %v233
      %v948 = vunpack.c.l.b16 %v234
      %v949 = vunpack.c.h.b16 %v234
      %v950 = vunpack.c.l.b16 %v235
      %v951 = vunpack.c.h.b16 %v235
      %v952 = vunpack.c.l.b16 %v236
      %v953 = vunpack.c.h.b16 %v236
      %v954 = vunpack.c.l.b16 %v237
      %v955 = vunpack.c.h.b16 %v237
      %v956 = vpack.c.b16 %v932, %v928
      %v957 = vpack.c.b16 %v933, %v929
      %v958 = vpack.c.b16 %v934, %v930
      %v959 = vpack.c.b16 %v935, %v931
      %v960 = vpack.c.b16 %v940, %v936
      %v961 = vpack.c.b16 %v941, %v937
      %v962 = vpack.c.b16 %v942, %v938
      %v963 = vpack.c.b16 %v943, %v939
      %v964 = vpack.c.b16 %v948, %v944
      %v965 = vpack.c.b16 %v949, %v945
      %v966 = vpack.c.b16 %v950, %v946
      %v967 = vpack.c.b16 %v951, %v947
      %v968 = vpack.c.b16 %v952, %v952
      %v969 = vpack.c.b16 %v953, %v953
      %v970 = vpack.c.b16 %v954, %v954
      %v971 = vpack.c.b16 %v955, %v955
      %v990 = vunpack.c.l.b16 %v238
      %v991 = vunpack.c.h.b16 %v238
      %v992 = vunpack.c.l.b16 %v239
      %v993 = vunpack.c.h.b16 %v239
      %v994 = vpack.c.b16 %v990, %v952
      %v995 = vpack.c.b16 %v991, %v953
      %v996 = vpack.c.b16 %v992, %v954
      %v997 = vpack.c.b16 %v993, %v955
      %vm998 = vsmask.f32 7424
      %v1000 = vshrl.u32 %v956, 16
      %v1002 = vshll.u32 %v956, 16
      %v1004 = vrot.slane %v1002, 1
      %v1005 = vor.u32 %v1000, %v1004
      %v1007 = vshll.u32 %v960, 16
      %v1009 = vrot.slane %v1007, 1
      %v1010 = vsel %vm998, %v1005, %v1009
      %v1012 = vshrl.u32 %v957, 16
      %v1014 = vshll.u32 %v957, 16
      %v1016 = vrot.slane %v1014, 1
      %v1017 = vor.u32 %v1012, %v1016
      %v1019 = vshll.u32 %v961, 16
      %v1021 = vrot.slane %v1019, 1
      %v1022 = vsel %vm998, %v1017, %v1021
      %v1024 = vshrl.u32 %v958, 16
      %v1026 = vshll.u32 %v958, 16
      %v1028 = vrot.slane %v1026, 1
      %v1029 = vor.u32 %v1024, %v1028
      %v1031 = vshll.u32 %v962, 16
      %v1033 = vrot.slane %v1031, 1
      %v1034 = vsel %vm998, %v1029, %v1033
      %v1036 = vshrl.u32 %v959, 16
      %v1038 = vshll.u32 %v959, 16
      %v1040 = vrot.slane %v1038, 1
      %v1041 = vor.u32 %v1036, %v1040
      %v1043 = vshll.u32 %v963, 16
      %v1045 = vrot.slane %v1043, 1
      %v1046 = vsel %vm998, %v1041, %v1045
      %v1047 = vshrl.u32 %v960, 16
      %v1049 = vor.u32 %v1047, %v1009
      %v1051 = vshll.u32 %v964, 16
      %v1053 = vrot.slane %v1051, 1
      %v1054 = vsel %vm998, %v1049, %v1053
      %v1055 = vshrl.u32 %v961, 16
      %v1057 = vor.u32 %v1055, %v1021
      %v1059 = vshll.u32 %v965, 16
      %v1061 = vrot.slane %v1059, 1
      %v1062 = vsel %vm998, %v1057, %v1061
      %v1063 = vshrl.u32 %v962, 16
      %v1065 = vor.u32 %v1063, %v1033
      %v1067 = vshll.u32 %v966, 16
      %v1069 = vrot.slane %v1067, 1
      %v1070 = vsel %vm998, %v1065, %v1069
      %v1071 = vshrl.u32 %v963, 16
      %v1073 = vor.u32 %v1071, %v1045
      %v1075 = vshll.u32 %v967, 16
      %v1077 = vrot.slane %v1075, 1
      %v1078 = vsel %vm998, %v1073, %v1077
      %v1079 = vshrl.u32 %v964, 16
      %v1081 = vor.u32 %v1079, %v1053
      %v1083 = vshll.u32 %v994, 16
      %v1085 = vrot.slane %v1083, 1
      %v1086 = vsel %vm998, %v1081, %v1085
      %v1087 = vshrl.u32 %v965, 16
      %v1089 = vor.u32 %v1087, %v1061
      %v1091 = vshll.u32 %v995, 16
      %v1093 = vrot.slane %v1091, 1
      %v1094 = vsel %vm998, %v1089, %v1093
      %v1095 = vshrl.u32 %v966, 16
      %v1097 = vor.u32 %v1095, %v1069
      %v1099 = vshll.u32 %v996, 16
      %v1101 = vrot.slane %v1099, 1
      %v1102 = vsel %vm998, %v1097, %v1101
      %v1103 = vshrl.u32 %v967, 16
      %v1105 = vor.u32 %v1103, %v1077
      %v1107 = vshll.u32 %v997, 16
      %v1109 = vrot.slane %v1107, 1
      %v1110 = vsel %vm998, %v1105, %v1109
      %v1111 = vshrl.u32 %v994, 16
      %v1113 = vor.u32 %v1111, %v1085
      %v1114 = vshrl.u32 %v995, 16
      %v1116 = vor.u32 %v1114, %v1093
      %v1117 = vshrl.u32 %v996, 16
      %v1119 = vor.u32 %v1117, %v1101
      %v1120 = vshrl.u32 %v997, 16
      %v1122 = vor.u32 %v1120, %v1109
      %v1139 = vpack.c.b16 %v936, %v932
      %v1140 = vpack.c.b16 %v937, %v933
      %v1141 = vpack.c.b16 %v938, %v934
      %v1142 = vpack.c.b16 %v939, %v935
      %v1143 = vpack.c.b16 %v944, %v940
      %v1144 = vpack.c.b16 %v945, %v941
      %v1145 = vpack.c.b16 %v946, %v942
      %v1146 = vpack.c.b16 %v947, %v943
      %v1147 = vpack.c.b16 %v952, %v948
      %v1148 = vpack.c.b16 %v953, %v949
      %v1149 = vpack.c.b16 %v954, %v950
      %v1150 = vpack.c.b16 %v955, %v951
      %v1151 = vpack.c.b16 %v990, %v990
      %v1152 = vpack.c.b16 %v991, %v991
      %v1153 = vpack.c.b16 %v992, %v992
      %v1154 = vpack.c.b16 %v993, %v993
      %v1173 = vunpack.c.l.b16 %v240
      %v1174 = vunpack.c.h.b16 %v240
      %v1175 = vunpack.c.l.b16 %v241
      %v1176 = vunpack.c.h.b16 %v241
      %v1177 = vpack.c.b16 %v1173, %v990
      %v1178 = vpack.c.b16 %v1174, %v991
      %v1179 = vpack.c.b16 %v1175, %v992
      %v1180 = vpack.c.b16 %v1176, %v993
      %v1182 = vshrl.u32 %v1139, 16
      %v1184 = vshll.u32 %v1139, 16
      %v1186 = vrot.slane %v1184, 1
      %v1187 = vor.u32 %v1182, %v1186
      %v1189 = vshll.u32 %v1143, 16
      %v1191 = vrot.slane %v1189, 1
      %v1192 = vsel %vm998, %v1187, %v1191
      %v1194 = vshrl.u32 %v1140, 16
      %v1196 = vshll.u32 %v1140, 16
      %v1198 = vrot.slane %v1196, 1
      %v1199 = vor.u32 %v1194, %v1198
      %v1201 = vshll.u32 %v1144, 16
      %v1203 = vrot.slane %v1201, 1
      %v1204 = vsel %vm998, %v1199, %v1203
      %v1206 = vshrl.u32 %v1141, 16
      %v1208 = vshll.u32 %v1141, 16
      %v1210 = vrot.slane %v1208, 1
      %v1211 = vor.u32 %v1206, %v1210
      %v1213 = vshll.u32 %v1145, 16
      %v1215 = vrot.slane %v1213, 1
      %v1216 = vsel %vm998, %v1211, %v1215
      %v1218 = vshrl.u32 %v1142, 16
      %v1220 = vshll.u32 %v1142, 16
      %v1222 = vrot.slane %v1220, 1
      %v1223 = vor.u32 %v1218, %v1222
      %v1225 = vshll.u32 %v1146, 16
      %v1227 = vrot.slane %v1225, 1
      %v1228 = vsel %vm998, %v1223, %v1227
      %v1229 = vshrl.u32 %v1143, 16
      %v1231 = vor.u32 %v1229, %v1191
      %v1233 = vshll.u32 %v1147, 16
      %v1235 = vrot.slane %v1233, 1
      %v1236 = vsel %vm998, %v1231, %v1235
      %v1237 = vshrl.u32 %v1144, 16
      %v1239 = vor.u32 %v1237, %v1203
      %v1241 = vshll.u32 %v1148, 16
      %v1243 = vrot.slane %v1241, 1
      %v1244 = vsel %vm998, %v1239, %v1243
      %v1245 = vshrl.u32 %v1145, 16
      %v1247 = vor.u32 %v1245, %v1215
      %v1249 = vshll.u32 %v1149, 16
      %v1251 = vrot.slane %v1249, 1
      %v1252 = vsel %vm998, %v1247, %v1251
      %v1253 = vshrl.u32 %v1146, 16
      %v1255 = vor.u32 %v1253, %v1227
      %v1257 = vshll.u32 %v1150, 16
      %v1259 = vrot.slane %v1257, 1
      %v1260 = vsel %vm998, %v1255, %v1259
      %v1261 = vshrl.u32 %v1147, 16
      %v1263 = vor.u32 %v1261, %v1235
      %v1265 = vshll.u32 %v1177, 16
      %v1267 = vrot.slane %v1265, 1
      %v1268 = vsel %vm998, %v1263, %v1267
      %v1269 = vshrl.u32 %v1148, 16
      %v1271 = vor.u32 %v1269, %v1243
      %v1273 = vshll.u32 %v1178, 16
      %v1275 = vrot.slane %v1273, 1
      %v1276 = vsel %vm998, %v1271, %v1275
      %v1277 = vshrl.u32 %v1149, 16
      %v1279 = vor.u32 %v1277, %v1251
      %v1281 = vshll.u32 %v1179, 16
      %v1283 = vrot.slane %v1281, 1
      %v1284 = vsel %vm998, %v1279, %v1283
      %v1285 = vshrl.u32 %v1150, 16
      %v1287 = vor.u32 %v1285, %v1259
      %v1289 = vshll.u32 %v1180, 16
      %v1291 = vrot.slane %v1289, 1
      %v1292 = vsel %vm998, %v1287, %v1291
      %v1293 = vshrl.u32 %v1177, 16
      %v1295 = vor.u32 %v1293, %v1267
      %v1296 = vshrl.u32 %v1178, 16
      %v1298 = vor.u32 %v1296, %v1275
      %v1299 = vshrl.u32 %v1179, 16
      %v1301 = vor.u32 %v1299, %v1283
      %v1302 = vshrl.u32 %v1180, 16
      %v1304 = vor.u32 %v1302, %v1291
      %v1577 = vunpack.c.l.b16 %v242
      %v1578 = vunpack.c.h.b16 %v242
      %v1579 = vunpack.c.l.b16 %v243
      %v1580 = vunpack.c.h.b16 %v243
      %v1581 = vunpack.c.l.b16 %v244
      %v1582 = vunpack.c.h.b16 %v244
      %v1583 = vunpack.c.l.b16 %v245
      %v1584 = vunpack.c.h.b16 %v245
      %v1585 = vunpack.c.l.b16 %v246
      %v1586 = vunpack.c.h.b16 %v246
      %v1587 = vunpack.c.l.b16 %v247
      %v1588 = vunpack.c.h.b16 %v247
      %v1589 = vunpack.c.l.b16 %v248
      %v1590 = vunpack.c.h.b16 %v248
      %v1591 = vunpack.c.l.b16 %v249
      %v1592 = vunpack.c.h.b16 %v249
      %v1593 = vunpack.c.l.b16 %v250
      %v1594 = vunpack.c.h.b16 %v250
      %v1595 = vunpack.c.l.b16 %v251
      %v1596 = vunpack.c.h.b16 %v251
      %v1597 = vunpack.c.l.b16 %v252
      %v1598 = vunpack.c.h.b16 %v252
      %v1599 = vunpack.c.l.b16 %v253
      %v1600 = vunpack.c.h.b16 %v253
      %v1601 = vunpack.c.l.b16 %v254
      %v1602 = vunpack.c.h.b16 %v254
      %v1603 = vunpack.c.l.b16 %v255
      %v1604 = vunpack.c.h.b16 %v255
      %v1605 = vunpack.c.l.b16 %v256
      %v1606 = vunpack.c.h.b16 %v256
      %v1607 = vunpack.c.l.b16 %v257
      %v1608 = vunpack.c.h.b16 %v257
      %v1609 = vunpack.c.l.b16 %v258
      %v1610 = vunpack.c.h.b16 %v258
      %v1611 = vunpack.c.l.b16 %v259
      %v1612 = vunpack.c.h.b16 %v259
      %v1613 = vunpack.c.l.b16 %v260
      %v1614 = vunpack.c.h.b16 %v260
      %v1615 = vunpack.c.l.b16 %v261
      %v1616 = vunpack.c.h.b16 %v261
      %v1617 = vunpack.c.l.b16 %v262
      %v1618 = vunpack.c.h.b16 %v262
      %v1619 = vunpack.c.l.b16 %v263
      %v1620 = vunpack.c.h.b16 %v263
      %v1621 = vunpack.c.l.b16 %v264
      %v1622 = vunpack.c.h.b16 %v264
      %v1623 = vunpack.c.l.b16 %v265
      %v1624 = vunpack.c.h.b16 %v265
      %v1625 = vunpack.c.l.b16 %v266
      %v1626 = vunpack.c.h.b16 %v266
      %v1627 = vunpack.c.l.b16 %v267
      %v1628 = vunpack.c.h.b16 %v267
      %v1629 = vunpack.c.l.b16 %v268
      %v1630 = vunpack.c.h.b16 %v268
      %v1631 = vunpack.c.l.b16 %v269
      %v1632 = vunpack.c.h.b16 %v269
      %v1633 = vunpack.c.l.b16 %v270
      %v1634 = vunpack.c.h.b16 %v270
      %v1635 = vunpack.c.l.b16 %v271
      %v1636 = vunpack.c.h.b16 %v271
      %v1637 = vunpack.c.l.b16 %v272
      %v1638 = vunpack.c.h.b16 %v272
      %v1639 = vunpack.c.l.b16 %v273
      %v1640 = vunpack.c.h.b16 %v273
      %v1641 = vunpack.c.l.b16 %v274
      %v1642 = vunpack.c.h.b16 %v274
      %v1643 = vunpack.c.l.b16 %v275
      %v1644 = vunpack.c.h.b16 %v275
      %v1645 = vunpack.c.l.b16 %v276
      %v1646 = vunpack.c.h.b16 %v276
      %v1647 = vunpack.c.l.b16 %v277
      %v1648 = vunpack.c.h.b16 %v277
      %v1649 = vunpack.c.l.b16 %v278
      %v1650 = vunpack.c.h.b16 %v278
      %v1651 = vunpack.c.l.b16 %v279
      %v1652 = vunpack.c.h.b16 %v279
      %v1653 = vunpack.c.l.b16 %v280
      %v1654 = vunpack.c.h.b16 %v280
      %v1655 = vunpack.c.l.b16 %v281
      %v1656 = vunpack.c.h.b16 %v281
      %v1657 = vunpack.c.l.b16 %v282
      %v1658 = vunpack.c.h.b16 %v282
      %v1659 = vunpack.c.l.b16 %v283
      %v1660 = vunpack.c.h.b16 %v283
      %v1661 = vunpack.c.l.b16 %v284
      %v1662 = vunpack.c.h.b16 %v284
      %v1663 = vunpack.c.l.b16 %v285
      %v1664 = vunpack.c.h.b16 %v285
      %v1665 = vunpack.c.l.b16 %v286
      %v1666 = vunpack.c.h.b16 %v286
      %v1667 = vunpack.c.l.b16 %v287
      %v1668 = vunpack.c.h.b16 %v287
      %v1669 = vunpack.c.l.b16 %v288
      %v1670 = vunpack.c.h.b16 %v288
      %v1671 = vunpack.c.l.b16 %v289
      %v1672 = vunpack.c.h.b16 %v289
      %v1673 = vunpack.c.l.b16 %v290
      %v1674 = vunpack.c.h.b16 %v290
      %v1675 = vunpack.c.l.b16 %v291
      %v1676 = vunpack.c.h.b16 %v291
      %v1677 = vunpack.c.l.b16 %v292
      %v1678 = vunpack.c.h.b16 %v292
      %v1679 = vunpack.c.l.b16 %v293
      %v1680 = vunpack.c.h.b16 %v293
      %v1681 = vunpack.c.l.b16 %v294
      %v1682 = vunpack.c.h.b16 %v294
      %v1683 = vunpack.c.l.b16 %v295
      %v1684 = vunpack.c.h.b16 %v295
      %v1685 = vunpack.c.l.b16 %v296
      %v1686 = vunpack.c.h.b16 %v296
      %v1687 = vunpack.c.l.b16 %v297
      %v1688 = vunpack.c.h.b16 %v297
      %v1689 = vunpack.c.l.b16 %v298
      %v1690 = vunpack.c.h.b16 %v298
      %v1691 = vunpack.c.l.b16 %v299
      %v1692 = vunpack.c.h.b16 %v299
      %v1693 = vunpack.c.l.b16 %v300
      %v1694 = vunpack.c.h.b16 %v300
      %v1695 = vunpack.c.l.b16 %v301
      %v1696 = vunpack.c.h.b16 %v301
      %v1697 = vunpack.c.l.b16 %v302
      %v1698 = vunpack.c.h.b16 %v302
      %v1699 = vunpack.c.l.b16 %v303
      %v1700 = vunpack.c.h.b16 %v303
      %v1701 = vunpack.c.l.b16 %v304
      %v1702 = vunpack.c.h.b16 %v304
      %v1703 = vunpack.c.l.b16 %v305
      %v1704 = vunpack.c.h.b16 %v305
      %v1705 = vunpack.c.l.b16 %v306
      %v1706 = vunpack.c.h.b16 %v306
      %v1707 = vunpack.c.l.b16 %v307
      %v1708 = vunpack.c.h.b16 %v307
      %v1709 = vunpack.c.l.b16 %v308
      %v1710 = vunpack.c.h.b16 %v308
      %v1711 = vunpack.c.l.b16 %v309
      %v1712 = vunpack.c.h.b16 %v309
      %v1713 = vunpack.c.l.b16 %v310
      %v1714 = vunpack.c.h.b16 %v310
      %v1715 = vunpack.c.l.b16 %v311
      %v1716 = vunpack.c.h.b16 %v311
      %v1717 = vunpack.c.l.b16 %v312
      %v1718 = vunpack.c.h.b16 %v312
      %v1719 = vunpack.c.l.b16 %v313
      %v1720 = vunpack.c.h.b16 %v313
      %v1721 = vunpack.c.l.b16 %v314
      %v1722 = vunpack.c.h.b16 %v314
      %v1723 = vunpack.c.l.b16 %v315
      %v1724 = vunpack.c.h.b16 %v315
      %v1725 = vunpack.c.l.b16 %v316
      %v1726 = vunpack.c.h.b16 %v316
      %v1727 = vunpack.c.l.b16 %v317
      %v1728 = vunpack.c.h.b16 %v317
      %v1729 = vunpack.c.l.b16 %v318
      %v1730 = vunpack.c.h.b16 %v318
      %v1731 = vunpack.c.l.b16 %v319
      %v1732 = vunpack.c.h.b16 %v319
      %v1733 = vunpack.c.l.b16 %v320
      %v1734 = vunpack.c.h.b16 %v320
      %v1735 = vunpack.c.l.b16 %v321
      %v1736 = vunpack.c.h.b16 %v321
      %v1737 = vunpack.c.l.b16 %v322
      %v1738 = vunpack.c.h.b16 %v322
      %v1739 = vunpack.c.l.b16 %v323
      %v1740 = vunpack.c.h.b16 %v323
      %v1741 = vunpack.c.l.b16 %v324
      %v1742 = vunpack.c.h.b16 %v324
      %v1743 = vunpack.c.l.b16 %v325
      %v1744 = vunpack.c.h.b16 %v325
      %v1745 = vunpack.c.l.b16 %v326
      %v1746 = vunpack.c.h.b16 %v326
      %v1747 = vunpack.c.l.b16 %v327
      %v1748 = vunpack.c.h.b16 %v327
      %v1749 = vunpack.c.l.b16 %v328
      %v1750 = vunpack.c.h.b16 %v328
      %v1751 = vunpack.c.l.b16 %v329
      %v1752 = vunpack.c.h.b16 %v329
      %v1753 = vunpack.c.l.b16 %v330
      %v1754 = vunpack.c.h.b16 %v330
      %v1755 = vunpack.c.l.b16 %v331
      %v1756 = vunpack.c.h.b16 %v331
      %v1757 = vunpack.c.l.b16 %v332
      %v1758 = vunpack.c.h.b16 %v332
      %v1759 = vunpack.c.l.b16 %v333
      %v1760 = vunpack.c.h.b16 %v333
      %v1761 = vunpack.c.l.b16 %v334
      %v1762 = vunpack.c.h.b16 %v334
      %v1763 = vunpack.c.l.b16 %v335
      %v1764 = vunpack.c.h.b16 %v335
      %v1765 = vunpack.c.l.b16 %v336
      %v1766 = vunpack.c.h.b16 %v336
      %v1767 = vunpack.c.l.b16 %v337
      %v1768 = vunpack.c.h.b16 %v337
      %v1769 = vunpack.c.l.b16 %v338
      %v1770 = vunpack.c.h.b16 %v338
      %v1771 = vunpack.c.l.b16 %v339
      %v1772 = vunpack.c.h.b16 %v339
      %v1773 = vunpack.c.l.b16 %v340
      %v1774 = vunpack.c.h.b16 %v340
      %v1775 = vunpack.c.l.b16 %v341
      %v1776 = vunpack.c.h.b16 %v341
      %v1777 = vunpack.c.l.b16 %v342
      %v1778 = vunpack.c.h.b16 %v342
      %v1779 = vunpack.c.l.b16 %v343
      %v1780 = vunpack.c.h.b16 %v343
      %v1781 = vunpack.c.l.b16 %v344
      %v1782 = vunpack.c.h.b16 %v344
      %v1783 = vunpack.c.l.b16 %v345
      %v1784 = vunpack.c.h.b16 %v345
      %v1785 = vunpack.c.l.b16 %v346
      %v1786 = vunpack.c.h.b16 %v346
      %v1787 = vunpack.c.l.b16 %v347
      %v1788 = vunpack.c.h.b16 %v347
      %v1789 = vunpack.c.l.b16 %v348
      %v1790 = vunpack.c.h.b16 %v348
      %v1791 = vunpack.c.l.b16 %v349
      %v1792 = vunpack.c.h.b16 %v349
      %v1793 = vunpack.c.l.b16 %v350
      %v1794 = vunpack.c.h.b16 %v350
      %v1795 = vunpack.c.l.b16 %v351
      %v1796 = vunpack.c.h.b16 %v351
      %v1797 = vunpack.c.l.b16 %v352
      %v1798 = vunpack.c.h.b16 %v352
      %v1799 = vunpack.c.l.b16 %v353
      %v1800 = vunpack.c.h.b16 %v353
      %v1801 = vunpack.c.l.b16 %v354
      %v1802 = vunpack.c.h.b16 %v354
      %v1803 = vunpack.c.l.b16 %v355
      %v1804 = vunpack.c.h.b16 %v355
      %v1805 = vunpack.c.l.b16 %v356
      %v1806 = vunpack.c.h.b16 %v356
      %v1807 = vunpack.c.l.b16 %v357
      %v1808 = vunpack.c.h.b16 %v357
      %v1809 = vunpack.c.l.b16 %v358
      %v1810 = vunpack.c.h.b16 %v358
      %v1811 = vunpack.c.l.b16 %v359
      %v1812 = vunpack.c.h.b16 %v359
      %v1813 = vunpack.c.l.b16 %v360
      %v1814 = vunpack.c.h.b16 %v360
      %v1815 = vunpack.c.l.b16 %v361
      %v1816 = vunpack.c.h.b16 %v361
      %v1817 = vunpack.c.l.b16 %v362
      %v1818 = vunpack.c.h.b16 %v362
      %v1819 = vunpack.c.l.b16 %v363
      %v1820 = vunpack.c.h.b16 %v363
      %v1821 = vunpack.c.l.b16 %v364
      %v1822 = vunpack.c.h.b16 %v364
      %v1823 = vunpack.c.l.b16 %v365
      %v1824 = vunpack.c.h.b16 %v365
      %v1825 = vunpack.c.l.b16 %v366
      %v1826 = vunpack.c.h.b16 %v366
      %v1827 = vunpack.c.l.b16 %v367
      %v1828 = vunpack.c.h.b16 %v367
      %v1829 = vunpack.c.l.b16 %v368
      %v1830 = vunpack.c.h.b16 %v368
      %v1831 = vunpack.c.l.b16 %v369
      %v1832 = vunpack.c.h.b16 %v369
      %v1833 = vunpack.c.l.b16 %v370
      %v1834 = vunpack.c.h.b16 %v370
      %v1835 = vunpack.c.l.b16 %v371
      %v1836 = vunpack.c.h.b16 %v371
      %v1837 = vunpack.c.l.b16 %v372
      %v1838 = vunpack.c.h.b16 %v372
      %v1839 = vunpack.c.l.b16 %v373
      %v1840 = vunpack.c.h.b16 %v373
      %v1841 = vunpack.c.l.b16 %v374
      %v1842 = vunpack.c.h.b16 %v374
      %v1843 = vunpack.c.l.b16 %v375
      %v1844 = vunpack.c.h.b16 %v375
      %v1845 = vunpack.c.l.b16 %v376
      %v1846 = vunpack.c.h.b16 %v376
      %v1847 = vunpack.c.l.b16 %v377
      %v1848 = vunpack.c.h.b16 %v377
      %v1849 = vunpack.c.l.b16 %v378
      %v1850 = vunpack.c.h.b16 %v378
      %v1851 = vunpack.c.l.b16 %v379
      %v1852 = vunpack.c.h.b16 %v379
      %v1853 = vunpack.c.l.b16 %v380
      %v1854 = vunpack.c.h.b16 %v380
      %v1855 = vunpack.c.l.b16 %v381
      %v1856 = vunpack.c.h.b16 %v381
      %v1857 = vunpack.c.l.b16 %v382
      %v1858 = vunpack.c.h.b16 %v382
      %v1859 = vunpack.c.l.b16 %v383
      %v1860 = vunpack.c.h.b16 %v383
      %v1861 = vunpack.c.l.b16 %v384
      %v1862 = vunpack.c.h.b16 %v384
      %v1863 = vunpack.c.l.b16 %v385
      %v1864 = vunpack.c.h.b16 %v385
      %v1865 = vunpack.c.l.b16 %v386
      %v1866 = vunpack.c.h.b16 %v386
      %v1867 = vunpack.c.l.b16 %v387
      %v1868 = vunpack.c.h.b16 %v387
      %v1869 = vunpack.c.l.b16 %v388
      %v1870 = vunpack.c.h.b16 %v388
      %v1871 = vunpack.c.l.b16 %v389
      %v1872 = vunpack.c.h.b16 %v389
      %v1873 = vunpack.c.l.b16 %v390
      %v1874 = vunpack.c.h.b16 %v390
      %v1875 = vunpack.c.l.b16 %v391
      %v1876 = vunpack.c.h.b16 %v391
      %v1877 = vunpack.c.l.b16 %v392
      %v1878 = vunpack.c.h.b16 %v392
      %v1879 = vunpack.c.l.b16 %v393
      %v1880 = vunpack.c.h.b16 %v393
      %v1881 = vunpack.c.l.b16 %v394
      %v1882 = vunpack.c.h.b16 %v394
      %v1883 = vunpack.c.l.b16 %v395
      %v1884 = vunpack.c.h.b16 %v395
      %v1885 = vunpack.c.l.b16 %v396
      %v1886 = vunpack.c.h.b16 %v396
      %v1887 = vunpack.c.l.b16 %v397
      %v1888 = vunpack.c.h.b16 %v397
      %v1889 = vunpack.c.l.b16 %v398
      %v1890 = vunpack.c.h.b16 %v398
      %v1891 = vunpack.c.l.b16 %v399
      %v1892 = vunpack.c.h.b16 %v399
      %v1893 = vunpack.c.l.b16 %v400
      %v1894 = vunpack.c.h.b16 %v400
      %v1895 = vunpack.c.l.b16 %v401
      %v1896 = vunpack.c.h.b16 %v401
      %v1897 = vunpack.c.l.b16 %v402
      %v1898 = vunpack.c.h.b16 %v402
      %v1899 = vunpack.c.l.b16 %v403
      %v1900 = vunpack.c.h.b16 %v403
      %v1901 = vunpack.c.l.b16 %v404
      %v1902 = vunpack.c.h.b16 %v404
      %v1903 = vunpack.c.l.b16 %v405
      %v1904 = vunpack.c.h.b16 %v405
      %v1905 = vunpack.c.l.b16 %v406
      %v1906 = vunpack.c.h.b16 %v406
      %v1907 = vunpack.c.l.b16 %v407
      %v1908 = vunpack.c.h.b16 %v407
      %v1909 = vunpack.c.l.b16 %v408
      %v1910 = vunpack.c.h.b16 %v408
      %v1911 = vunpack.c.l.b16 %v409
      %v1912 = vunpack.c.h.b16 %v409
      %v1913 = vunpack.c.l.b16 %v410
      %v1914 = vunpack.c.h.b16 %v410
      %v1915 = vunpack.c.l.b16 %v411
      %v1916 = vunpack.c.h.b16 %v411
      %v1917 = vunpack.c.l.b16 %v412
      %v1918 = vunpack.c.h.b16 %v412
      %v1919 = vunpack.c.l.b16 %v413
      %v1920 = vunpack.c.h.b16 %v413
      %v1921 = vunpack.c.l.b16 %v414
      %v1922 = vunpack.c.h.b16 %v414
      %v1923 = vunpack.c.l.b16 %v415
      %v1924 = vunpack.c.h.b16 %v415
      %v1925 = vunpack.c.l.b16 %v416
      %v1926 = vunpack.c.h.b16 %v416
      %v1927 = vunpack.c.l.b16 %v417
      %v1928 = vunpack.c.h.b16 %v417
      %v1929 = vunpack.c.l.b16 %v418
      %v1930 = vunpack.c.h.b16 %v418
      %v1931 = vunpack.c.l.b16 %v419
      %v1932 = vunpack.c.h.b16 %v419
      %v1933 = vunpack.c.l.b16 %v420
      %v1934 = vunpack.c.h.b16 %v420
      %v1935 = vunpack.c.l.b16 %v421
      %v1936 = vunpack.c.h.b16 %v421
      %v1937 = vunpack.c.l.b16 %v422
      %v1938 = vunpack.c.h.b16 %v422
      %v1939 = vunpack.c.l.b16 %v423
      %v1940 = vunpack.c.h.b16 %v423
      %v1941 = vunpack.c.l.b16 %v424
      %v1942 = vunpack.c.h.b16 %v424
      %v1943 = vunpack.c.l.b16 %v425
      %v1944 = vunpack.c.h.b16 %v425
      %v1945 = vunpack.c.l.b16 %v426
      %v1946 = vunpack.c.h.b16 %v426
      %v1947 = vunpack.c.l.b16 %v427
      %v1948 = vunpack.c.h.b16 %v427
      %v1949 = vunpack.c.l.b16 %v428
      %v1950 = vunpack.c.h.b16 %v428
      %v1951 = vunpack.c.l.b16 %v429
      %v1952 = vunpack.c.h.b16 %v429
      %v1953 = vunpack.c.l.b16 %v430
      %v1954 = vunpack.c.h.b16 %v430
      %v1955 = vunpack.c.l.b16 %v431
      %v1956 = vunpack.c.h.b16 %v431
      %v1957 = vunpack.c.l.b16 %v432
      %v1958 = vunpack.c.h.b16 %v432
      %v1959 = vunpack.c.l.b16 %v433
      %v1960 = vunpack.c.h.b16 %v433
      %v1961 = vunpack.c.l.b16 %v434
      %v1962 = vunpack.c.h.b16 %v434
      %v1963 = vunpack.c.l.b16 %v435
      %v1964 = vunpack.c.h.b16 %v435
      %v1965 = vunpack.c.l.b16 %v436
      %v1966 = vunpack.c.h.b16 %v436
      %v1967 = vunpack.c.l.b16 %v437
      %v1968 = vunpack.c.h.b16 %v437
      %v1969 = vunpack.c.l.b16 %v438
      %v1970 = vunpack.c.h.b16 %v438
      %v1971 = vunpack.c.l.b16 %v439
      %v1972 = vunpack.c.h.b16 %v439
      %v1973 = vunpack.c.l.b16 %v440
      %v1974 = vunpack.c.h.b16 %v440
      %v1975 = vunpack.c.l.b16 %v441
      %v1976 = vunpack.c.h.b16 %v441
      %v1977 = vunpack.c.l.b16 %v442
      %v1978 = vunpack.c.h.b16 %v442
      %v1979 = vunpack.c.l.b16 %v443
      %v1980 = vunpack.c.h.b16 %v443
      %v1981 = vunpack.c.l.b16 %v444
      %v1982 = vunpack.c.h.b16 %v444
      %v1983 = vunpack.c.l.b16 %v445
      %v1984 = vunpack.c.h.b16 %v445
      %v1985 = vunpack.c.l.b16 %v446
      %v1986 = vunpack.c.h.b16 %v446
      %v1987 = vunpack.c.l.b16 %v447
      %v1988 = vunpack.c.h.b16 %v447
      %v1989 = vunpack.c.l.b16 %v448
      %v1990 = vunpack.c.h.b16 %v448
      %v1991 = vunpack.c.l.b16 %v449
      %v1992 = vunpack.c.h.b16 %v449
      %v1993 = vunpack.c.l.b16 %v450
      %v1994 = vunpack.c.h.b16 %v450
      %v1995 = vunpack.c.l.b16 %v451
      %v1996 = vunpack.c.h.b16 %v451
      %v1997 = vunpack.c.l.b16 %v452
      %v1998 = vunpack.c.h.b16 %v452
      %v1999 = vunpack.c.l.b16 %v453
      %v2000 = vunpack.c.h.b16 %v453
      %v2001 = vunpack.c.l.b16 %v454
      %v2002 = vunpack.c.h.b16 %v454
      %v2003 = vunpack.c.l.b16 %v455
      %v2004 = vunpack.c.h.b16 %v455
      %v2005 = vunpack.c.l.b16 %v456
      %v2006 = vunpack.c.h.b16 %v456
      %v2007 = vunpack.c.l.b16 %v457
      %v2008 = vunpack.c.h.b16 %v457
      %v2009 = vunpack.c.l.b16 %v458
      %v2010 = vunpack.c.h.b16 %v458
      %v2011 = vunpack.c.l.b16 %v459
      %v2012 = vunpack.c.h.b16 %v459
      %v2013 = vunpack.c.l.b16 %v460
      %v2014 = vunpack.c.h.b16 %v460
      %v2015 = vunpack.c.l.b16 %v461
      %v2016 = vunpack.c.h.b16 %v461
      %v2017 = vunpack.c.l.b16 %v462
      %v2018 = vunpack.c.h.b16 %v462
      %v2019 = vunpack.c.l.b16 %v463
      %v2020 = vunpack.c.h.b16 %v463
      %v2021 = vunpack.c.l.b16 %v464
      %v2022 = vunpack.c.h.b16 %v464
      %v2023 = vunpack.c.l.b16 %v465
      %v2024 = vunpack.c.h.b16 %v465
      %v2025 = vunpack.c.l.b16 %v466
      %v2026 = vunpack.c.h.b16 %v466
      %v2027 = vunpack.c.l.b16 %v467
      %v2028 = vunpack.c.h.b16 %v467
      %v2029 = vunpack.c.l.b16 %v468
      %v2030 = vunpack.c.h.b16 %v468
      %v2031 = vunpack.c.l.b16 %v469
      %v2032 = vunpack.c.h.b16 %v469
      %v2033 = vunpack.c.l.b16 %v470
      %v2034 = vunpack.c.h.b16 %v470
      %v2035 = vunpack.c.l.b16 %v471
      %v2036 = vunpack.c.h.b16 %v471
      %v2037 = vunpack.c.l.b16 %v472
      %v2038 = vunpack.c.h.b16 %v472
      %v2039 = vunpack.c.l.b16 %v473
      %v2040 = vunpack.c.h.b16 %v473
      %v2041 = vunpack.c.l.b16 %v474
      %v2042 = vunpack.c.h.b16 %v474
      %v2043 = vunpack.c.l.b16 %v475
      %v2044 = vunpack.c.h.b16 %v475
      %v2045 = vunpack.c.l.b16 %v476
      %v2046 = vunpack.c.h.b16 %v476
      %v2047 = vunpack.c.l.b16 %v477
      %v2048 = vunpack.c.h.b16 %v477
      %v2049 = vunpack.c.l.b16 %v478
      %v2050 = vunpack.c.h.b16 %v478
      %v2051 = vunpack.c.l.b16 %v479
      %v2052 = vunpack.c.h.b16 %v479
      %v2053 = vunpack.c.l.b16 %v480
      %v2054 = vunpack.c.h.b16 %v480
      %v2055 = vunpack.c.l.b16 %v481
      %v2056 = vunpack.c.h.b16 %v481
      %v2057 = vunpack.c.l.b16 %v482
      %v2058 = vunpack.c.h.b16 %v482
      %v2059 = vunpack.c.l.b16 %v483
      %v2060 = vunpack.c.h.b16 %v483
      %v2061 = vunpack.c.l.b16 %v484
      %v2062 = vunpack.c.h.b16 %v484
      %v2063 = vunpack.c.l.b16 %v485
      %v2064 = vunpack.c.h.b16 %v485
      %v2065 = vunpack.c.l.b16 %v486
      %v2066 = vunpack.c.h.b16 %v486
      %v2067 = vunpack.c.l.b16 %v487
      %v2068 = vunpack.c.h.b16 %v487
      %v2069 = vunpack.c.l.b16 %v488
      %v2070 = vunpack.c.h.b16 %v488
      %v2071 = vunpack.c.l.b16 %v489
      %v2072 = vunpack.c.h.b16 %v489
      %v2073 = vunpack.c.l.b16 %v490
      %v2074 = vunpack.c.h.b16 %v490
      %v2075 = vunpack.c.l.b16 %v491
      %v2076 = vunpack.c.h.b16 %v491
      %v2077 = vunpack.c.l.b16 %v492
      %v2078 = vunpack.c.h.b16 %v492
      %v2079 = vunpack.c.l.b16 %v493
      %v2080 = vunpack.c.h.b16 %v493
      %v2081 = vunpack.c.l.b16 %v494
      %v2082 = vunpack.c.h.b16 %v494
      %v2083 = vunpack.c.l.b16 %v495
      %v2084 = vunpack.c.h.b16 %v495
      %v2085 = vunpack.c.l.b16 %v496
      %v2086 = vunpack.c.h.b16 %v496
      %v2087 = vunpack.c.l.b16 %v497
      %v2088 = vunpack.c.h.b16 %v497
      %v2089 = vpack.c.b16 %v1579, %v1577
      %v2090 = vpack.c.b16 %v1580, %v1578
      %v2091 = vpack.c.b16 %v1583, %v1581
      %v2092 = vpack.c.b16 %v1584, %v1582
      %v2093 = vpack.c.b16 %v1587, %v1585
      %v2094 = vpack.c.b16 %v1588, %v1586
      %v2095 = vpack.c.b16 %v1591, %v1589
      %v2096 = vpack.c.b16 %v1592, %v1590
      %v2097 = vpack.c.b16 %v1595, %v1593
      %v2098 = vpack.c.b16 %v1596, %v1594
      %v2099 = vpack.c.b16 %v1599, %v1597
      %v2100 = vpack.c.b16 %v1600, %v1598
      %v2101 = vpack.c.b16 %v1603, %v1601
      %v2102 = vpack.c.b16 %v1604, %v1602
      %v2103 = vpack.c.b16 %v1607, %v1605
      %v2104 = vpack.c.b16 %v1608, %v1606
      %v2105 = vpack.c.b16 %v1611, %v1609
      %v2106 = vpack.c.b16 %v1612, %v1610
      %v2107 = vpack.c.b16 %v1615, %v1613
      %v2108 = vpack.c.b16 %v1616, %v1614
      %v2109 = vpack.c.b16 %v1619, %v1617
      %v2110 = vpack.c.b16 %v1620, %v1618
      %v2111 = vpack.c.b16 %v1623, %v1621
      %v2112 = vpack.c.b16 %v1624, %v1622
      %v2113 = vpack.c.b16 %v1627, %v1625
      %v2114 = vpack.c.b16 %v1628, %v1626
      %v2115 = vpack.c.b16 %v1631, %v1629
      %v2116 = vpack.c.b16 %v1632, %v1630
      %v2117 = vpack.c.b16 %v1635, %v1633
      %v2118 = vpack.c.b16 %v1636, %v1634
      %v2119 = vpack.c.b16 %v1639, %v1637
      %v2120 = vpack.c.b16 %v1640, %v1638
      %v2121 = vpack.c.b16 %v1643, %v1641
      %v2122 = vpack.c.b16 %v1644, %v1642
      %v2123 = vpack.c.b16 %v1647, %v1645
      %v2124 = vpack.c.b16 %v1648, %v1646
      %v2125 = vpack.c.b16 %v1651, %v1649
      %v2126 = vpack.c.b16 %v1652, %v1650
      %v2127 = vpack.c.b16 %v1655, %v1653
      %v2128 = vpack.c.b16 %v1656, %v1654
      %v2129 = vpack.c.b16 %v1659, %v1657
      %v2130 = vpack.c.b16 %v1660, %v1658
      %v2131 = vpack.c.b16 %v1663, %v1661
      %v2132 = vpack.c.b16 %v1664, %v1662
      %v2133 = vpack.c.b16 %v1667, %v1665
      %v2134 = vpack.c.b16 %v1668, %v1666
      %v2135 = vpack.c.b16 %v1671, %v1669
      %v2136 = vpack.c.b16 %v1672, %v1670
      %v2137 = vpack.c.b16 %v1675, %v1673
      %v2138 = vpack.c.b16 %v1676, %v1674
      %v2139 = vpack.c.b16 %v1679, %v1677
      %v2140 = vpack.c.b16 %v1680, %v1678
      %v2141 = vpack.c.b16 %v1683, %v1681
      %v2142 = vpack.c.b16 %v1684, %v1682
      %v2143 = vpack.c.b16 %v1687, %v1685
      %v2144 = vpack.c.b16 %v1688, %v1686
      %v2145 = vpack.c.b16 %v1691, %v1689
      %v2146 = vpack.c.b16 %v1692, %v1690
      %v2147 = vpack.c.b16 %v1695, %v1693
      %v2148 = vpack.c.b16 %v1696, %v1694
      %v2149 = vpack.c.b16 %v1699, %v1697
      %v2150 = vpack.c.b16 %v1700, %v1698
      %v2151 = vpack.c.b16 %v1703, %v1701
      %v2152 = vpack.c.b16 %v1704, %v1702
      %v2153 = vpack.c.b16 %v1707, %v1705
      %v2154 = vpack.c.b16 %v1708, %v1706
      %v2155 = vpack.c.b16 %v1711, %v1709
      %v2156 = vpack.c.b16 %v1712, %v1710
      %v2157 = vpack.c.b16 %v1715, %v1713
      %v2158 = vpack.c.b16 %v1716, %v1714
      %v2159 = vpack.c.b16 %v1719, %v1717
      %v2160 = vpack.c.b16 %v1720, %v1718
      %v2161 = vpack.c.b16 %v1723, %v1721
      %v2162 = vpack.c.b16 %v1724, %v1722
      %v2163 = vpack.c.b16 %v1727, %v1725
      %v2164 = vpack.c.b16 %v1728, %v1726
      %v2165 = vpack.c.b16 %v1731, %v1729
      %v2166 = vpack.c.b16 %v1732, %v1730
      %v2167 = vpack.c.b16 %v1735, %v1733
      %v2168 = vpack.c.b16 %v1736, %v1734
      %v2169 = vpack.c.b16 %v1739, %v1737
      %v2170 = vpack.c.b16 %v1740, %v1738
      %v2171 = vpack.c.b16 %v1743, %v1741
      %v2172 = vpack.c.b16 %v1744, %v1742
      %v2173 = vpack.c.b16 %v1747, %v1745
      %v2174 = vpack.c.b16 %v1748, %v1746
      %v2175 = vpack.c.b16 %v1751, %v1749
      %v2176 = vpack.c.b16 %v1752, %v1750
      %v2177 = vpack.c.b16 %v1755, %v1753
      %v2178 = vpack.c.b16 %v1756, %v1754
      %v2179 = vpack.c.b16 %v1759, %v1757
      %v2180 = vpack.c.b16 %v1760, %v1758
      %v2181 = vpack.c.b16 %v1763, %v1761
      %v2182 = vpack.c.b16 %v1764, %v1762
      %v2183 = vpack.c.b16 %v1767, %v1765
      %v2184 = vpack.c.b16 %v1768, %v1766
      %v2185 = vpack.c.b16 %v1771, %v1769
      %v2186 = vpack.c.b16 %v1772, %v1770
      %v2187 = vpack.c.b16 %v1775, %v1773
      %v2188 = vpack.c.b16 %v1776, %v1774
      %v2189 = vpack.c.b16 %v1779, %v1777
      %v2190 = vpack.c.b16 %v1780, %v1778
      %v2191 = vpack.c.b16 %v1783, %v1781
      %v2192 = vpack.c.b16 %v1784, %v1782
      %v2193 = vpack.c.b16 %v1787, %v1785
      %v2194 = vpack.c.b16 %v1788, %v1786
      %v2195 = vpack.c.b16 %v1791, %v1789
      %v2196 = vpack.c.b16 %v1792, %v1790
      %v2197 = vpack.c.b16 %v1795, %v1793
      %v2198 = vpack.c.b16 %v1796, %v1794
      %v2199 = vpack.c.b16 %v1799, %v1797
      %v2200 = vpack.c.b16 %v1800, %v1798
      %v2201 = vpack.c.b16 %v1803, %v1801
      %v2202 = vpack.c.b16 %v1804, %v1802
      %v2203 = vpack.c.b16 %v1807, %v1805
      %v2204 = vpack.c.b16 %v1808, %v1806
      %v2205 = vpack.c.b16 %v1811, %v1809
      %v2206 = vpack.c.b16 %v1812, %v1810
      %v2207 = vpack.c.b16 %v1815, %v1813
      %v2208 = vpack.c.b16 %v1816, %v1814
      %v2209 = vpack.c.b16 %v1819, %v1817
      %v2210 = vpack.c.b16 %v1820, %v1818
      %v2211 = vpack.c.b16 %v1823, %v1821
      %v2212 = vpack.c.b16 %v1824, %v1822
      %v2213 = vpack.c.b16 %v1827, %v1825
      %v2214 = vpack.c.b16 %v1828, %v1826
      %v2215 = vpack.c.b16 %v1831, %v1829
      %v2216 = vpack.c.b16 %v1832, %v1830
      %v2217 = vpack.c.b16 %v1835, %v1833
      %v2218 = vpack.c.b16 %v1836, %v1834
      %v2219 = vpack.c.b16 %v1839, %v1837
      %v2220 = vpack.c.b16 %v1840, %v1838
      %v2221 = vpack.c.b16 %v1843, %v1841
      %v2222 = vpack.c.b16 %v1844, %v1842
      %v2223 = vpack.c.b16 %v1847, %v1845
      %v2224 = vpack.c.b16 %v1848, %v1846
      %v2225 = vpack.c.b16 %v1851, %v1849
      %v2226 = vpack.c.b16 %v1852, %v1850
      %v2227 = vpack.c.b16 %v1855, %v1853
      %v2228 = vpack.c.b16 %v1856, %v1854
      %v2229 = vpack.c.b16 %v1859, %v1857
      %v2230 = vpack.c.b16 %v1860, %v1858
      %v2231 = vpack.c.b16 %v1863, %v1861
      %v2232 = vpack.c.b16 %v1864, %v1862
      %v2233 = vpack.c.b16 %v1867, %v1865
      %v2234 = vpack.c.b16 %v1868, %v1866
      %v2235 = vpack.c.b16 %v1871, %v1869
      %v2236 = vpack.c.b16 %v1872, %v1870
      %v2237 = vpack.c.b16 %v1875, %v1873
      %v2238 = vpack.c.b16 %v1876, %v1874
      %v2239 = vpack.c.b16 %v1879, %v1877
      %v2240 = vpack.c.b16 %v1880, %v1878
      %v2241 = vpack.c.b16 %v1883, %v1881
      %v2242 = vpack.c.b16 %v1884, %v1882
      %v2243 = vpack.c.b16 %v1887, %v1885
      %v2244 = vpack.c.b16 %v1888, %v1886
      %v2245 = vpack.c.b16 %v1891, %v1889
      %v2246 = vpack.c.b16 %v1892, %v1890
      %v2247 = vpack.c.b16 %v1895, %v1893
      %v2248 = vpack.c.b16 %v1896, %v1894
      %v2249 = vpack.c.b16 %v1899, %v1897
      %v2250 = vpack.c.b16 %v1900, %v1898
      %v2251 = vpack.c.b16 %v1903, %v1901
      %v2252 = vpack.c.b16 %v1904, %v1902
      %v2253 = vpack.c.b16 %v1907, %v1905
      %v2254 = vpack.c.b16 %v1908, %v1906
      %v2255 = vpack.c.b16 %v1911, %v1909
      %v2256 = vpack.c.b16 %v1912, %v1910
      %v2257 = vpack.c.b16 %v1915, %v1913
      %v2258 = vpack.c.b16 %v1916, %v1914
      %v2259 = vpack.c.b16 %v1919, %v1917
      %v2260 = vpack.c.b16 %v1920, %v1918
      %v2261 = vpack.c.b16 %v1923, %v1921
      %v2262 = vpack.c.b16 %v1924, %v1922
      %v2263 = vpack.c.b16 %v1927, %v1925
      %v2264 = vpack.c.b16 %v1928, %v1926
      %v2265 = vpack.c.b16 %v1931, %v1929
      %v2266 = vpack.c.b16 %v1932, %v1930
      %v2267 = vpack.c.b16 %v1935, %v1933
      %v2268 = vpack.c.b16 %v1936, %v1934
      %v2269 = vpack.c.b16 %v1939, %v1937
      %v2270 = vpack.c.b16 %v1940, %v1938
      %v2271 = vpack.c.b16 %v1943, %v1941
      %v2272 = vpack.c.b16 %v1944, %v1942
      %v2273 = vpack.c.b16 %v1947, %v1945
      %v2274 = vpack.c.b16 %v1948, %v1946
      %v2275 = vpack.c.b16 %v1951, %v1949
      %v2276 = vpack.c.b16 %v1952, %v1950
      %v2277 = vpack.c.b16 %v1955, %v1953
      %v2278 = vpack.c.b16 %v1956, %v1954
      %v2279 = vpack.c.b16 %v1959, %v1957
      %v2280 = vpack.c.b16 %v1960, %v1958
      %v2281 = vpack.c.b16 %v1963, %v1961
      %v2282 = vpack.c.b16 %v1964, %v1962
      %v2283 = vpack.c.b16 %v1967, %v1965
      %v2284 = vpack.c.b16 %v1968, %v1966
      %v2285 = vpack.c.b16 %v1971, %v1969
      %v2286 = vpack.c.b16 %v1972, %v1970
      %v2287 = vpack.c.b16 %v1975, %v1973
      %v2288 = vpack.c.b16 %v1976, %v1974
      %v2289 = vpack.c.b16 %v1979, %v1977
      %v2290 = vpack.c.b16 %v1980, %v1978
      %v2291 = vpack.c.b16 %v1983, %v1981
      %v2292 = vpack.c.b16 %v1984, %v1982
      %v2293 = vpack.c.b16 %v1987, %v1985
      %v2294 = vpack.c.b16 %v1988, %v1986
      %v2295 = vpack.c.b16 %v1991, %v1989
      %v2296 = vpack.c.b16 %v1992, %v1990
      %v2297 = vpack.c.b16 %v1995, %v1993
      %v2298 = vpack.c.b16 %v1996, %v1994
      %v2299 = vpack.c.b16 %v1999, %v1997
      %v2300 = vpack.c.b16 %v2000, %v1998
      %v2301 = vpack.c.b16 %v2003, %v2001
      %v2302 = vpack.c.b16 %v2004, %v2002
      %v2303 = vpack.c.b16 %v2007, %v2005
      %v2304 = vpack.c.b16 %v2008, %v2006
      %v2305 = vpack.c.b16 %v2011, %v2009
      %v2306 = vpack.c.b16 %v2012, %v2010
      %v2307 = vpack.c.b16 %v2015, %v2013
      %v2308 = vpack.c.b16 %v2016, %v2014
      %v2309 = vpack.c.b16 %v2019, %v2017
      %v2310 = vpack.c.b16 %v2020, %v2018
      %v2311 = vpack.c.b16 %v2023, %v2021
      %v2312 = vpack.c.b16 %v2024, %v2022
      %v2313 = vpack.c.b16 %v2027, %v2025
      %v2314 = vpack.c.b16 %v2028, %v2026
      %v2315 = vpack.c.b16 %v2031, %v2029
      %v2316 = vpack.c.b16 %v2032, %v2030
      %v2317 = vpack.c.b16 %v2035, %v2033
      %v2318 = vpack.c.b16 %v2036, %v2034
      %v2319 = vpack.c.b16 %v2039, %v2037
      %v2320 = vpack.c.b16 %v2040, %v2038
      %v2321 = vpack.c.b16 %v2043, %v2041
      %v2322 = vpack.c.b16 %v2044, %v2042
      %v2323 = vpack.c.b16 %v2047, %v2045
      %v2324 = vpack.c.b16 %v2048, %v2046
      %v2325 = vpack.c.b16 %v2051, %v2049
      %v2326 = vpack.c.b16 %v2052, %v2050
      %v2327 = vpack.c.b16 %v2055, %v2053
      %v2328 = vpack.c.b16 %v2056, %v2054
      %v2329 = vpack.c.b16 %v2059, %v2057
      %v2330 = vpack.c.b16 %v2060, %v2058
      %v2331 = vpack.c.b16 %v2063, %v2061
      %v2332 = vpack.c.b16 %v2064, %v2062
      %v2333 = vpack.c.b16 %v2067, %v2065
      %v2334 = vpack.c.b16 %v2068, %v2066
      %v2335 = vpack.c.b16 %v2071, %v2069
      %v2336 = vpack.c.b16 %v2072, %v2070
      %v2337 = vpack.c.b16 %v2075, %v2073
      %v2338 = vpack.c.b16 %v2076, %v2074
      %v2339 = vpack.c.b16 %v2079, %v2077
      %v2340 = vpack.c.b16 %v2080, %v2078
      %v2341 = vpack.c.b16 %v2083, %v2081
      %v2342 = vpack.c.b16 %v2084, %v2082
      %v2343 = vpack.c.b16 %v2087, %v2085
      %v2344 = vpack.c.b16 %v2088, %v2086
      %2601 = vmatprep.subr.bf16.mxu0 %v2090
      %2602 = vmatpush1.bf16.msra.mxu0 %v2089
      %2603 = vmatprep.subr.bf16.mxu0 %v2092
      %2604 = vmatpush1.bf16.msra.mxu0 %v2091
      %2605 = vmatprep.subr.bf16.mxu0 %v2094
      %2606 = vmatpush1.bf16.msra.mxu0 %v2093
      %2607 = vmatprep.subr.bf16.mxu0 %v2096
      %2608 = vmatpush1.bf16.msra.mxu0 %v2095
      %2609 = vmatprep.subr.bf16.mxu0 %v2098
      %2610 = vmatpush1.bf16.msra.mxu0 %v2097
      %2611 = vmatprep.subr.bf16.mxu0 %v2100
      %2612 = vmatpush1.bf16.msra.mxu0 %v2099
      %2613 = vmatprep.subr.bf16.mxu0 %v2102
      %2614 = vmatpush1.bf16.msra.mxu0 %v2101
      %2615 = vmatprep.subr.bf16.mxu0 %v2104
      %2616 = vmatpush1.bf16.msra.mxu0 %v2103
      %2617 = vmatprep.subr.bf16.mxu0 %v2106
      %2618 = vmatpush1.bf16.msra.mxu0 %v2105
      %2619 = vmatprep.subr.bf16.mxu0 %v2108
      %2620 = vmatpush1.bf16.msra.mxu0 %v2107
      %2621 = vmatprep.subr.bf16.mxu0 %v2110
      %2622 = vmatpush1.bf16.msra.mxu0 %v2109
      %2623 = vmatprep.subr.bf16.mxu0 %v2112
      %2624 = vmatpush1.bf16.msra.mxu0 %v2111
      %2625 = vmatprep.subr.bf16.mxu0 %v2114
      %2626 = vmatpush1.bf16.msra.mxu0 %v2113
      %2627 = vmatprep.subr.bf16.mxu0 %v2116
      %2628 = vmatpush1.bf16.msra.mxu0 %v2115
      %2629 = vmatprep.subr.bf16.mxu0 %v2118
      %2630 = vmatpush1.bf16.msra.mxu0 %v2117
      %2631 = vmatprep.subr.bf16.mxu0 %v2120
      %2632 = vmatpush1.bf16.msra.mxu0 %v2119
      %2633 = vmatprep.mubr.bf16.mxu0 %v957
      %2634 = vmatmul.mubr.bf16.gmra.mrb[0].mxu0 %v956
      %v2635 = vpop.f32.mrb[0].mxu0
      %v2636 = vadd.f32 0.0, %v2635
      %v2637 = vpop.f32.mrb[0].mxu0
      %v2638 = vadd.f32 0.0, %v2637
      %v2639 = vpop.f32.mrb[0].mxu0
      %v2640 = vadd.f32 0.0, %v2639
      %v2641 = vpop.f32.mrb[0].mxu0
      %v2642 = vadd.f32 0.0, %v2641
      %2643 = vmatprep.mubr.bf16.mxu0 %v961
      %2644 = vmatmul.mubr.bf16.gmra.mrb[0].mxu0 %v960
      %v2645 = vpop.f32.mrb[0].mxu0
      %v2646 = vadd.f32 0.0, %v2645
      %v2647 = vpop.f32.mrb[0].mxu0
      %v2648 = vadd.f32 0.0, %v2647
      %v2649 = vpop.f32.mrb[0].mxu0
      %v2650 = vadd.f32 0.0, %v2649
      %v2651 = vpop.f32.mrb[0].mxu0
      %v2652 = vadd.f32 0.0, %v2651
      %2653 = vmatprep.mubr.bf16.mxu0 %v965
      %2654 = vmatmul.mubr.bf16.gmra.mrb[0].mxu0 %v964
      %v2655 = vpop.f32.mrb[0].mxu0
      %v2656 = vadd.f32 0.0, %v2655
      %v2657 = vpop.f32.mrb[0].mxu0
      %v2658 = vadd.f32 0.0, %v2657
      %v2659 = vpop.f32.mrb[0].mxu0
      %v2660 = vadd.f32 0.0, %v2659
      %v2661 = vpop.f32.mrb[0].mxu0
      %v2662 = vadd.f32 0.0, %v2661
      %2663 = vmatprep.mubr.bf16.mxu0 %v969
      %2664 = vmatmul.mubr.bf16.gmra.mrb[0].mxu0 %v968
      %v2665 = vpop.f32.mrb[0].mxu0
      %v2666 = vadd.f32 0.0, %v2665
      %v2667 = vpop.f32.mrb[0].mxu0
      %v2668 = vadd.f32 0.0, %v2667
      %v2669 = vpop.f32.mrb[0].mxu0
      %v2670 = vpop.f32.mrb[0].mxu0
      %2671 = vdwg.mxu0
      %2672 = vmatprep.subr.bf16.mxu0 %v2122
      %2673 = vmatpush1.bf16.msra.mxu0 %v2121
      %2674 = vmatprep.subr.bf16.mxu0 %v2124
      %2675 = vmatpush1.bf16.msra.mxu0 %v2123
      %2676 = vmatprep.subr.bf16.mxu0 %v2126
      %2677 = vmatpush1.bf16.msra.mxu0 %v2125
      %2678 = vmatprep.subr.bf16.mxu0 %v2128
      %2679 = vmatpush1.bf16.msra.mxu0 %v2127
      %2680 = vmatprep.subr.bf16.mxu0 %v2130
      %2681 = vmatpush1.bf16.msra.mxu0 %v2129
      %2682 = vmatprep.subr.bf16.mxu0 %v2132
      %2683 = vmatpush1.bf16.msra.mxu0 %v2131
      %2684 = vmatprep.subr.bf16.mxu0 %v2134
      %2685 = vmatpush1.bf16.msra.mxu0 %v2133
      %2686 = vmatprep.subr.bf16.mxu0 %v2136
      %2687 = vmatpush1.bf16.msra.mxu0 %v2135
      %2688 = vmatprep.subr.bf16.mxu0 %v2138
      %2689 = vmatpush1.bf16.msra.mxu0 %v2137
      %2690 = vmatprep.subr.bf16.mxu0 %v2140
      %2691 = vmatpush1.bf16.msra.mxu0 %v2139
      %2692 = vmatprep.subr.bf16.mxu0 %v2142
      %2693 = vmatpush1.bf16.msra.mxu0 %v2141
      %2694 = vmatprep.subr.bf16.mxu0 %v2144
      %2695 = vmatpush1.bf16.msra.mxu0 %v2143
      %2696 = vmatprep.subr.bf16.mxu0 %v2146
      %2697 = vmatpush1.bf16.msra.mxu0 %v2145
      %2698 = vmatprep.subr.bf16.mxu0 %v2148
      %2699 = vmatpush1.bf16.msra.mxu0 %v2147
      %2700 = vmatprep.subr.bf16.mxu0 %v2150
      %2701 = vmatpush1.bf16.msra.mxu0 %v2149
      %2702 = vmatprep.subr.bf16.mxu0 %v2152
      %2703 = vmatpush1.bf16.msra.mxu0 %v2151
      %2704 = vmatprep.mubr.bf16.mxu0 %v959
      %2705 = vmatmul.mubr.bf16.gmra.mrb[0].mxu0 %v958
      %v2706 = vpop.f32.mrb[0].mxu0
      %v2707 = vadd.f32 %v2636, %v2706
      %v2708 = vpop.f32.mrb[0].mxu0
      %v2709 = vadd.f32 %v2638, %v2708
      %v2710 = vpop.f32.mrb[0].mxu0
      %v2711 = vadd.f32 %v2640, %v2710
      %v2712 = vpop.f32.mrb[0].mxu0
      %v2713 = vadd.f32 %v2642, %v2712
      %2714 = vmatprep.mubr.bf16.mxu0 %v963
      %2715 = vmatmul.mubr.bf16.gmra.mrb[0].mxu0 %v962
      %v2716 = vpop.f32.mrb[0].mxu0
      %v2717 = vadd.f32 %v2646, %v2716
      %v2718 = vpop.f32.mrb[0].mxu0
      %v2719 = vadd.f32 %v2648, %v2718
      %v2720 = vpop.f32.mrb[0].mxu0
      %v2721 = vadd.f32 %v2650, %v2720
      %v2722 = vpop.f32.mrb[0].mxu0
      %v2723 = vadd.f32 %v2652, %v2722
      %2724 = vmatprep.mubr.bf16.mxu0 %v967
      %2725 = vmatmul.mubr.bf16.gmra.mrb[0].mxu0 %v966
      %v2726 = vpop.f32.mrb[0].mxu0
      %v2727 = vadd.f32 %v2656, %v2726
      %v2728 = vpop.f32.mrb[0].mxu0
      %v2729 = vadd.f32 %v2658, %v2728
      %v2730 = vpop.f32.mrb[0].mxu0
      %v2731 = vadd.f32 %v2660, %v2730
      %v2732 = vpop.f32.mrb[0].mxu0
      %v2733 = vadd.f32 %v2662, %v2732
      %2734 = vmatprep.mubr.bf16.mxu0 %v971
      %2735 = vmatmul.mubr.bf16.gmra.mrb[0].mxu0 %v970
      %v2736 = vpop.f32.mrb[0].mxu0
      %v2737 = vadd.f32 %v2666, %v2736
      %v2738 = vpop.f32.mrb[0].mxu0
      %v2739 = vadd.f32 %v2668, %v2738
      %v2740 = vpop.f32.mrb[0].mxu0
      %v2741 = vpop.f32.mrb[0].mxu0
      %2742 = vdwg.mxu0
      %2743 = vmatprep.subr.bf16.mxu0 %v2154
      %2744 = vmatpush1.bf16.msra.mxu0 %v2153
      %2745 = vmatprep.subr.bf16.mxu0 %v2156
      %2746 = vmatpush1.bf16.msra.mxu0 %v2155
      %2747 = vmatprep.subr.bf16.mxu0 %v2158
      %2748 = vmatpush1.bf16.msra.mxu0 %v2157
      %2749 = vmatprep.subr.bf16.mxu0 %v2160
      %2750 = vmatpush1.bf16.msra.mxu0 %v2159
      %2751 = vmatprep.subr.bf16.mxu0 %v2162
      %2752 = vmatpush1.bf16.msra.mxu0 %v2161
      %2753 = vmatprep.subr.bf16.mxu0 %v2164
      %2754 = vmatpush1.bf16.msra.mxu0 %v2163
      %2755 = vmatprep.subr.bf16.mxu0 %v2166
      %2756 = vmatpush1.bf16.msra.mxu0 %v2165
      %2757 = vmatprep.subr.bf16.mxu0 %v2168
      %2758 = vmatpush1.bf16.msra.mxu0 %v2167
      %2759 = vmatprep.subr.bf16.mxu0 %v2170
      %2760 = vmatpush1.bf16.msra.mxu0 %v2169
      %2761 = vmatprep.subr.bf16.mxu0 %v2172
      %2762 = vmatpush1.bf16.msra.mxu0 %v2171
      %2763 = vmatprep.subr.bf16.mxu0 %v2174
      %2764 = vmatpush1.bf16.msra.mxu0 %v2173
      %2765 = vmatprep.subr.bf16.mxu0 %v2176
      %2766 = vmatpush1.bf16.msra.mxu0 %v2175
      %2767 = vmatprep.subr.bf16.mxu0 %v2178
      %2768 = vmatpush1.bf16.msra.mxu0 %v2177
      %2769 = vmatprep.subr.bf16.mxu0 %v2180
      %2770 = vmatpush1.bf16.msra.mxu0 %v2179
      %2771 = vmatprep.subr.bf16.mxu0 %v2182
      %2772 = vmatpush1.bf16.msra.mxu0 %v2181
      %2773 = vmatprep.subr.bf16.mxu0 %v2184
      %2774 = vmatpush1.bf16.msra.mxu0 %v2183
      %2775 = vmatprep.mubr.bf16.mxu0 %v1022
      %2776 = vmatmul.mubr.bf16.gmra.mrb[0].mxu0 %v1010
      %v2777 = vpop.f32.mrb[0].mxu0
      %v2778 = vadd.f32 %v2707, %v2777
      %v2779 = vpop.f32.mrb[0].mxu0
      %v2780 = vadd.f32 %v2709, %v2779
      %v2781 = vpop.f32.mrb[0].mxu0
      %v2782 = vadd.f32 %v2711, %v2781
      %v2783 = vpop.f32.mrb[0].mxu0
      %v2784 = vadd.f32 %v2713, %v2783
      %2785 = vmatprep.mubr.bf16.mxu0 %v1062
      %2786 = vmatmul.mubr.bf16.gmra.mrb[0].mxu0 %v1054
      %v2787 = vpop.f32.mrb[0].mxu0
      %v2788 = vadd.f32 %v2717, %v2787
      %v2789 = vpop.f32.mrb[0].mxu0
      %v2790 = vadd.f32 %v2719, %v2789
      %v2791 = vpop.f32.mrb[0].mxu0
      %v2792 = vadd.f32 %v2721, %v2791
      %v2793 = vpop.f32.mrb[0].mxu0
      %v2794 = vadd.f32 %v2723, %v2793
      %2795 = vmatprep.mubr.bf16.mxu0 %v1094
      %2796 = vmatmul.mubr.bf16.gmra.mrb[0].mxu0 %v1086
      %v2797 = vpop.f32.mrb[0].mxu0
      %v2798 = vadd.f32 %v2727, %v2797
      %v2799 = vpop.f32.mrb[0].mxu0
      %v2800 = vadd.f32 %v2729, %v2799
      %v2801 = vpop.f32.mrb[0].mxu0
      %v2802 = vadd.f32 %v2731, %v2801
      %v2803 = vpop.f32.mrb[0].mxu0
      %v2804 = vadd.f32 %v2733, %v2803
      %2805 = vmatprep.mubr.bf16.mxu0 %v1116
      %2806 = vmatmul.mubr.bf16.gmra.mrb[0].mxu0 %v1113
      %v2807 = vpop.f32.mrb[0].mxu0
      %v2808 = vadd.f32 %v2737, %v2807
      %v2809 = vpop.f32.mrb[0].mxu0
      %v2810 = vadd.f32 %v2739, %v2809
      %v2811 = vpop.f32.mrb[0].mxu0
      %v2812 = vpop.f32.mrb[0].mxu0
      %2813 = vdwg.mxu0
      %2814 = vmatprep.subr.bf16.mxu0 %v2186
      %2815 = vmatpush1.bf16.msra.mxu0 %v2185
      %2816 = vmatprep.subr.bf16.mxu0 %v2188
      %2817 = vmatpush1.bf16.msra.mxu0 %v2187
      %2818 = vmatprep.subr.bf16.mxu0 %v2190
      %2819 = vmatpush1.bf16.msra.mxu0 %v2189
      %2820 = vmatprep.subr.bf16.mxu0 %v2192
      %2821 = vmatpush1.bf16.msra.mxu0 %v2191
      %2822 = vmatprep.subr.bf16.mxu0 %v2194
      %2823 = vmatpush1.bf16.msra.mxu0 %v2193
      %2824 = vmatprep.subr.bf16.mxu0 %v2196
      %2825 = vmatpush1.bf16.msra.mxu0 %v2195
      %2826 = vmatprep.subr.bf16.mxu0 %v2198
      %2827 = vmatpush1.bf16.msra.mxu0 %v2197
      %2828 = vmatprep.subr.bf16.mxu0 %v2200
      %2829 = vmatpush1.bf16.msra.mxu0 %v2199
      %2830 = vmatprep.subr.bf16.mxu0 %v2202
      %2831 = vmatpush1.bf16.msra.mxu0 %v2201
      %2832 = vmatprep.subr.bf16.mxu0 %v2204
      %2833 = vmatpush1.bf16.msra.mxu0 %v2203
      %2834 = vmatprep.subr.bf16.mxu0 %v2206
      %2835 = vmatpush1.bf16.msra.mxu0 %v2205
      %2836 = vmatprep.subr.bf16.mxu0 %v2208
      %2837 = vmatpush1.bf16.msra.mxu0 %v2207
      %2838 = vmatprep.subr.bf16.mxu0 %v2210
      %2839 = vmatpush1.bf16.msra.mxu0 %v2209
      %2840 = vmatprep.subr.bf16.mxu0 %v2212
      %2841 = vmatpush1.bf16.msra.mxu0 %v2211
      %2842 = vmatprep.subr.bf16.mxu0 %v2214
      %2843 = vmatpush1.bf16.msra.mxu0 %v2213
      %2844 = vmatprep.subr.bf16.mxu0 %v2216
      %2845 = vmatpush1.bf16.msra.mxu0 %v2215
      %2846 = vmatprep.mubr.bf16.mxu0 %v1046
      %2847 = vmatmul.mubr.bf16.gmra.mrb[0].mxu0 %v1034
      %v2848 = vpop.f32.mrb[0].mxu0
      %v2849 = vadd.f32 %v2778, %v2848
      %v2850 = vpop.f32.mrb[0].mxu0
      %v2851 = vadd.f32 %v2780, %v2850
      %v2852 = vpop.f32.mrb[0].mxu0
      %v2853 = vadd.f32 %v2782, %v2852
      %v2854 = vpop.f32.mrb[0].mxu0
      %v2855 = vadd.f32 %v2784, %v2854
      %2856 = vmatprep.mubr.bf16.mxu0 %v1078
      %2857 = vmatmul.mubr.bf16.gmra.mrb[0].mxu0 %v1070
      %v2858 = vpop.f32.mrb[0].mxu0
      %v2859 = vadd.f32 %v2788, %v2858
      %v2860 = vpop.f32.mrb[0].mxu0
      %v2861 = vadd.f32 %v2790, %v2860
      %v2862 = vpop.f32.mrb[0].mxu0
      %v2863 = vadd.f32 %v2792, %v2862
      %v2864 = vpop.f32.mrb[0].mxu0
      %v2865 = vadd.f32 %v2794, %v2864
      %2866 = vmatprep.mubr.bf16.mxu0 %v1110
      %2867 = vmatmul.mubr.bf16.gmra.mrb[0].mxu0 %v1102
      %v2868 = vpop.f32.mrb[0].mxu0
      %v2869 = vadd.f32 %v2798, %v2868
      %v2870 = vpop.f32.mrb[0].mxu0
      %v2871 = vadd.f32 %v2800, %v2870
      %v2872 = vpop.f32.mrb[0].mxu0
      %v2873 = vadd.f32 %v2802, %v2872
      %v2874 = vpop.f32.mrb[0].mxu0
      %v2875 = vadd.f32 %v2804, %v2874
      %2876 = vmatprep.mubr.bf16.mxu0 %v1122
      %2877 = vmatmul.mubr.bf16.gmra.mrb[0].mxu0 %v1119
      %v2878 = vpop.f32.mrb[0].mxu0
      %v2879 = vadd.f32 %v2808, %v2878
      %v2880 = vpop.f32.mrb[0].mxu0
      %v2881 = vadd.f32 %v2810, %v2880
      %v2882 = vpop.f32.mrb[0].mxu0
      %v2883 = vpop.f32.mrb[0].mxu0
      %2884 = vdwg.mxu0
      %2885 = vmatprep.subr.bf16.mxu0 %v2218
      %2886 = vmatpush1.bf16.msra.mxu0 %v2217
      %2887 = vmatprep.subr.bf16.mxu0 %v2220
      %2888 = vmatpush1.bf16.msra.mxu0 %v2219
      %2889 = vmatprep.subr.bf16.mxu0 %v2222
      %2890 = vmatpush1.bf16.msra.mxu0 %v2221
      %2891 = vmatprep.subr.bf16.mxu0 %v2224
      %2892 = vmatpush1.bf16.msra.mxu0 %v2223
      %2893 = vmatprep.subr.bf16.mxu0 %v2226
      %2894 = vmatpush1.bf16.msra.mxu0 %v2225
      %2895 = vmatprep.subr.bf16.mxu0 %v2228
      %2896 = vmatpush1.bf16.msra.mxu0 %v2227
      %2897 = vmatprep.subr.bf16.mxu0 %v2230
      %2898 = vmatpush1.bf16.msra.mxu0 %v2229
      %2899 = vmatprep.subr.bf16.mxu0 %v2232
      %2900 = vmatpush1.bf16.msra.mxu0 %v2231
      %2901 = vmatprep.subr.bf16.mxu0 %v2234
      %2902 = vmatpush1.bf16.msra.mxu0 %v2233
      %2903 = vmatprep.subr.bf16.mxu0 %v2236
      %2904 = vmatpush1.bf16.msra.mxu0 %v2235
      %2905 = vmatprep.subr.bf16.mxu0 %v2238
      %2906 = vmatpush1.bf16.msra.mxu0 %v2237
      %2907 = vmatprep.subr.bf16.mxu0 %v2240
      %2908 = vmatpush1.bf16.msra.mxu0 %v2239
      %2909 = vmatprep.subr.bf16.mxu0 %v2242
      %2910 = vmatpush1.bf16.msra.mxu0 %v2241
      %2911 = vmatprep.subr.bf16.mxu0 %v2244
      %2912 = vmatpush1.bf16.msra.mxu0 %v2243
      %2913 = vmatprep.subr.bf16.mxu0 %v2246
      %2914 = vmatpush1.bf16.msra.mxu0 %v2245
      %2915 = vmatprep.subr.bf16.mxu0 %v2248
      %2916 = vmatpush1.bf16.msra.mxu0 %v2247
      %2917 = vmatprep.mubr.bf16.mxu0 %v1140
      %2918 = vmatmul.mubr.bf16.gmra.mrb[0].mxu0 %v1139
      %v2919 = vpop.f32.mrb[0].mxu0
      %v2920 = vadd.f32 %v2849, %v2919
      %v2921 = vpop.f32.mrb[0].mxu0
      %v2922 = vadd.f32 %v2851, %v2921
      %v2923 = vpop.f32.mrb[0].mxu0
      %v2924 = vadd.f32 %v2853, %v2923
      %v2925 = vpop.f32.mrb[0].mxu0
      %v2926 = vadd.f32 %v2855, %v2925
      %2927 = vmatprep.mubr.bf16.mxu0 %v1144
      %2928 = vmatmul.mubr.bf16.gmra.mrb[0].mxu0 %v1143
      %v2929 = vpop.f32.mrb[0].mxu0
      %v2930 = vadd.f32 %v2859, %v2929
      %v2931 = vpop.f32.mrb[0].mxu0
      %v2932 = vadd.f32 %v2861, %v2931
      %v2933 = vpop.f32.mrb[0].mxu0
      %v2934 = vadd.f32 %v2863, %v2933
      %v2935 = vpop.f32.mrb[0].mxu0
      %v2936 = vadd.f32 %v2865, %v2935
      %2937 = vmatprep.mubr.bf16.mxu0 %v1148
      %2938 = vmatmul.mubr.bf16.gmra.mrb[0].mxu0 %v1147
      %v2939 = vpop.f32.mrb[0].mxu0
      %v2940 = vadd.f32 %v2869, %v2939
      %v2941 = vpop.f32.mrb[0].mxu0
      %v2942 = vadd.f32 %v2871, %v2941
      %v2943 = vpop.f32.mrb[0].mxu0
      %v2944 = vadd.f32 %v2873, %v2943
      %v2945 = vpop.f32.mrb[0].mxu0
      %v2946 = vadd.f32 %v2875, %v2945
      %2947 = vmatprep.mubr.bf16.mxu0 %v1152
      %2948 = vmatmul.mubr.bf16.gmra.mrb[0].mxu0 %v1151
      %v2949 = vpop.f32.mrb[0].mxu0
      %v2950 = vadd.f32 %v2879, %v2949
      %v2951 = vpop.f32.mrb[0].mxu0
      %v2952 = vadd.f32 %v2881, %v2951
      %v2953 = vpop.f32.mrb[0].mxu0
      %v2954 = vpop.f32.mrb[0].mxu0
      %2955 = vdwg.mxu0
      %2956 = vmatprep.subr.bf16.mxu0 %v2250
      %2957 = vmatpush1.bf16.msra.mxu0 %v2249
      %2958 = vmatprep.subr.bf16.mxu0 %v2252
      %2959 = vmatpush1.bf16.msra.mxu0 %v2251
      %2960 = vmatprep.subr.bf16.mxu0 %v2254
      %2961 = vmatpush1.bf16.msra.mxu0 %v2253
      %2962 = vmatprep.subr.bf16.mxu0 %v2256
      %2963 = vmatpush1.bf16.msra.mxu0 %v2255
      %2964 = vmatprep.subr.bf16.mxu0 %v2258
      %2965 = vmatpush1.bf16.msra.mxu0 %v2257
      %2966 = vmatprep.subr.bf16.mxu0 %v2260
      %2967 = vmatpush1.bf16.msra.mxu0 %v2259
      %2968 = vmatprep.subr.bf16.mxu0 %v2262
      %2969 = vmatpush1.bf16.msra.mxu0 %v2261
      %2970 = vmatprep.subr.bf16.mxu0 %v2264
      %2971 = vmatpush1.bf16.msra.mxu0 %v2263
      %2972 = vmatprep.subr.bf16.mxu0 %v2266
      %2973 = vmatpush1.bf16.msra.mxu0 %v2265
      %2974 = vmatprep.subr.bf16.mxu0 %v2268
      %2975 = vmatpush1.bf16.msra.mxu0 %v2267
      %2976 = vmatprep.subr.bf16.mxu0 %v2270
      %2977 = vmatpush1.bf16.msra.mxu0 %v2269
      %2978 = vmatprep.subr.bf16.mxu0 %v2272
      %2979 = vmatpush1.bf16.msra.mxu0 %v2271
      %2980 = vmatprep.subr.bf16.mxu0 %v2274
      %2981 = vmatpush1.bf16.msra.mxu0 %v2273
      %2982 = vmatprep.subr.bf16.mxu0 %v2276
      %2983 = vmatpush1.bf16.msra.mxu0 %v2275
      %2984 = vmatprep.subr.bf16.mxu0 %v2278
      %2985 = vmatpush1.bf16.msra.mxu0 %v2277
      %2986 = vmatprep.subr.bf16.mxu0 %v2280
      %2987 = vmatpush1.bf16.msra.mxu0 %v2279
      %2988 = vmatprep.mubr.bf16.mxu0 %v1142
      %2989 = vmatmul.mubr.bf16.gmra.mrb[0].mxu0 %v1141
      %v2990 = vpop.f32.mrb[0].mxu0
      %v2991 = vadd.f32 %v2920, %v2990
      %v2992 = vpop.f32.mrb[0].mxu0
      %v2993 = vadd.f32 %v2922, %v2992
      %v2994 = vpop.f32.mrb[0].mxu0
      %v2995 = vadd.f32 %v2924, %v2994
      %v2996 = vpop.f32.mrb[0].mxu0
      %v2997 = vadd.f32 %v2926, %v2996
      %2998 = vmatprep.mubr.bf16.mxu0 %v1146
      %2999 = vmatmul.mubr.bf16.gmra.mrb[0].mxu0 %v1145
      %v3000 = vpop.f32.mrb[0].mxu0
      %v3001 = vadd.f32 %v2930, %v3000
      %v3002 = vpop.f32.mrb[0].mxu0
      %v3003 = vadd.f32 %v2932, %v3002
      %v3004 = vpop.f32.mrb[0].mxu0
      %v3005 = vadd.f32 %v2934, %v3004
      %v3006 = vpop.f32.mrb[0].mxu0
      %v3007 = vadd.f32 %v2936, %v3006
      %3008 = vmatprep.mubr.bf16.mxu0 %v1150
      %3009 = vmatmul.mubr.bf16.gmra.mrb[0].mxu0 %v1149
      %v3010 = vpop.f32.mrb[0].mxu0
      %v3011 = vadd.f32 %v2940, %v3010
      %v3012 = vpop.f32.mrb[0].mxu0
      %v3013 = vadd.f32 %v2942, %v3012
      %v3014 = vpop.f32.mrb[0].mxu0
      %v3015 = vadd.f32 %v2944, %v3014
      %v3016 = vpop.f32.mrb[0].mxu0
      %v3017 = vadd.f32 %v2946, %v3016
      %3018 = vmatprep.mubr.bf16.mxu0 %v1154
      %3019 = vmatmul.mubr.bf16.gmra.mrb[0].mxu0 %v1153
      %v3020 = vpop.f32.mrb[0].mxu0
      %v3021 = vadd.f32 %v2950, %v3020
      %v3022 = vpop.f32.mrb[0].mxu0
      %v3023 = vadd.f32 %v2952, %v3022
      %v3024 = vpop.f32.mrb[0].mxu0
      %v3025 = vpop.f32.mrb[0].mxu0
      %3026 = vdwg.mxu0
      %3027 = vmatprep.subr.bf16.mxu0 %v2282
      %3028 = vmatpush1.bf16.msra.mxu0 %v2281
      %3029 = vmatprep.subr.bf16.mxu0 %v2284
      %3030 = vmatpush1.bf16.msra.mxu0 %v2283
      %3031 = vmatprep.subr.bf16.mxu0 %v2286
      %3032 = vmatpush1.bf16.msra.mxu0 %v2285
      %3033 = vmatprep.subr.bf16.mxu0 %v2288
      %3034 = vmatpush1.bf16.msra.mxu0 %v2287
      %3035 = vmatprep.subr.bf16.mxu0 %v2290
      %3036 = vmatpush1.bf16.msra.mxu0 %v2289
      %3037 = vmatprep.subr.bf16.mxu0 %v2292
      %3038 = vmatpush1.bf16.msra.mxu0 %v2291
      %3039 = vmatprep.subr.bf16.mxu0 %v2294
      %3040 = vmatpush1.bf16.msra.mxu0 %v2293
      %3041 = vmatprep.subr.bf16.mxu0 %v2296
      %3042 = vmatpush1.bf16.msra.mxu0 %v2295
      %3043 = vmatprep.subr.bf16.mxu0 %v2298
      %3044 = vmatpush1.bf16.msra.mxu0 %v2297
      %3045 = vmatprep.subr.bf16.mxu0 %v2300
      %3046 = vmatpush1.bf16.msra.mxu0 %v2299
      %3047 = vmatprep.subr.bf16.mxu0 %v2302
      %3048 = vmatpush1.bf16.msra.mxu0 %v2301
      %3049 = vmatprep.subr.bf16.mxu0 %v2304
      %3050 = vmatpush1.bf16.msra.mxu0 %v2303
      %3051 = vmatprep.subr.bf16.mxu0 %v2306
      %3052 = vmatpush1.bf16.msra.mxu0 %v2305
      %3053 = vmatprep.subr.bf16.mxu0 %v2308
      %3054 = vmatpush1.bf16.msra.mxu0 %v2307
      %3055 = vmatprep.subr.bf16.mxu0 %v2310
      %3056 = vmatpush1.bf16.msra.mxu0 %v2309
      %3057 = vmatprep.subr.bf16.mxu0 %v2312
      %3058 = vmatpush1.bf16.msra.mxu0 %v2311
      %3059 = vmatprep.mubr.bf16.mxu0 %v1204
      %3060 = vmatmul.mubr.bf16.gmra.mrb[0].mxu0 %v1192
      %v3061 = vpop.f32.mrb[0].mxu0
      %v3062 = vadd.f32 %v2991, %v3061
      %v3063 = vpop.f32.mrb[0].mxu0
      %v3064 = vadd.f32 %v2993, %v3063
      %v3065 = vpop.f32.mrb[0].mxu0
      %v3066 = vadd.f32 %v2995, %v3065
      %v3067 = vpop.f32.mrb[0].mxu0
      %v3068 = vadd.f32 %v2997, %v3067
      %3069 = vmatprep.mubr.bf16.mxu0 %v1244
      %3070 = vmatmul.mubr.bf16.gmra.mrb[0].mxu0 %v1236
      %v3071 = vpop.f32.mrb[0].mxu0
      %v3072 = vadd.f32 %v3001, %v3071
      %v3073 = vpop.f32.mrb[0].mxu0
      %v3074 = vadd.f32 %v3003, %v3073
      %v3075 = vpop.f32.mrb[0].mxu0
      %v3076 = vadd.f32 %v3005, %v3075
      %v3077 = vpop.f32.mrb[0].mxu0
      %v3078 = vadd.f32 %v3007, %v3077
      %3079 = vmatprep.mubr.bf16.mxu0 %v1276
      %3080 = vmatmul.mubr.bf16.gmra.mrb[0].mxu0 %v1268
      %v3081 = vpop.f32.mrb[0].mxu0
      %v3082 = vadd.f32 %v3011, %v3081
      %v3083 = vpop.f32.mrb[0].mxu0
      %v3084 = vadd.f32 %v3013, %v3083
      %v3085 = vpop.f32.mrb[0].mxu0
      %v3086 = vadd.f32 %v3015, %v3085
      %v3087 = vpop.f32.mrb[0].mxu0
      %v3088 = vadd.f32 %v3017, %v3087
      %3089 = vmatprep.mubr.bf16.mxu0 %v1298
      %3090 = vmatmul.mubr.bf16.gmra.mrb[0].mxu0 %v1295
      %v3091 = vpop.f32.mrb[0].mxu0
      %v3092 = vadd.f32 %v3021, %v3091
      %v3093 = vpop.f32.mrb[0].mxu0
      %v3094 = vadd.f32 %v3023, %v3093
      %v3095 = vpop.f32.mrb[0].mxu0
      %v3096 = vpop.f32.mrb[0].mxu0
      %3097 = vdwg.mxu0
      %3098 = vmatprep.subr.bf16.mxu0 %v2314
      %3099 = vmatpush1.bf16.msra.mxu0 %v2313
      %3100 = vmatprep.subr.bf16.mxu0 %v2316
      %3101 = vmatpush1.bf16.msra.mxu0 %v2315
      %3102 = vmatprep.subr.bf16.mxu0 %v2318
      %3103 = vmatpush1.bf16.msra.mxu0 %v2317
      %3104 = vmatprep.subr.bf16.mxu0 %v2320
      %3105 = vmatpush1.bf16.msra.mxu0 %v2319
      %3106 = vmatprep.subr.bf16.mxu0 %v2322
      %3107 = vmatpush1.bf16.msra.mxu0 %v2321
      %3108 = vmatprep.subr.bf16.mxu0 %v2324
      %3109 = vmatpush1.bf16.msra.mxu0 %v2323
      %3110 = vmatprep.subr.bf16.mxu0 %v2326
      %3111 = vmatpush1.bf16.msra.mxu0 %v2325
      %3112 = vmatprep.subr.bf16.mxu0 %v2328
      %3113 = vmatpush1.bf16.msra.mxu0 %v2327
      %3114 = vmatprep.subr.bf16.mxu0 %v2330
      %3115 = vmatpush1.bf16.msra.mxu0 %v2329
      %3116 = vmatprep.subr.bf16.mxu0 %v2332
      %3117 = vmatpush1.bf16.msra.mxu0 %v2331
      %3118 = vmatprep.subr.bf16.mxu0 %v2334
      %3119 = vmatpush1.bf16.msra.mxu0 %v2333
      %3120 = vmatprep.subr.bf16.mxu0 %v2336
      %3121 = vmatpush1.bf16.msra.mxu0 %v2335
      %3122 = vmatprep.subr.bf16.mxu0 %v2338
      %3123 = vmatpush1.bf16.msra.mxu0 %v2337
      %3124 = vmatprep.subr.bf16.mxu0 %v2340
      %3125 = vmatpush1.bf16.msra.mxu0 %v2339
      %3126 = vmatprep.subr.bf16.mxu0 %v2342
      %3127 = vmatpush1.bf16.msra.mxu0 %v2341
      %3128 = vmatprep.subr.bf16.mxu0 %v2344
      %3129 = vmatpush1.bf16.msra.mxu0 %v2343
      %3130 = vmatprep.mubr.bf16.mxu0 %v1228
      %3131 = vmatmul.mubr.bf16.gmra.mrb[0].mxu0 %v1216
      %v3132 = vpop.f32.mrb[0].mxu0
      %v3133 = vadd.f32 %v3062, %v3132
      %v3134 = vpop.f32.mrb[0].mxu0
      %v3135 = vadd.f32 %v3064, %v3134
      %v3136 = vpop.f32.mrb[0].mxu0
      %v3137 = vadd.f32 %v3066, %v3136
      %v3138 = vpop.f32.mrb[0].mxu0
      %v3139 = vadd.f32 %v3068, %v3138
      %3140 = vmatprep.mubr.bf16.mxu0 %v1260
      %3141 = vmatmul.mubr.bf16.gmra.mrb[0].mxu0 %v1252
      %v3142 = vpop.f32.mrb[0].mxu0
      %v3143 = vadd.f32 %v3072, %v3142
      %v3144 = vpop.f32.mrb[0].mxu0
      %v3145 = vadd.f32 %v3074, %v3144
      %v3146 = vpop.f32.mrb[0].mxu0
      %v3147 = vadd.f32 %v3076, %v3146
      %v3148 = vpop.f32.mrb[0].mxu0
      %v3149 = vadd.f32 %v3078, %v3148
      %3150 = vmatprep.mubr.bf16.mxu0 %v1292
      %3151 = vmatmul.mubr.bf16.gmra.mrb[0].mxu0 %v1284
      %v3152 = vpop.f32.mrb[0].mxu0
      %v3153 = vadd.f32 %v3082, %v3152
      %v3154 = vpop.f32.mrb[0].mxu0
      %v3155 = vadd.f32 %v3084, %v3154
      %v3156 = vpop.f32.mrb[0].mxu0
      %v3157 = vadd.f32 %v3086, %v3156
      %v3158 = vpop.f32.mrb[0].mxu0
      %v3159 = vadd.f32 %v3088, %v3158
      %3160 = vmatprep.mubr.bf16.mxu0 %v1304
      %3161 = vmatmul.mubr.bf16.gmra.mrb[0].mxu0 %v1301
      %v3162 = vpop.f32.mrb[0].mxu0
      %v3163 = vadd.f32 %v3092, %v3162
      %v3164 = vpop.f32.mrb[0].mxu0
      %v3165 = vadd.f32 %v3094, %v3164
      %v3166 = vpop.f32.mrb[0].mxu0
      %v3167 = vpop.f32.mrb[0].mxu0
      %3168 = vdwg.mxu0
      %v3169 = vpack.c.bf16 %v3137, %v3133
      %v3170 = vpack.c.bf16 %v3139, %v3135
      %v3171 = vpack.c.bf16 %v3147, %v3143
      %v3172 = vpack.c.bf16 %v3149, %v3145
      %v3173 = vpack.c.bf16 %v3157, %v3153
      %v3174 = vpack.c.bf16 %v3159, %v3155
      %v3175 = vpack.c.bf16 %v3163, %v3163
      %v3176 = vpack.c.bf16 %v3165, %v3165
      %v3178 = vshrl.u32 %v3169, 16
      %v3180 = vshll.u32 %v3169, 16
      %v3182 = vrot.slane %v3180, 1
      %v3183 = vor.u32 %v3178, %v3182
      %v3185 = vshll.u32 %v3171, 16
      %v3187 = vrot.slane %v3185, 1
      %v3188 = vsel %vm998, %v3183, %v3187
      %v3190 = vshrl.u32 %v3170, 16
      %v3192 = vshll.u32 %v3170, 16
      %v3194 = vrot.slane %v3192, 1
      %v3195 = vor.u32 %v3190, %v3194
      %v3197 = vshll.u32 %v3172, 16
      %v3199 = vrot.slane %v3197, 1
      %v3200 = vsel %vm998, %v3195, %v3199
      %v3201 = vshrl.u32 %v3171, 16
      %v3203 = vor.u32 %v3201, %v3187
      %v3205 = vshll.u32 %v3173, 16
      %v3207 = vrot.slane %v3205, 1
      %v3208 = vsel %vm998, %v3203, %v3207
      %v3209 = vshrl.u32 %v3172, 16
      %v3211 = vor.u32 %v3209, %v3199
      %v3213 = vshll.u32 %v3174, 16
      %v3215 = vrot.slane %v3213, 1
      %v3216 = vsel %vm998, %v3211, %v3215
      %v3217 = vshrl.u32 %v3173, 16
      %v3219 = vor.u32 %v3217, %v3207
      %v3220 = vshrl.u32 %v3174, 16
      %v3222 = vor.u32 %v3220, %v3215
      %vm3235 = vcmask 1046528
      %v3236 = vrot.slane %v3169, 1
      %v3237 = vrot.slane %v3171, 1
      %v3238 = vsel %vm3235, %v3236, %v3237
      %v3239 = vrot.slane %v3170, 1
      %v3240 = vrot.slane %v3172, 1
      %v3241 = vsel %vm3235, %v3239, %v3240
      %v3242 = vrot.slane %v3173, 1
      %v3243 = vsel %vm3235, %v3237, %v3242
      %v3244 = vrot.slane %v3174, 1
      %v3245 = vsel %vm3235, %v3240, %v3244
      %vm3252 = vcmask 1043456
      %v3253 = vrot.slane %v3169, 4
      %v3254 = vrot.slane %v3171, 4
      %v3255 = vsel %vm3252, %v3253, %v3254
      %v3256 = vrot.slane %v3170, 4
      %v3257 = vrot.slane %v3172, 4
      %v3258 = vsel %vm3252, %v3256, %v3257
      %v3259 = vrot.slane %v3173, 4
      %v3260 = vsel %vm3252, %v3254, %v3259
      %v3261 = vrot.slane %v3174, 4
      %v3262 = vsel %vm3252, %v3257, %v3261
      %vm3269 = vsmask.f32 3328
      %v3270 = vrot.slane %v3178, 4
      %v3271 = vrot.slane %v3180, 5
      %v3272 = vor.u32 %v3270, %v3271
      %v3273 = vrot.slane %v3201, 4
      %v3274 = vrot.slane %v3185, 5
      %v3275 = vor.u32 %v3273, %v3274
      %v3276 = vsel %vm3269, %v3272, %v3275
      %v3277 = vrot.slane %v3190, 4
      %v3278 = vrot.slane %v3192, 5
      %v3279 = vor.u32 %v3277, %v3278
      %v3280 = vrot.slane %v3209, 4
      %v3281 = vrot.slane %v3197, 5
      %v3282 = vor.u32 %v3280, %v3281
      %v3283 = vsel %vm3269, %v3279, %v3282
      %v3284 = vrot.slane %v3217, 4
      %v3285 = vrot.slane %v3205, 5
      %v3286 = vor.u32 %v3284, %v3285
      %v3287 = vsel %vm3269, %v3275, %v3286
      %v3288 = vrot.slane %v3220, 4
      %v3289 = vrot.slane %v3213, 5
      %v3290 = vor.u32 %v3288, %v3289
      %v3291 = vsel %vm3269, %v3282, %v3290
      %vm3298 = vcmask 1042432
      %v3299 = vrot.slane %v3169, 5
      %v3300 = vrot.slane %v3171, 5
      %v3301 = vsel %vm3298, %v3299, %v3300
      %v3302 = vrot.slane %v3170, 5
      %v3303 = vrot.slane %v3172, 5
      %v3304 = vsel %vm3298, %v3302, %v3303
      %v3305 = vrot.slane %v3173, 5
      %v3306 = vsel %vm3298, %v3300, %v3305
      %v3307 = vrot.slane %v3174, 5
      %v3308 = vsel %vm3298, %v3303, %v3307
      %v3316 = vshll.u32 %v3175, 16
      %v3318 = vrot.slane %v3316, 1
      %v3319 = vsel %vm998, %v3219, %v3318
      %v3321 = vshll.u32 %v3176, 16
      %v3323 = vrot.slane %v3321, 1
      %v3324 = vsel %vm998, %v3222, %v3323
      %v3325 = vshrl.u32 %v3175, 16
      %v3327 = vor.u32 %v3325, %v3318
      %v3328 = vshrl.u32 %v3176, 16
      %v3330 = vor.u32 %v3328, %v3323
      %v3337 = vrot.slane %v3175, 1
      %v3338 = vsel %vm3235, %v3242, %v3337
      %v3339 = vrot.slane %v3176, 1
      %v3340 = vsel %vm3235, %v3244, %v3339
      %v3633 = vunpack.c.l.b16 %v498
      %v3634 = vunpack.c.l.b16 %v499
      %v3635 = vunpack.c.l.b16 %v500
      %v3636 = vunpack.c.l.b16 %v501
      %v3637 = vunpack.c.l.b16 %v502
      %v3638 = vunpack.c.l.b16 %v503
      %v3639 = vunpack.c.l.b16 %v504
      %v3640 = vunpack.c.l.b16 %v505
      %v3641 = vunpack.c.l.b16 %v506
      %v3642 = vunpack.c.l.b16 %v507
      %v3643 = vunpack.c.l.b16 %v508
      %v3644 = vunpack.c.l.b16 %v509
      %v3645 = vunpack.c.l.b16 %v510
      %v3646 = vunpack.c.l.b16 %v511
      %v3647 = vunpack.c.l.b16 %v512
      %v3648 = vunpack.c.l.b16 %v513
      %v3649 = vunpack.c.l.b16 %v514
      %v3650 = vunpack.c.l.b16 %v515
      %v3651 = vunpack.c.l.b16 %v516
      %v3652 = vunpack.c.l.b16 %v517
      %v3653 = vunpack.c.l.b16 %v518
      %v3654 = vunpack.c.l.b16 %v519
      %v3655 = vunpack.c.l.b16 %v520
      %v3656 = vunpack.c.l.b16 %v521
      %v3657 = vunpack.c.l.b16 %v522
      %v3658 = vunpack.c.l.b16 %v523
      %v3659 = vunpack.c.l.b16 %v524
      %v3660 = vunpack.c.l.b16 %v525
      %v3661 = vunpack.c.l.b16 %v526
      %v3662 = vunpack.c.l.b16 %v527
      %v3663 = vunpack.c.l.b16 %v528
      %v3664 = vunpack.c.l.b16 %v529
      %v3665 = vunpack.c.l.b16 %v530
      %v3666 = vunpack.c.l.b16 %v531
      %v3667 = vunpack.c.l.b16 %v532
      %v3668 = vunpack.c.l.b16 %v533
      %v3669 = vunpack.c.l.b16 %v534
      %v3670 = vunpack.c.l.b16 %v535
      %v3671 = vunpack.c.l.b16 %v536
      %v3672 = vunpack.c.l.b16 %v537
      %v3673 = vunpack.c.l.b16 %v538
      %v3674 = vunpack.c.l.b16 %v539
      %v3675 = vunpack.c.l.b16 %v540
      %v3676 = vunpack.c.l.b16 %v541
      %v3677 = vunpack.c.l.b16 %v542
      %v3678 = vunpack.c.l.b16 %v543
      %v3679 = vunpack.c.l.b16 %v544
      %v3680 = vunpack.c.l.b16 %v545
      %v3681 = vunpack.c.l.b16 %v546
      %v3682 = vunpack.c.l.b16 %v547
      %v3683 = vunpack.c.l.b16 %v548
      %v3684 = vunpack.c.l.b16 %v549
      %v3685 = vunpack.c.l.b16 %v550
      %v3686 = vunpack.c.l.b16 %v551
      %v3687 = vunpack.c.l.b16 %v552
      %v3688 = vunpack.c.l.b16 %v553
      %v3689 = vunpack.c.l.b16 %v554
      %v3690 = vunpack.c.l.b16 %v555
      %v3691 = vunpack.c.l.b16 %v556
      %v3692 = vunpack.c.l.b16 %v557
      %v3693 = vunpack.c.l.b16 %v558
      %v3694 = vunpack.c.l.b16 %v559
      %v3695 = vunpack.c.l.b16 %v560
      %v3696 = vunpack.c.l.b16 %v561
      %v3697 = vunpack.c.l.b16 %v562
      %v3698 = vunpack.c.l.b16 %v563
      %v3699 = vunpack.c.l.b16 %v564
      %v3700 = vunpack.c.l.b16 %v565
      %v3701 = vunpack.c.l.b16 %v566
      %v3702 = vunpack.c.l.b16 %v567
      %v3703 = vunpack.c.l.b16 %v568
      %v3704 = vunpack.c.l.b16 %v569
      %v3705 = vunpack.c.l.b16 %v570
      %v3706 = vunpack.c.l.b16 %v571
      %v3707 = vunpack.c.l.b16 %v572
      %v3708 = vunpack.c.l.b16 %v573
      %v3709 = vunpack.c.l.b16 %v574
      %v3710 = vunpack.c.l.b16 %v575
      %v3711 = vunpack.c.l.b16 %v576
      %v3712 = vunpack.c.l.b16 %v577
      %v3713 = vunpack.c.l.b16 %v578
      %v3714 = vunpack.c.l.b16 %v579
      %v3715 = vunpack.c.l.b16 %v580
      %v3716 = vunpack.c.l.b16 %v581
      %v3717 = vunpack.c.l.b16 %v582
      %v3718 = vunpack.c.l.b16 %v583
      %v3719 = vunpack.c.l.b16 %v584
      %v3720 = vunpack.c.l.b16 %v585
      %v3721 = vunpack.c.l.b16 %v586
      %v3722 = vunpack.c.l.b16 %v587
      %v3723 = vunpack.c.l.b16 %v588
      %v3724 = vunpack.c.l.b16 %v589
      %v3725 = vunpack.c.l.b16 %v590
      %v3726 = vunpack.c.l.b16 %v591
      %v3727 = vunpack.c.l.b16 %v592
      %v3728 = vunpack.c.l.b16 %v593
      %v3729 = vunpack.c.l.b16 %v594
      %v3730 = vunpack.c.l.b16 %v595
      %v3731 = vunpack.c.l.b16 %v596
      %v3732 = vunpack.c.l.b16 %v597
      %v3733 = vunpack.c.l.b16 %v598
      %v3734 = vunpack.c.l.b16 %v599
      %v3735 = vunpack.c.l.b16 %v600
      %v3736 = vunpack.c.l.b16 %v601
      %v3737 = vunpack.c.l.b16 %v602
      %v3738 = vunpack.c.l.b16 %v603
      %v3739 = vunpack.c.l.b16 %v604
      %v3740 = vunpack.c.l.b16 %v605
      %v3741 = vunpack.c.l.b16 %v606
      %v3742 = vunpack.c.l.b16 %v607
      %v3743 = vunpack.c.l.b16 %v608
      %v3744 = vunpack.c.l.b16 %v609
      %v3745 = vunpack.c.l.b16 %v610
      %v3746 = vunpack.c.l.b16 %v611
      %v3747 = vunpack.c.l.b16 %v612
      %v3748 = vunpack.c.l.b16 %v613
      %v3749 = vunpack.c.l.b16 %v614
      %v3750 = vunpack.c.l.b16 %v615
      %v3751 = vunpack.c.l.b16 %v616
      %v3752 = vunpack.c.l.b16 %v617
      %v3753 = vunpack.c.l.b16 %v618
      %v3754 = vunpack.c.l.b16 %v619
      %v3755 = vunpack.c.l.b16 %v620
      %v3756 = vunpack.c.l.b16 %v621
      %v3757 = vunpack.c.l.b16 %v622
      %v3758 = vunpack.c.l.b16 %v623
      %v3759 = vunpack.c.l.b16 %v624
      %v3760 = vunpack.c.l.b16 %v625
      %v3761 = vunpack.c.l.b16 %v626
      %v3762 = vunpack.c.l.b16 %v627
      %v3763 = vunpack.c.l.b16 %v628
      %v3764 = vunpack.c.l.b16 %v629
      %v3765 = vunpack.c.l.b16 %v630
      %v3766 = vunpack.c.l.b16 %v631
      %v3767 = vunpack.c.l.b16 %v632
      %v3768 = vunpack.c.l.b16 %v633
      %v3769 = vunpack.c.l.b16 %v634
      %v3770 = vunpack.c.l.b16 %v635
      %v3771 = vunpack.c.l.b16 %v636
      %v3772 = vunpack.c.l.b16 %v637
      %v3773 = vunpack.c.l.b16 %v638
      %v3774 = vunpack.c.l.b16 %v639
      %v3775 = vunpack.c.l.b16 %v640
      %v3776 = vunpack.c.l.b16 %v641
      %v3777 = vunpack.c.l.b16 %v642
      %v3778 = vunpack.c.l.b16 %v643
      %v3779 = vunpack.c.l.b16 %v644
      %v3780 = vunpack.c.l.b16 %v645
      %v3781 = vunpack.c.l.b16 %v646
      %v3782 = vunpack.c.l.b16 %v647
      %v3783 = vunpack.c.l.b16 %v648
      %v3784 = vunpack.c.l.b16 %v649
      %v3785 = vunpack.c.l.b16 %v650
      %v3786 = vunpack.c.l.b16 %v651
      %v3787 = vunpack.c.l.b16 %v652
      %v3788 = vunpack.c.l.b16 %v653
      %v3789 = vunpack.c.l.b16 %v654
      %v3790 = vunpack.c.l.b16 %v655
      %v3791 = vunpack.c.l.b16 %v656
      %v3792 = vunpack.c.l.b16 %v657
      %v3793 = vunpack.c.l.b16 %v658
      %v3794 = vunpack.c.l.b16 %v659
      %v3795 = vunpack.c.l.b16 %v660
      %v3796 = vunpack.c.l.b16 %v661
      %v3797 = vunpack.c.l.b16 %v662
      %v3798 = vunpack.c.l.b16 %v663
      %v3799 = vunpack.c.l.b16 %v664
      %v3800 = vunpack.c.l.b16 %v665
      %v3801 = vunpack.c.l.b16 %v666
      %v3802 = vunpack.c.l.b16 %v667
      %v3803 = vunpack.c.l.b16 %v668
      %v3804 = vunpack.c.l.b16 %v669
      %v3805 = vunpack.c.l.b16 %v670
      %v3806 = vunpack.c.l.b16 %v671
      %v3807 = vunpack.c.l.b16 %v672
      %v3808 = vunpack.c.l.b16 %v673
      %v3809 = vunpack.c.l.b16 %v674
      %v3810 = vunpack.c.l.b16 %v675
      %v3811 = vunpack.c.l.b16 %v676
      %v3812 = vunpack.c.l.b16 %v677
      %v3813 = vunpack.c.l.b16 %v678
      %v3814 = vunpack.c.l.b16 %v679
      %v3815 = vunpack.c.l.b16 %v680
      %v3816 = vunpack.c.l.b16 %v681
      %v3817 = vunpack.c.l.b16 %v682
      %v3818 = vunpack.c.l.b16 %v683
      %v3819 = vunpack.c.l.b16 %v684
      %v3820 = vunpack.c.l.b16 %v685
      %v3821 = vunpack.c.l.b16 %v686
      %v3822 = vunpack.c.l.b16 %v687
      %v3823 = vunpack.c.l.b16 %v688
      %v3824 = vunpack.c.l.b16 %v689
      %v3825 = vunpack.c.l.b16 %v690
      %v3826 = vunpack.c.l.b16 %v691
      %v3827 = vunpack.c.l.b16 %v692
      %v3828 = vunpack.c.l.b16 %v693
      %v3829 = vunpack.c.l.b16 %v694
      %v3830 = vunpack.c.l.b16 %v695
      %v3831 = vunpack.c.l.b16 %v696
      %v3832 = vunpack.c.l.b16 %v697
      %v3833 = vunpack.c.l.b16 %v698
      %v3834 = vunpack.c.l.b16 %v699
      %v3835 = vunpack.c.l.b16 %v700
      %v3836 = vunpack.c.l.b16 %v701
      %v3837 = vunpack.c.l.b16 %v702
      %v3838 = vunpack.c.l.b16 %v703
      %v3839 = vunpack.c.l.b16 %v704
      %v3840 = vunpack.c.l.b16 %v705
      %v3841 = vunpack.c.l.b16 %v706
      %v3842 = vunpack.c.l.b16 %v707
      %v3843 = vunpack.c.l.b16 %v708
      %v3844 = vunpack.c.l.b16 %v709
      %v3845 = vunpack.c.l.b16 %v710
      %v3846 = vunpack.c.l.b16 %v711
      %v3847 = vunpack.c.l.b16 %v712
      %v3848 = vunpack.c.l.b16 %v713
      %v3849 = vunpack.c.l.b16 %v714
      %v3850 = vunpack.c.l.b16 %v715
      %v3851 = vunpack.c.l.b16 %v716
      %v3852 = vunpack.c.l.b16 %v717
      %v3853 = vunpack.c.l.b16 %v718
      %v3854 = vunpack.c.l.b16 %v719
      %v3855 = vunpack.c.l.b16 %v720
      %v3856 = vunpack.c.l.b16 %v721
      %v3857 = vunpack.c.l.b16 %v722
      %v3858 = vunpack.c.l.b16 %v723
      %v3859 = vunpack.c.l.b16 %v724
      %v3860 = vunpack.c.l.b16 %v725
      %v3861 = vunpack.c.l.b16 %v726
      %v3862 = vunpack.c.l.b16 %v727
      %v3863 = vunpack.c.l.b16 %v728
      %v3864 = vunpack.c.l.b16 %v729
      %v3865 = vunpack.c.l.b16 %v730
      %v3866 = vunpack.c.l.b16 %v731
      %v3867 = vunpack.c.l.b16 %v732
      %v3868 = vunpack.c.l.b16 %v733
      %v3869 = vunpack.c.l.b16 %v734
      %v3870 = vunpack.c.l.b16 %v735
      %v3871 = vunpack.c.l.b16 %v736
      %v3872 = vunpack.c.l.b16 %v737
      %v3873 = vunpack.c.l.b16 %v738
      %v3874 = vunpack.c.l.b16 %v739
      %v3875 = vunpack.c.l.b16 %v740
      %v3876 = vunpack.c.l.b16 %v741
      %v3877 = vunpack.c.l.b16 %v742
      %v3878 = vunpack.c.l.b16 %v743
      %v3879 = vunpack.c.l.b16 %v744
      %v3880 = vunpack.c.l.b16 %v745
      %v3881 = vunpack.c.l.b16 %v746
      %v3882 = vunpack.c.l.b16 %v747
      %v3883 = vunpack.c.l.b16 %v748
      %v3884 = vunpack.c.l.b16 %v749
      %v3885 = vunpack.c.l.b16 %v750
      %v3886 = vunpack.c.l.b16 %v751
      %v3887 = vunpack.c.l.b16 %v752
      %v3888 = vunpack.c.l.b16 %v753
      %v3889 = vunpack.c.l.b16 %v754
      %v3890 = vunpack.c.l.b16 %v755
      %v3891 = vunpack.c.l.b16 %v756
      %v3892 = vunpack.c.l.b16 %v757
      %v3893 = vunpack.c.l.b16 %v758
      %v3894 = vunpack.c.l.b16 %v759
      %v3895 = vunpack.c.l.b16 %v760
      %v3896 = vunpack.c.l.b16 %v761
      %v3897 = vunpack.c.l.b16 %v762
      %v3898 = vunpack.c.l.b16 %v763
      %v3899 = vunpack.c.l.b16 %v764
      %v3900 = vunpack.c.l.b16 %v765
      %v3901 = vunpack.c.l.b16 %v766
      %v3902 = vunpack.c.l.b16 %v767
      %v3903 = vunpack.c.l.b16 %v768
      %v3904 = vunpack.c.l.b16 %v769
      %v3905 = vunpack.c.l.b16 %v770
      %v3906 = vunpack.c.l.b16 %v771
      %v3907 = vunpack.c.l.b16 %v772
      %v3908 = vunpack.c.l.b16 %v773
      %v3909 = vunpack.c.l.b16 %v774
      %v3910 = vunpack.c.l.b16 %v775
      %v3911 = vunpack.c.l.b16 %v776
      %v3912 = vunpack.c.l.b16 %v777
      %v3913 = vunpack.c.l.b16 %v778
      %v3914 = vunpack.c.l.b16 %v779
      %v3915 = vunpack.c.l.b16 %v780
      %v3916 = vunpack.c.l.b16 %v781
      %v3917 = vunpack.c.l.b16 %v782
      %v3918 = vunpack.c.l.b16 %v783
      %v3919 = vunpack.c.l.b16 %v784
      %v3920 = vunpack.c.l.b16 %v785
      %v3921 = vpack.c.b16 %v3634, %v3633
      %v3922 = vpack.c.b16 %v3636, %v3635
      %v3923 = vpack.c.b16 %v3638, %v3637
      %v3924 = vpack.c.b16 %v3640, %v3639
      %v3925 = vpack.c.b16 %v3642, %v3641
      %v3926 = vpack.c.b16 %v3644, %v3643
      %v3927 = vpack.c.b16 %v3646, %v3645
      %v3928 = vpack.c.b16 %v3648, %v3647
      %v3929 = vpack.c.b16 %v3650, %v3649
      %v3930 = vpack.c.b16 %v3652, %v3651
      %v3931 = vpack.c.b16 %v3654, %v3653
      %v3932 = vpack.c.b16 %v3656, %v3655
      %v3933 = vpack.c.b16 %v3658, %v3657
      %v3934 = vpack.c.b16 %v3660, %v3659
      %v3935 = vpack.c.b16 %v3662, %v3661
      %v3936 = vpack.c.b16 %v3664, %v3663
      %v3937 = vpack.c.b16 %v3666, %v3665
      %v3938 = vpack.c.b16 %v3668, %v3667
      %v3939 = vpack.c.b16 %v3670, %v3669
      %v3940 = vpack.c.b16 %v3672, %v3671
      %v3941 = vpack.c.b16 %v3674, %v3673
      %v3942 = vpack.c.b16 %v3676, %v3675
      %v3943 = vpack.c.b16 %v3678, %v3677
      %v3944 = vpack.c.b16 %v3680, %v3679
      %v3945 = vpack.c.b16 %v3682, %v3681
      %v3946 = vpack.c.b16 %v3684, %v3683
      %v3947 = vpack.c.b16 %v3686, %v3685
      %v3948 = vpack.c.b16 %v3688, %v3687
      %v3949 = vpack.c.b16 %v3690, %v3689
      %v3950 = vpack.c.b16 %v3692, %v3691
      %v3951 = vpack.c.b16 %v3694, %v3693
      %v3952 = vpack.c.b16 %v3696, %v3695
      %v3953 = vpack.c.b16 %v3698, %v3697
      %v3954 = vpack.c.b16 %v3700, %v3699
      %v3955 = vpack.c.b16 %v3702, %v3701
      %v3956 = vpack.c.b16 %v3704, %v3703
      %v3957 = vpack.c.b16 %v3706, %v3705
      %v3958 = vpack.c.b16 %v3708, %v3707
      %v3959 = vpack.c.b16 %v3710, %v3709
      %v3960 = vpack.c.b16 %v3712, %v3711
      %v3961 = vpack.c.b16 %v3714, %v3713
      %v3962 = vpack.c.b16 %v3716, %v3715
      %v3963 = vpack.c.b16 %v3718, %v3717
      %v3964 = vpack.c.b16 %v3720, %v3719
      %v3965 = vpack.c.b16 %v3722, %v3721
      %v3966 = vpack.c.b16 %v3724, %v3723
      %v3967 = vpack.c.b16 %v3726, %v3725
      %v3968 = vpack.c.b16 %v3728, %v3727
      %v3969 = vpack.c.b16 %v3730, %v3729
      %v3970 = vpack.c.b16 %v3732, %v3731
      %v3971 = vpack.c.b16 %v3734, %v3733
      %v3972 = vpack.c.b16 %v3736, %v3735
      %v3973 = vpack.c.b16 %v3738, %v3737
      %v3974 = vpack.c.b16 %v3740, %v3739
      %v3975 = vpack.c.b16 %v3742, %v3741
      %v3976 = vpack.c.b16 %v3744, %v3743
      %v3977 = vpack.c.b16 %v3746, %v3745
      %v3978 = vpack.c.b16 %v3748, %v3747
      %v3979 = vpack.c.b16 %v3750, %v3749
      %v3980 = vpack.c.b16 %v3752, %v3751
      %v3981 = vpack.c.b16 %v3754, %v3753
      %v3982 = vpack.c.b16 %v3756, %v3755
      %v3983 = vpack.c.b16 %v3758, %v3757
      %v3984 = vpack.c.b16 %v3760, %v3759
      %v3985 = vpack.c.b16 %v3762, %v3761
      %v3986 = vpack.c.b16 %v3764, %v3763
      %v3987 = vpack.c.b16 %v3766, %v3765
      %v3988 = vpack.c.b16 %v3768, %v3767
      %v3989 = vpack.c.b16 %v3770, %v3769
      %v3990 = vpack.c.b16 %v3772, %v3771
      %v3991 = vpack.c.b16 %v3774, %v3773
      %v3992 = vpack.c.b16 %v3776, %v3775
      %v3993 = vpack.c.b16 %v3778, %v3777
      %v3994 = vpack.c.b16 %v3780, %v3779
      %v3995 = vpack.c.b16 %v3782, %v3781
      %v3996 = vpack.c.b16 %v3784, %v3783
      %v3997 = vpack.c.b16 %v3786, %v3785
      %v3998 = vpack.c.b16 %v3788, %v3787
      %v3999 = vpack.c.b16 %v3790, %v3789
      %v4000 = vpack.c.b16 %v3792, %v3791
      %v4001 = vpack.c.b16 %v3794, %v3793
      %v4002 = vpack.c.b16 %v3796, %v3795
      %v4003 = vpack.c.b16 %v3798, %v3797
      %v4004 = vpack.c.b16 %v3800, %v3799
      %v4005 = vpack.c.b16 %v3802, %v3801
      %v4006 = vpack.c.b16 %v3804, %v3803
      %v4007 = vpack.c.b16 %v3806, %v3805
      %v4008 = vpack.c.b16 %v3808, %v3807
      %v4009 = vpack.c.b16 %v3810, %v3809
      %v4010 = vpack.c.b16 %v3812, %v3811
      %v4011 = vpack.c.b16 %v3814, %v3813
      %v4012 = vpack.c.b16 %v3816, %v3815
      %v4013 = vpack.c.b16 %v3818, %v3817
      %v4014 = vpack.c.b16 %v3820, %v3819
      %v4015 = vpack.c.b16 %v3822, %v3821
      %v4016 = vpack.c.b16 %v3824, %v3823
      %v4017 = vpack.c.b16 %v3826, %v3825
      %v4018 = vpack.c.b16 %v3828, %v3827
      %v4019 = vpack.c.b16 %v3830, %v3829
      %v4020 = vpack.c.b16 %v3832, %v3831
      %v4021 = vpack.c.b16 %v3834, %v3833
      %v4022 = vpack.c.b16 %v3836, %v3835
      %v4023 = vpack.c.b16 %v3838, %v3837
      %v4024 = vpack.c.b16 %v3840, %v3839
      %v4025 = vpack.c.b16 %v3842, %v3841
      %v4026 = vpack.c.b16 %v3844, %v3843
      %v4027 = vpack.c.b16 %v3846, %v3845
      %v4028 = vpack.c.b16 %v3848, %v3847
      %v4029 = vpack.c.b16 %v3850, %v3849
      %v4030 = vpack.c.b16 %v3852, %v3851
      %v4031 = vpack.c.b16 %v3854, %v3853
      %v4032 = vpack.c.b16 %v3856, %v3855
      %v4033 = vpack.c.b16 %v3858, %v3857
      %v4034 = vpack.c.b16 %v3860, %v3859
      %v4035 = vpack.c.b16 %v3862, %v3861
      %v4036 = vpack.c.b16 %v3864, %v3863
      %v4037 = vpack.c.b16 %v3866, %v3865
      %v4038 = vpack.c.b16 %v3868, %v3867
      %v4039 = vpack.c.b16 %v3870, %v3869
      %v4040 = vpack.c.b16 %v3872, %v3871
      %v4041 = vpack.c.b16 %v3874, %v3873
      %v4042 = vpack.c.b16 %v3876, %v3875
      %v4043 = vpack.c.b16 %v3878, %v3877
      %v4044 = vpack.c.b16 %v3880, %v3879
      %v4045 = vpack.c.b16 %v3882, %v3881
      %v4046 = vpack.c.b16 %v3884, %v3883
      %v4047 = vpack.c.b16 %v3886, %v3885
      %v4048 = vpack.c.b16 %v3888, %v3887
      %v4049 = vpack.c.b16 %v3890, %v3889
      %v4050 = vpack.c.b16 %v3892, %v3891
      %v4051 = vpack.c.b16 %v3894, %v3893
      %v4052 = vpack.c.b16 %v3896, %v3895
      %v4053 = vpack.c.b16 %v3898, %v3897
      %v4054 = vpack.c.b16 %v3900, %v3899
      %v4055 = vpack.c.b16 %v3902, %v3901
      %v4056 = vpack.c.b16 %v3904, %v3903
      %v4057 = vpack.c.b16 %v3906, %v3905
      %v4058 = vpack.c.b16 %v3908, %v3907
      %v4059 = vpack.c.b16 %v3910, %v3909
      %v4060 = vpack.c.b16 %v3912, %v3911
      %v4061 = vpack.c.b16 %v3914, %v3913
      %v4062 = vpack.c.b16 %v3916, %v3915
      %v4063 = vpack.c.b16 %v3918, %v3917
      %v4064 = vpack.c.b16 %v3920, %v3919
      %4209 = vmatprep.subr.bf16.mxu0 0
      %4210 = vmatpush1.bf16.msra.mxu0 %v3921
      %4211 = vmatprep.subr.bf16.mxu0 0
      %4212 = vmatpush1.bf16.msra.mxu0 %v3922
      %4213 = vmatprep.subr.bf16.mxu0 0
      %4214 = vmatpush1.bf16.msra.mxu0 %v3923
      %4215 = vmatprep.subr.bf16.mxu0 0
      %4216 = vmatpush1.bf16.msra.mxu0 %v3924
      %4217 = vmatprep.subr.bf16.mxu0 0
      %4218 = vmatpush1.bf16.msra.mxu0 %v3925
      %4219 = vmatprep.subr.bf16.mxu0 0
      %4220 = vmatpush1.bf16.msra.mxu0 %v3926
      %4221 = vmatprep.subr.bf16.mxu0 0
      %4222 = vmatpush1.bf16.msra.mxu0 %v3927
      %4223 = vmatprep.subr.bf16.mxu0 0
      %4224 = vmatpush1.bf16.msra.mxu0 %v3928
      %4225 = vmatprep.subr.bf16.mxu0 0
      %4226 = vmatpush1.bf16.msra.mxu0 %v3929
      %4227 = vmatprep.subr.bf16.mxu0 0
      %4228 = vmatpush1.bf16.msra.mxu0 %v3930
      %4229 = vmatprep.subr.bf16.mxu0 0
      %4230 = vmatpush1.bf16.msra.mxu0 %v3931
      %4231 = vmatprep.subr.bf16.mxu0 0
      %4232 = vmatpush1.bf16.msra.mxu0 %v3932
      %4233 = vmatprep.subr.bf16.mxu0 0
      %4234 = vmatpush1.bf16.msra.mxu0 %v3933
      %4235 = vmatprep.subr.bf16.mxu0 0
      %4236 = vmatpush1.bf16.msra.mxu0 %v3934
      %4237 = vmatprep.subr.bf16.mxu0 0
      %4238 = vmatpush1.bf16.msra.mxu0 %v3935
      %4239 = vmatprep.subr.bf16.mxu0 0
      %4240 = vmatpush1.bf16.msra.mxu0 %v3936
      %4241 = vmatprep.mubr.bf16.mxu0 %v3170
      %4242 = vmatmul.mubr.bf16.gmra.mrb[0].mxu0 %v3169
      %v4243 = vpop.f32.mrb[0].mxu0
      %v4244 = vadd.f32 0.0, %v4243
      %v4245 = vpop.f32.mrb[0].mxu0
      %v4246 = vpop.f32.mrb[0].mxu0
      %v4247 = vadd.f32 0.0, %v4246
      %v4248 = vpop.f32.mrb[0].mxu0
      %4249 = vmatprep.mubr.bf16.mxu0 %v3172
      %4250 = vmatmul.mubr.bf16.gmra.mrb[0].mxu0 %v3171
      %v4251 = vpop.f32.mrb[0].mxu0
      %v4252 = vadd.f32 0.0, %v4251
      %v4253 = vpop.f32.mrb[0].mxu0
      %v4254 = vpop.f32.mrb[0].mxu0
      %v4255 = vadd.f32 0.0, %v4254
      %v4256 = vpop.f32.mrb[0].mxu0
      %4257 = vmatprep.mubr.bf16.mxu0 %v3174
      %4258 = vmatmul.mubr.bf16.gmra.mrb[0].mxu0 %v3173
      %v4259 = vpop.f32.mrb[0].mxu0
      %v4260 = vadd.f32 0.0, %v4259
      %v4261 = vpop.f32.mrb[0].mxu0
      %v4262 = vpop.f32.mrb[0].mxu0
      %v4263 = vpop.f32.mrb[0].mxu0
      %4264 = vdwg.mxu0
      %4265 = vmatprep.subr.bf16.mxu0 0
      %4266 = vmatpush1.bf16.msra.mxu0 %v3937
      %4267 = vmatprep.subr.bf16.mxu0 0
      %4268 = vmatpush1.bf16.msra.mxu0 %v3938
      %4269 = vmatprep.subr.bf16.mxu0 0
      %4270 = vmatpush1.bf16.msra.mxu0 %v3939
      %4271 = vmatprep.subr.bf16.mxu0 0
      %4272 = vmatpush1.bf16.msra.mxu0 %v3940
      %4273 = vmatprep.subr.bf16.mxu0 0
      %4274 = vmatpush1.bf16.msra.mxu0 %v3941
      %4275 = vmatprep.subr.bf16.mxu0 0
      %4276 = vmatpush1.bf16.msra.mxu0 %v3942
      %4277 = vmatprep.subr.bf16.mxu0 0
      %4278 = vmatpush1.bf16.msra.mxu0 %v3943
      %4279 = vmatprep.subr.bf16.mxu0 0
      %4280 = vmatpush1.bf16.msra.mxu0 %v3944
      %4281 = vmatprep.subr.bf16.mxu0 0
      %4282 = vmatpush1.bf16.msra.mxu0 %v3945
      %4283 = vmatprep.subr.bf16.mxu0 0
      %4284 = vmatpush1.bf16.msra.mxu0 %v3946
      %4285 = vmatprep.subr.bf16.mxu0 0
      %4286 = vmatpush1.bf16.msra.mxu0 %v3947
      %4287 = vmatprep.subr.bf16.mxu0 0
      %4288 = vmatpush1.bf16.msra.mxu0 %v3948
      %4289 = vmatprep.subr.bf16.mxu0 0
      %4290 = vmatpush1.bf16.msra.mxu0 %v3949
      %4291 = vmatprep.subr.bf16.mxu0 0
      %4292 = vmatpush1.bf16.msra.mxu0 %v3950
      %4293 = vmatprep.subr.bf16.mxu0 0
      %4294 = vmatpush1.bf16.msra.mxu0 %v3951
      %4295 = vmatprep.subr.bf16.mxu0 0
      %4296 = vmatpush1.bf16.msra.mxu0 %v3952
      %4297 = vmatprep.mubr.bf16.mxu0 %v3200
      %4298 = vmatmul.mubr.bf16.gmra.mrb[0].mxu0 %v3188
      %v4299 = vpop.f32.mrb[0].mxu0
      %v4300 = vadd.f32 %v4244, %v4299
      %v4301 = vpop.f32.mrb[0].mxu0
      %v4302 = vpop.f32.mrb[0].mxu0
      %v4303 = vadd.f32 %v4247, %v4302
      %v4304 = vpop.f32.mrb[0].mxu0
      %4305 = vmatprep.mubr.bf16.mxu0 %v3216
      %4306 = vmatmul.mubr.bf16.gmra.mrb[0].mxu0 %v3208
      %v4307 = vpop.f32.mrb[0].mxu0
      %v4308 = vadd.f32 %v4252, %v4307
      %v4309 = vpop.f32.mrb[0].mxu0
      %v4310 = vpop.f32.mrb[0].mxu0
      %v4311 = vadd.f32 %v4255, %v4310
      %v4312 = vpop.f32.mrb[0].mxu0
      %4313 = vmatprep.mubr.bf16.mxu0 %v3222
      %4314 = vmatmul.mubr.bf16.gmra.mrb[0].mxu0 %v3219
      %v4315 = vpop.f32.mrb[0].mxu0
      %v4316 = vadd.f32 %v4260, %v4315
      %v4317 = vpop.f32.mrb[0].mxu0
      %v4318 = vpop.f32.mrb[0].mxu0
      %v4319 = vpop.f32.mrb[0].mxu0
      %4320 = vdwg.mxu0
      %4321 = vmatprep.subr.bf16.mxu0 0
      %4322 = vmatpush1.bf16.msra.mxu0 %v3953
      %4323 = vmatprep.subr.bf16.mxu0 0
      %4324 = vmatpush1.bf16.msra.mxu0 %v3954
      %4325 = vmatprep.subr.bf16.mxu0 0
      %4326 = vmatpush1.bf16.msra.mxu0 %v3955
      %4327 = vmatprep.subr.bf16.mxu0 0
      %4328 = vmatpush1.bf16.msra.mxu0 %v3956
      %4329 = vmatprep.subr.bf16.mxu0 0
      %4330 = vmatpush1.bf16.msra.mxu0 %v3957
      %4331 = vmatprep.subr.bf16.mxu0 0
      %4332 = vmatpush1.bf16.msra.mxu0 %v3958
      %4333 = vmatprep.subr.bf16.mxu0 0
      %4334 = vmatpush1.bf16.msra.mxu0 %v3959
      %4335 = vmatprep.subr.bf16.mxu0 0
      %4336 = vmatpush1.bf16.msra.mxu0 %v3960
      %4337 = vmatprep.subr.bf16.mxu0 0
      %4338 = vmatpush1.bf16.msra.mxu0 %v3961
      %4339 = vmatprep.subr.bf16.mxu0 0
      %4340 = vmatpush1.bf16.msra.mxu0 %v3962
      %4341 = vmatprep.subr.bf16.mxu0 0
      %4342 = vmatpush1.bf16.msra.mxu0 %v3963
      %4343 = vmatprep.subr.bf16.mxu0 0
      %4344 = vmatpush1.bf16.msra.mxu0 %v3964
      %4345 = vmatprep.subr.bf16.mxu0 0
      %4346 = vmatpush1.bf16.msra.mxu0 %v3965
      %4347 = vmatprep.subr.bf16.mxu0 0
      %4348 = vmatpush1.bf16.msra.mxu0 %v3966
      %4349 = vmatprep.subr.bf16.mxu0 0
      %4350 = vmatpush1.bf16.msra.mxu0 %v3967
      %4351 = vmatprep.subr.bf16.mxu0 0
      %4352 = vmatpush1.bf16.msra.mxu0 %v3968
      %4353 = vmatprep.mubr.bf16.mxu0 %v3241
      %4354 = vmatmul.mubr.bf16.gmra.mrb[0].mxu0 %v3238
      %v4355 = vpop.f32.mrb[0].mxu0
      %v4356 = vadd.f32 %v4300, %v4355
      %v4357 = vpop.f32.mrb[0].mxu0
      %v4358 = vpop.f32.mrb[0].mxu0
      %v4359 = vadd.f32 %v4303, %v4358
      %v4360 = vpop.f32.mrb[0].mxu0
      %4361 = vmatprep.mubr.bf16.mxu0 %v3245
      %4362 = vmatmul.mubr.bf16.gmra.mrb[0].mxu0 %v3243
      %v4363 = vpop.f32.mrb[0].mxu0
      %v4364 = vadd.f32 %v4308, %v4363
      %v4365 = vpop.f32.mrb[0].mxu0
      %v4366 = vpop.f32.mrb[0].mxu0
      %v4367 = vadd.f32 %v4311, %v4366
      %v4368 = vpop.f32.mrb[0].mxu0
      %4369 = vmatprep.mubr.bf16.mxu0 %v3244
      %4370 = vmatmul.mubr.bf16.gmra.mrb[0].mxu0 %v3242
      %v4371 = vpop.f32.mrb[0].mxu0
      %v4372 = vadd.f32 %v4316, %v4371
      %v4373 = vpop.f32.mrb[0].mxu0
      %v4374 = vpop.f32.mrb[0].mxu0
      %v4375 = vpop.f32.mrb[0].mxu0
      %4376 = vdwg.mxu0
      %4377 = vmatprep.subr.bf16.mxu0 0
      %4378 = vmatpush1.bf16.msra.mxu0 %v3969
      %4379 = vmatprep.subr.bf16.mxu0 0
      %4380 = vmatpush1.bf16.msra.mxu0 %v3970
      %4381 = vmatprep.subr.bf16.mxu0 0
      %4382 = vmatpush1.bf16.msra.mxu0 %v3971
      %4383 = vmatprep.subr.bf16.mxu0 0
      %4384 = vmatpush1.bf16.msra.mxu0 %v3972
      %4385 = vmatprep.subr.bf16.mxu0 0
      %4386 = vmatpush1.bf16.msra.mxu0 %v3973
      %4387 = vmatprep.subr.bf16.mxu0 0
      %4388 = vmatpush1.bf16.msra.mxu0 %v3974
      %4389 = vmatprep.subr.bf16.mxu0 0
      %4390 = vmatpush1.bf16.msra.mxu0 %v3975
      %4391 = vmatprep.subr.bf16.mxu0 0
      %4392 = vmatpush1.bf16.msra.mxu0 %v3976
      %4393 = vmatprep.subr.bf16.mxu0 0
      %4394 = vmatpush1.bf16.msra.mxu0 %v3977
      %4395 = vmatprep.subr.bf16.mxu0 0
      %4396 = vmatpush1.bf16.msra.mxu0 %v3978
      %4397 = vmatprep.subr.bf16.mxu0 0
      %4398 = vmatpush1.bf16.msra.mxu0 %v3979
      %4399 = vmatprep.subr.bf16.mxu0 0
      %4400 = vmatpush1.bf16.msra.mxu0 %v3980
      %4401 = vmatprep.subr.bf16.mxu0 0
      %4402 = vmatpush1.bf16.msra.mxu0 %v3981
      %4403 = vmatprep.subr.bf16.mxu0 0
      %4404 = vmatpush1.bf16.msra.mxu0 %v3982
      %4405 = vmatprep.subr.bf16.mxu0 0
      %4406 = vmatpush1.bf16.msra.mxu0 %v3983
      %4407 = vmatprep.subr.bf16.mxu0 0
      %4408 = vmatpush1.bf16.msra.mxu0 %v3984
      %4409 = vmatprep.mubr.bf16.mxu0 %v3258
      %4410 = vmatmul.mubr.bf16.gmra.mrb[0].mxu0 %v3255
      %v4411 = vpop.f32.mrb[0].mxu0
      %v4412 = vadd.f32 %v4356, %v4411
      %v4413 = vpop.f32.mrb[0].mxu0
      %v4414 = vpop.f32.mrb[0].mxu0
      %v4415 = vadd.f32 %v4359, %v4414
      %v4416 = vpop.f32.mrb[0].mxu0
      %4417 = vmatprep.mubr.bf16.mxu0 %v3262
      %4418 = vmatmul.mubr.bf16.gmra.mrb[0].mxu0 %v3260
      %v4419 = vpop.f32.mrb[0].mxu0
      %v4420 = vadd.f32 %v4364, %v4419
      %v4421 = vpop.f32.mrb[0].mxu0
      %v4422 = vpop.f32.mrb[0].mxu0
      %v4423 = vadd.f32 %v4367, %v4422
      %v4424 = vpop.f32.mrb[0].mxu0
      %4425 = vmatprep.mubr.bf16.mxu0 %v3261
      %4426 = vmatmul.mubr.bf16.gmra.mrb[0].mxu0 %v3259
      %v4427 = vpop.f32.mrb[0].mxu0
      %v4428 = vadd.f32 %v4372, %v4427
      %v4429 = vpop.f32.mrb[0].mxu0
      %v4430 = vpop.f32.mrb[0].mxu0
      %v4431 = vpop.f32.mrb[0].mxu0
      %4432 = vdwg.mxu0
      %4433 = vmatprep.subr.bf16.mxu0 0
      %4434 = vmatpush1.bf16.msra.mxu0 %v3985
      %4435 = vmatprep.subr.bf16.mxu0 0
      %4436 = vmatpush1.bf16.msra.mxu0 %v3986
      %4437 = vmatprep.subr.bf16.mxu0 0
      %4438 = vmatpush1.bf16.msra.mxu0 %v3987
      %4439 = vmatprep.subr.bf16.mxu0 0
      %4440 = vmatpush1.bf16.msra.mxu0 %v3988
      %4441 = vmatprep.subr.bf16.mxu0 0
      %4442 = vmatpush1.bf16.msra.mxu0 %v3989
      %4443 = vmatprep.subr.bf16.mxu0 0
      %4444 = vmatpush1.bf16.msra.mxu0 %v3990
      %4445 = vmatprep.subr.bf16.mxu0 0
      %4446 = vmatpush1.bf16.msra.mxu0 %v3991
      %4447 = vmatprep.subr.bf16.mxu0 0
      %4448 = vmatpush1.bf16.msra.mxu0 %v3992
      %4449 = vmatprep.subr.bf16.mxu0 0
      %4450 = vmatpush1.bf16.msra.mxu0 %v3993
      %4451 = vmatprep.subr.bf16.mxu0 0
      %4452 = vmatpush1.bf16.msra.mxu0 %v3994
      %4453 = vmatprep.subr.bf16.mxu0 0
      %4454 = vmatpush1.bf16.msra.mxu0 %v3995
      %4455 = vmatprep.subr.bf16.mxu0 0
      %4456 = vmatpush1.bf16.msra.mxu0 %v3996
      %4457 = vmatprep.subr.bf16.mxu0 0
      %4458 = vmatpush1.bf16.msra.mxu0 %v3997
      %4459 = vmatprep.subr.bf16.mxu0 0
      %4460 = vmatpush1.bf16.msra.mxu0 %v3998
      %4461 = vmatprep.subr.bf16.mxu0 0
      %4462 = vmatpush1.bf16.msra.mxu0 %v3999
      %4463 = vmatprep.subr.bf16.mxu0 0
      %4464 = vmatpush1.bf16.msra.mxu0 %v4000
      %4465 = vmatprep.mubr.bf16.mxu0 %v3283
      %4466 = vmatmul.mubr.bf16.gmra.mrb[0].mxu0 %v3276
      %v4467 = vpop.f32.mrb[0].mxu0
      %v4468 = vadd.f32 %v4412, %v4467
      %v4469 = vpop.f32.mrb[0].mxu0
      %v4470 = vpop.f32.mrb[0].mxu0
      %v4471 = vadd.f32 %v4415, %v4470
      %v4472 = vpop.f32.mrb[0].mxu0
      %4473 = vmatprep.mubr.bf16.mxu0 %v3291
      %4474 = vmatmul.mubr.bf16.gmra.mrb[0].mxu0 %v3287
      %v4475 = vpop.f32.mrb[0].mxu0
      %v4476 = vadd.f32 %v4420, %v4475
      %v4477 = vpop.f32.mrb[0].mxu0
      %v4478 = vpop.f32.mrb[0].mxu0
      %v4479 = vadd.f32 %v4423, %v4478
      %v4480 = vpop.f32.mrb[0].mxu0
      %4481 = vmatprep.mubr.bf16.mxu0 %v3290
      %4482 = vmatmul.mubr.bf16.gmra.mrb[0].mxu0 %v3286
      %v4483 = vpop.f32.mrb[0].mxu0
      %v4484 = vadd.f32 %v4428, %v4483
      %v4485 = vpop.f32.mrb[0].mxu0
      %v4486 = vpop.f32.mrb[0].mxu0
      %v4487 = vpop.f32.mrb[0].mxu0
      %4488 = vdwg.mxu0
      %4489 = vmatprep.subr.bf16.mxu0 0
      %4490 = vmatpush1.bf16.msra.mxu0 %v4001
      %4491 = vmatprep.subr.bf16.mxu0 0
      %4492 = vmatpush1.bf16.msra.mxu0 %v4002
      %4493 = vmatprep.subr.bf16.mxu0 0
      %4494 = vmatpush1.bf16.msra.mxu0 %v4003
      %4495 = vmatprep.subr.bf16.mxu0 0
      %4496 = vmatpush1.bf16.msra.mxu0 %v4004
      %4497 = vmatprep.subr.bf16.mxu0 0
      %4498 = vmatpush1.bf16.msra.mxu0 %v4005
      %4499 = vmatprep.subr.bf16.mxu0 0
      %4500 = vmatpush1.bf16.msra.mxu0 %v4006
      %4501 = vmatprep.subr.bf16.mxu0 0
      %4502 = vmatpush1.bf16.msra.mxu0 %v4007
      %4503 = vmatprep.subr.bf16.mxu0 0
      %4504 = vmatpush1.bf16.msra.mxu0 %v4008
      %4505 = vmatprep.subr.bf16.mxu0 0
      %4506 = vmatpush1.bf16.msra.mxu0 %v4009
      %4507 = vmatprep.subr.bf16.mxu0 0
      %4508 = vmatpush1.bf16.msra.mxu0 %v4010
      %4509 = vmatprep.subr.bf16.mxu0 0
      %4510 = vmatpush1.bf16.msra.mxu0 %v4011
      %4511 = vmatprep.subr.bf16.mxu0 0
      %4512 = vmatpush1.bf16.msra.mxu0 %v4012
      %4513 = vmatprep.subr.bf16.mxu0 0
      %4514 = vmatpush1.bf16.msra.mxu0 %v4013
      %4515 = vmatprep.subr.bf16.mxu0 0
      %4516 = vmatpush1.bf16.msra.mxu0 %v4014
      %4517 = vmatprep.subr.bf16.mxu0 0
      %4518 = vmatpush1.bf16.msra.mxu0 %v4015
      %4519 = vmatprep.subr.bf16.mxu0 0
      %4520 = vmatpush1.bf16.msra.mxu0 %v4016
      %4521 = vmatprep.mubr.bf16.mxu0 %v3304
      %4522 = vmatmul.mubr.bf16.gmra.mrb[0].mxu0 %v3301
      %v4523 = vpop.f32.mrb[0].mxu0
      %v4524 = vadd.f32 %v4468, %v4523
      %v4525 = vpop.f32.mrb[0].mxu0
      %v4526 = vpop.f32.mrb[0].mxu0
      %v4527 = vadd.f32 %v4471, %v4526
      %v4528 = vpop.f32.mrb[0].mxu0
      %4529 = vmatprep.mubr.bf16.mxu0 %v3308
      %4530 = vmatmul.mubr.bf16.gmra.mrb[0].mxu0 %v3306
      %v4531 = vpop.f32.mrb[0].mxu0
      %v4532 = vadd.f32 %v4476, %v4531
      %v4533 = vpop.f32.mrb[0].mxu0
      %v4534 = vpop.f32.mrb[0].mxu0
      %v4535 = vadd.f32 %v4479, %v4534
      %v4536 = vpop.f32.mrb[0].mxu0
      %4537 = vmatprep.mubr.bf16.mxu0 %v3307
      %4538 = vmatmul.mubr.bf16.gmra.mrb[0].mxu0 %v3305
      %v4539 = vpop.f32.mrb[0].mxu0
      %v4540 = vadd.f32 %v4484, %v4539
      %v4541 = vpop.f32.mrb[0].mxu0
      %v4542 = vpop.f32.mrb[0].mxu0
      %v4543 = vpop.f32.mrb[0].mxu0
      %4544 = vdwg.mxu0
      %4545 = vmatprep.subr.bf16.mxu0 0
      %4546 = vmatpush1.bf16.msra.mxu0 %v4017
      %4547 = vmatprep.subr.bf16.mxu0 0
      %4548 = vmatpush1.bf16.msra.mxu0 %v4018
      %4549 = vmatprep.subr.bf16.mxu0 0
      %4550 = vmatpush1.bf16.msra.mxu0 %v4019
      %4551 = vmatprep.subr.bf16.mxu0 0
      %4552 = vmatpush1.bf16.msra.mxu0 %v4020
      %4553 = vmatprep.subr.bf16.mxu0 0
      %4554 = vmatpush1.bf16.msra.mxu0 %v4021
      %4555 = vmatprep.subr.bf16.mxu0 0
      %4556 = vmatpush1.bf16.msra.mxu0 %v4022
      %4557 = vmatprep.subr.bf16.mxu0 0
      %4558 = vmatpush1.bf16.msra.mxu0 %v4023
      %4559 = vmatprep.subr.bf16.mxu0 0
      %4560 = vmatpush1.bf16.msra.mxu0 %v4024
      %4561 = vmatprep.subr.bf16.mxu0 0
      %4562 = vmatpush1.bf16.msra.mxu0 %v4025
      %4563 = vmatprep.subr.bf16.mxu0 0
      %4564 = vmatpush1.bf16.msra.mxu0 %v4026
      %4565 = vmatprep.subr.bf16.mxu0 0
      %4566 = vmatpush1.bf16.msra.mxu0 %v4027
      %4567 = vmatprep.subr.bf16.mxu0 0
      %4568 = vmatpush1.bf16.msra.mxu0 %v4028
      %4569 = vmatprep.subr.bf16.mxu0 0
      %4570 = vmatpush1.bf16.msra.mxu0 %v4029
      %4571 = vmatprep.subr.bf16.mxu0 0
      %4572 = vmatpush1.bf16.msra.mxu0 %v4030
      %4573 = vmatprep.subr.bf16.mxu0 0
      %4574 = vmatpush1.bf16.msra.mxu0 %v4031
      %4575 = vmatprep.subr.bf16.mxu0 0
      %4576 = vmatpush1.bf16.msra.mxu0 %v4032
      %4577 = vmatprep.mubr.bf16.mxu0 %v3172
      %4578 = vmatmul.mubr.bf16.gmra.mrb[0].mxu0 %v3171
      %v4579 = vpop.f32.mrb[0].mxu0
      %v4580 = vadd.f32 %v4524, %v4579
      %v4581 = vpop.f32.mrb[0].mxu0
      %v4582 = vpop.f32.mrb[0].mxu0
      %v4583 = vadd.f32 %v4527, %v4582
      %v4584 = vpop.f32.mrb[0].mxu0
      %4585 = vmatprep.mubr.bf16.mxu0 %v3174
      %4586 = vmatmul.mubr.bf16.gmra.mrb[0].mxu0 %v3173
      %v4587 = vpop.f32.mrb[0].mxu0
      %v4588 = vadd.f32 %v4532, %v4587
      %v4589 = vpop.f32.mrb[0].mxu0
      %v4590 = vpop.f32.mrb[0].mxu0
      %v4591 = vadd.f32 %v4535, %v4590
      %v4592 = vpop.f32.mrb[0].mxu0
      %4593 = vmatprep.mubr.bf16.mxu0 %v3176
      %4594 = vmatmul.mubr.bf16.gmra.mrb[0].mxu0 %v3175
      %v4595 = vpop.f32.mrb[0].mxu0
      %v4596 = vadd.f32 %v4540, %v4595
      %v4597 = vpop.f32.mrb[0].mxu0
      %v4598 = vpop.f32.mrb[0].mxu0
      %v4599 = vpop.f32.mrb[0].mxu0
      %4600 = vdwg.mxu0
      %4601 = vmatprep.subr.bf16.mxu0 0
      %4602 = vmatpush1.bf16.msra.mxu0 %v4033
      %4603 = vmatprep.subr.bf16.mxu0 0
      %4604 = vmatpush1.bf16.msra.mxu0 %v4034
      %4605 = vmatprep.subr.bf16.mxu0 0
      %4606 = vmatpush1.bf16.msra.mxu0 %v4035
      %4607 = vmatprep.subr.bf16.mxu0 0
      %4608 = vmatpush1.bf16.msra.mxu0 %v4036
      %4609 = vmatprep.subr.bf16.mxu0 0
      %4610 = vmatpush1.bf16.msra.mxu0 %v4037
      %4611 = vmatprep.subr.bf16.mxu0 0
      %4612 = vmatpush1.bf16.msra.mxu0 %v4038
      %4613 = vmatprep.subr.bf16.mxu0 0
      %4614 = vmatpush1.bf16.msra.mxu0 %v4039
      %4615 = vmatprep.subr.bf16.mxu0 0
      %4616 = vmatpush1.bf16.msra.mxu0 %v4040
      %4617 = vmatprep.subr.bf16.mxu0 0
      %4618 = vmatpush1.bf16.msra.mxu0 %v4041
      %4619 = vmatprep.subr.bf16.mxu0 0
      %4620 = vmatpush1.bf16.msra.mxu0 %v4042
      %4621 = vmatprep.subr.bf16.mxu0 0
      %4622 = vmatpush1.bf16.msra.mxu0 %v4043
      %4623 = vmatprep.subr.bf16.mxu0 0
      %4624 = vmatpush1.bf16.msra.mxu0 %v4044
      %4625 = vmatprep.subr.bf16.mxu0 0
      %4626 = vmatpush1.bf16.msra.mxu0 %v4045
      %4627 = vmatprep.subr.bf16.mxu0 0
      %4628 = vmatpush1.bf16.msra.mxu0 %v4046
      %4629 = vmatprep.subr.bf16.mxu0 0
      %4630 = vmatpush1.bf16.msra.mxu0 %v4047
      %4631 = vmatprep.subr.bf16.mxu0 0
      %4632 = vmatpush1.bf16.msra.mxu0 %v4048
      %4633 = vmatprep.mubr.bf16.mxu0 %v3216
      %4634 = vmatmul.mubr.bf16.gmra.mrb[0].mxu0 %v3208
      %v4635 = vpop.f32.mrb[0].mxu0
      %v4636 = vadd.f32 %v4580, %v4635
      %v4637 = vpop.f32.mrb[0].mxu0
      %v4638 = vpop.f32.mrb[0].mxu0
      %v4639 = vadd.f32 %v4583, %v4638
      %v4640 = vpop.f32.mrb[0].mxu0
      %4641 = vmatprep.mubr.bf16.mxu0 %v3324
      %4642 = vmatmul.mubr.bf16.gmra.mrb[0].mxu0 %v3319
      %v4643 = vpop.f32.mrb[0].mxu0
      %v4644 = vadd.f32 %v4588, %v4643
      %v4645 = vpop.f32.mrb[0].mxu0
      %v4646 = vpop.f32.mrb[0].mxu0
      %v4647 = vadd.f32 %v4591, %v4646
      %v4648 = vpop.f32.mrb[0].mxu0
      %4649 = vmatprep.mubr.bf16.mxu0 %v3330
      %4650 = vmatmul.mubr.bf16.gmra.mrb[0].mxu0 %v3327
      %v4651 = vpop.f32.mrb[0].mxu0
      %v4652 = vadd.f32 %v4596, %v4651
      %v4653 = vpop.f32.mrb[0].mxu0
      %v4654 = vpop.f32.mrb[0].mxu0
      %v4655 = vpop.f32.mrb[0].mxu0
      %4656 = vdwg.mxu0
      %4657 = vmatprep.subr.bf16.mxu0 0
      %4658 = vmatpush1.bf16.msra.mxu0 %v4049
      %4659 = vmatprep.subr.bf16.mxu0 0
      %4660 = vmatpush1.bf16.msra.mxu0 %v4050
      %4661 = vmatprep.subr.bf16.mxu0 0
      %4662 = vmatpush1.bf16.msra.mxu0 %v4051
      %4663 = vmatprep.subr.bf16.mxu0 0
      %4664 = vmatpush1.bf16.msra.mxu0 %v4052
      %4665 = vmatprep.subr.bf16.mxu0 0
      %4666 = vmatpush1.bf16.msra.mxu0 %v4053
      %4667 = vmatprep.subr.bf16.mxu0 0
      %4668 = vmatpush1.bf16.msra.mxu0 %v4054
      %4669 = vmatprep.subr.bf16.mxu0 0
      %4670 = vmatpush1.bf16.msra.mxu0 %v4055
      %4671 = vmatprep.subr.bf16.mxu0 0
      %4672 = vmatpush1.bf16.msra.mxu0 %v4056
      %4673 = vmatprep.subr.bf16.mxu0 0
      %4674 = vmatpush1.bf16.msra.mxu0 %v4057
      %4675 = vmatprep.subr.bf16.mxu0 0
      %4676 = vmatpush1.bf16.msra.mxu0 %v4058
      %4677 = vmatprep.subr.bf16.mxu0 0
      %4678 = vmatpush1.bf16.msra.mxu0 %v4059
      %4679 = vmatprep.subr.bf16.mxu0 0
      %4680 = vmatpush1.bf16.msra.mxu0 %v4060
      %4681 = vmatprep.subr.bf16.mxu0 0
      %4682 = vmatpush1.bf16.msra.mxu0 %v4061
      %4683 = vmatprep.subr.bf16.mxu0 0
      %4684 = vmatpush1.bf16.msra.mxu0 %v4062
      %4685 = vmatprep.subr.bf16.mxu0 0
      %4686 = vmatpush1.bf16.msra.mxu0 %v4063
      %4687 = vmatprep.subr.bf16.mxu0 0
      %4688 = vmatpush1.bf16.msra.mxu0 %v4064
      %4689 = vmatprep.mubr.bf16.mxu0 %v3245
      %4690 = vmatmul.mubr.bf16.gmra.mrb[0].mxu0 %v3243
      %v4691 = vpop.f32.mrb[0].mxu0
      %v4692 = vadd.f32 %v4636, %v4691
      %v4693 = vpop.f32.mrb[0].mxu0
      %v4694 = vpop.f32.mrb[0].mxu0
      %v4695 = vadd.f32 %v4639, %v4694
      %v4696 = vpop.f32.mrb[0].mxu0
      %4697 = vmatprep.mubr.bf16.mxu0 %v3340
      %4698 = vmatmul.mubr.bf16.gmra.mrb[0].mxu0 %v3338
      %v4699 = vpop.f32.mrb[0].mxu0
      %v4700 = vadd.f32 %v4644, %v4699
      %v4701 = vpop.f32.mrb[0].mxu0
      %v4702 = vpop.f32.mrb[0].mxu0
      %v4703 = vadd.f32 %v4647, %v4702
      %v4704 = vpop.f32.mrb[0].mxu0
      %4705 = vmatprep.mubr.bf16.mxu0 %v3339
      %4706 = vmatmul.mubr.bf16.gmra.mrb[0].mxu0 %v3337
      %v4707 = vpop.f32.mrb[0].mxu0
      %v4708 = vadd.f32 %v4652, %v4707
      %v4709 = vpop.f32.mrb[0].mxu0
      %v4710 = vpop.f32.mrb[0].mxu0
      %v4711 = vpop.f32.mrb[0].mxu0
      %4712 = vdwg.mxu0
      %v4713 = vpack.c.bf16 %v4695, %v4692
      %v4714 = vpack.c.bf16 %v4703, %v4700
      %v4715 = vpack.c.bf16 %v4708, %v4708
      %v4717 = vshrl.u32 %v4713, 16
      %v4719 = vshll.u32 %v4713, 16
      %v4721 = vrot.slane %v4719, 1
      %v4722 = vor.u32 %v4717, %v4721
      %4723 = vrot.lane.b32.xlu0 %v4722, 64
      %v4724 = vpop.permute.xlu0 %4723
      %v4726 = vrot.slane %v4713, 1
      %v4727 = vrot.slane %v4717, 1
      %v4728 = vrot.slane %v4719, 2
      %v4729 = vor.u32 %v4727, %v4728
      %4730 = vrot.lane.b32.xlu0 %v4729, 64
      %v4731 = vpop.permute.xlu0 %4730
      %v4733 = vrot.slane %v4713, 4
      %v4734 = vrot.slane %v4714, 4
      %v4735 = vsel %vm3252, %v4733, %v4734
      %v4736 = vrot.slane %v4717, 4
      %v4737 = vrot.slane %v4719, 5
      %v4738 = vor.u32 %v4736, %v4737
      %v4740 = vshrl.u32 %v4714, 16
      %v4742 = vrot.slane %v4740, 4
      %v4743 = vshll.u32 %v4714, 16
      %v4745 = vrot.slane %v4743, 5
      %v4746 = vor.u32 %v4742, %v4745
      %v4747 = vsel %vm3269, %v4738, %v4746
      %4748 = vrot.lane.b32.xlu0 %v4747, 64
      %v4749 = vpop.permute.xlu0 %4748
      %v4750 = vrot.slane %v4713, 5
      %v4751 = vrot.slane %v4714, 5
      %v4752 = vsel %vm3298, %v4750, %v4751
      %vm4753 = vsmask.f32 2304
      %v4754 = vrot.slane %v4717, 5
      %v4755 = vrot.slane %v4719, 6
      %v4756 = vor.u32 %v4754, %v4755
      %v4757 = vrot.slane %v4740, 5
      %v4758 = vrot.slane %v4743, 6
      %v4759 = vor.u32 %v4757, %v4758
      %v4760 = vsel %vm4753, %v4756, %v4759
      %4761 = vrot.lane.b32.xlu0 %v4760, 64
      %v4762 = vpop.permute.xlu0 %4761
      %v4763 = vrot.slane %v4743, 1
      %v4764 = vor.u32 %v4740, %v4763
      %4765 = vrot.lane.b32.xlu0 %v4764, 64
      %v4766 = vpop.permute.xlu0 %4765
      %v4767 = vrot.slane %v4714, 1
      %v4768 = vrot.slane %v4740, 1
      %v4769 = vrot.slane %v4743, 2
      %v4770 = vor.u32 %v4768, %v4769
      %4771 = vrot.lane.b32.xlu0 %v4770, 64
      %v4772 = vpop.permute.xlu0 %4771
      %v4774 = vrot.slane %v4715, 4
      %v4775 = vsel %vm3252, %v4734, %v4774
      %v4777 = vshrl.u32 %v4715, 16
      %v4779 = vrot.slane %v4777, 4
      %v4780 = vshll.u32 %v4715, 16
      %v4782 = vrot.slane %v4780, 5
      %v4783 = vor.u32 %v4779, %v4782
      %v4784 = vsel %vm3269, %v4746, %v4783
      %4785 = vrot.lane.b32.xlu0 %v4784, 64
      %v4786 = vpop.permute.xlu0 %4785
      %v4787 = vrot.slane %v4715, 5
      %v4788 = vsel %vm3298, %v4751, %v4787
      %v4789 = vrot.slane %v4777, 5
      %v4790 = vrot.slane %v4780, 6
      %v4791 = vor.u32 %v4789, %v4790
      %v4792 = vsel %vm4753, %v4759, %v4791
      %4793 = vrot.lane.b32.xlu0 %v4792, 64
      %v4794 = vpop.permute.xlu0 %4793
      %vm4795 = vcmask 523264
      %v4797 = vsel %vm4795, %v4713, %v4724
      %v4801 = vsel %vm4795, %v4726, %v4731
      %v4805 = vsel %vm4795, %v4735, %v4749
      %v4809 = vsel %vm4795, %v4752, %v4762
      %v4812 = vsel %vm4795, %v4714, %v4766
      %v4816 = vsel %vm4795, %v4767, %v4772
      %v4820 = vsel %vm4795, %v4775, %v4786
      %v4824 = vsel %vm4795, %v4788, %v4794
      %v4826 = vld [vmem:[%s4] sm:$0x1]
      %v4828 = vlaneseq
      %v4829 = vshrl.u32 %v4828, 7
      %v4830 = vsub.s32 0, %v4829
      %v4831 = vrot.slane %v4826, %v4830
      %v4961 = vunpack.c.l.b16 %v786
      %v4962 = vunpack.c.l.b16 %v787
      %v4963 = vunpack.c.l.b16 %v788
      %v4964 = vunpack.c.l.b16 %v789
      %v4965 = vunpack.c.l.b16 %v790
      %v4966 = vunpack.c.l.b16 %v791
      %v4967 = vunpack.c.l.b16 %v792
      %v4968 = vunpack.c.l.b16 %v793
      %v4969 = vunpack.c.l.b16 %v794
      %v4970 = vunpack.c.l.b16 %v795
      %v4971 = vunpack.c.l.b16 %v796
      %v4972 = vunpack.c.l.b16 %v797
      %v4973 = vunpack.c.l.b16 %v798
      %v4974 = vunpack.c.l.b16 %v799
      %v4975 = vunpack.c.l.b16 %v800
      %v4976 = vunpack.c.l.b16 %v801
      %v4977 = vunpack.c.l.b16 %v802
      %v4978 = vunpack.c.l.b16 %v803
      %v4979 = vunpack.c.l.b16 %v804
      %v4980 = vunpack.c.l.b16 %v805
      %v4981 = vunpack.c.l.b16 %v806
      %v4982 = vunpack.c.l.b16 %v807
      %v4983 = vunpack.c.l.b16 %v808
      %v4984 = vunpack.c.l.b16 %v809
      %v4985 = vunpack.c.l.b16 %v810
      %v4986 = vunpack.c.l.b16 %v811
      %v4987 = vunpack.c.l.b16 %v812
      %v4988 = vunpack.c.l.b16 %v813
      %v4989 = vunpack.c.l.b16 %v814
      %v4990 = vunpack.c.l.b16 %v815
      %v4991 = vunpack.c.l.b16 %v816
      %v4992 = vunpack.c.l.b16 %v817
      %v4993 = vunpack.c.l.b16 %v818
      %v4994 = vunpack.c.l.b16 %v819
      %v4995 = vunpack.c.l.b16 %v820
      %v4996 = vunpack.c.l.b16 %v821
      %v4997 = vunpack.c.l.b16 %v822
      %v4998 = vunpack.c.l.b16 %v823
      %v4999 = vunpack.c.l.b16 %v824
      %v5000 = vunpack.c.l.b16 %v825
      %v5001 = vunpack.c.l.b16 %v826
      %v5002 = vunpack.c.l.b16 %v827
      %v5003 = vunpack.c.l.b16 %v828
      %v5004 = vunpack.c.l.b16 %v829
      %v5005 = vunpack.c.l.b16 %v830
      %v5006 = vunpack.c.l.b16 %v831
      %v5007 = vunpack.c.l.b16 %v832
      %v5008 = vunpack.c.l.b16 %v833
      %v5009 = vunpack.c.l.b16 %v834
      %v5010 = vunpack.c.l.b16 %v835
      %v5011 = vunpack.c.l.b16 %v836
      %v5012 = vunpack.c.l.b16 %v837
      %v5013 = vunpack.c.l.b16 %v838
      %v5014 = vunpack.c.l.b16 %v839
      %v5015 = vunpack.c.l.b16 %v840
      %v5016 = vunpack.c.l.b16 %v841
      %v5017 = vunpack.c.l.b16 %v842
      %v5018 = vunpack.c.l.b16 %v843
      %v5019 = vunpack.c.l.b16 %v844
      %v5020 = vunpack.c.l.b16 %v845
      %v5021 = vunpack.c.l.b16 %v846
      %v5022 = vunpack.c.l.b16 %v847
      %v5023 = vunpack.c.l.b16 %v848
      %v5024 = vunpack.c.l.b16 %v849
      %v5025 = vunpack.c.l.b16 %v850
      %v5026 = vunpack.c.l.b16 %v851
      %v5027 = vunpack.c.l.b16 %v852
      %v5028 = vunpack.c.l.b16 %v853
      %v5029 = vunpack.c.l.b16 %v854
      %v5030 = vunpack.c.l.b16 %v855
      %v5031 = vunpack.c.l.b16 %v856
      %v5032 = vunpack.c.l.b16 %v857
      %v5033 = vunpack.c.l.b16 %v858
      %v5034 = vunpack.c.l.b16 %v859
      %v5035 = vunpack.c.l.b16 %v860
      %v5036 = vunpack.c.l.b16 %v861
      %v5037 = vunpack.c.l.b16 %v862
      %v5038 = vunpack.c.l.b16 %v863
      %v5039 = vunpack.c.l.b16 %v864
      %v5040 = vunpack.c.l.b16 %v865
      %v5041 = vunpack.c.l.b16 %v866
      %v5042 = vunpack.c.l.b16 %v867
      %v5043 = vunpack.c.l.b16 %v868
      %v5044 = vunpack.c.l.b16 %v869
      %v5045 = vunpack.c.l.b16 %v870
      %v5046 = vunpack.c.l.b16 %v871
      %v5047 = vunpack.c.l.b16 %v872
      %v5048 = vunpack.c.l.b16 %v873
      %v5049 = vunpack.c.l.b16 %v874
      %v5050 = vunpack.c.l.b16 %v875
      %v5051 = vunpack.c.l.b16 %v876
      %v5052 = vunpack.c.l.b16 %v877
      %v5053 = vunpack.c.l.b16 %v878
      %v5054 = vunpack.c.l.b16 %v879
      %v5055 = vunpack.c.l.b16 %v880
      %v5056 = vunpack.c.l.b16 %v881
      %v5057 = vunpack.c.l.b16 %v882
      %v5058 = vunpack.c.l.b16 %v883
      %v5059 = vunpack.c.l.b16 %v884
      %v5060 = vunpack.c.l.b16 %v885
      %v5061 = vunpack.c.l.b16 %v886
      %v5062 = vunpack.c.l.b16 %v887
      %v5063 = vunpack.c.l.b16 %v888
      %v5064 = vunpack.c.l.b16 %v889
      %v5065 = vunpack.c.l.b16 %v890
      %v5066 = vunpack.c.l.b16 %v891
      %v5067 = vunpack.c.l.b16 %v892
      %v5068 = vunpack.c.l.b16 %v893
      %v5069 = vunpack.c.l.b16 %v894
      %v5070 = vunpack.c.l.b16 %v895
      %v5071 = vunpack.c.l.b16 %v896
      %v5072 = vunpack.c.l.b16 %v897
      %v5073 = vunpack.c.l.b16 %v898
      %v5074 = vunpack.c.l.b16 %v899
      %v5075 = vunpack.c.l.b16 %v900
      %v5076 = vunpack.c.l.b16 %v901
      %v5077 = vunpack.c.l.b16 %v902
      %v5078 = vunpack.c.l.b16 %v903
      %v5079 = vunpack.c.l.b16 %v904
      %v5080 = vunpack.c.l.b16 %v905
      %v5081 = vunpack.c.l.b16 %v906
      %v5082 = vunpack.c.l.b16 %v907
      %v5083 = vunpack.c.l.b16 %v908
      %v5084 = vunpack.c.l.b16 %v909
      %v5085 = vunpack.c.l.b16 %v910
      %v5086 = vunpack.c.l.b16 %v911
      %v5087 = vunpack.c.l.b16 %v912
      %v5088 = vunpack.c.l.b16 %v913
      %v5089 = vpack.c.b16 %v4962, %v4961
      %v5090 = vpack.c.b16 %v4964, %v4963
      %v5091 = vpack.c.b16 %v4966, %v4965
      %v5092 = vpack.c.b16 %v4968, %v4967
      %v5093 = vpack.c.b16 %v4970, %v4969
      %v5094 = vpack.c.b16 %v4972, %v4971
      %v5095 = vpack.c.b16 %v4974, %v4973
      %v5096 = vpack.c.b16 %v4976, %v4975
      %v5097 = vpack.c.b16 %v4978, %v4977
      %v5098 = vpack.c.b16 %v4980, %v4979
      %v5099 = vpack.c.b16 %v4982, %v4981
      %v5100 = vpack.c.b16 %v4984, %v4983
      %v5101 = vpack.c.b16 %v4986, %v4985
      %v5102 = vpack.c.b16 %v4988, %v4987
      %v5103 = vpack.c.b16 %v4990, %v4989
      %v5104 = vpack.c.b16 %v4992, %v4991
      %v5105 = vpack.c.b16 %v4994, %v4993
      %v5106 = vpack.c.b16 %v4996, %v4995
      %v5107 = vpack.c.b16 %v4998, %v4997
      %v5108 = vpack.c.b16 %v5000, %v4999
      %v5109 = vpack.c.b16 %v5002, %v5001
      %v5110 = vpack.c.b16 %v5004, %v5003
      %v5111 = vpack.c.b16 %v5006, %v5005
      %v5112 = vpack.c.b16 %v5008, %v5007
      %v5113 = vpack.c.b16 %v5010, %v5009
      %v5114 = vpack.c.b16 %v5012, %v5011
      %v5115 = vpack.c.b16 %v5014, %v5013
      %v5116 = vpack.c.b16 %v5016, %v5015
      %v5117 = vpack.c.b16 %v5018, %v5017
      %v5118 = vpack.c.b16 %v5020, %v5019
      %v5119 = vpack.c.b16 %v5022, %v5021
      %v5120 = vpack.c.b16 %v5024, %v5023
      %v5121 = vpack.c.b16 %v5026, %v5025
      %v5122 = vpack.c.b16 %v5028, %v5027
      %v5123 = vpack.c.b16 %v5030, %v5029
      %v5124 = vpack.c.b16 %v5032, %v5031
      %v5125 = vpack.c.b16 %v5034, %v5033
      %v5126 = vpack.c.b16 %v5036, %v5035
      %v5127 = vpack.c.b16 %v5038, %v5037
      %v5128 = vpack.c.b16 %v5040, %v5039
      %v5129 = vpack.c.b16 %v5042, %v5041
      %v5130 = vpack.c.b16 %v5044, %v5043
      %v5131 = vpack.c.b16 %v5046, %v5045
      %v5132 = vpack.c.b16 %v5048, %v5047
      %v5133 = vpack.c.b16 %v5050, %v5049
      %v5134 = vpack.c.b16 %v5052, %v5051
      %v5135 = vpack.c.b16 %v5054, %v5053
      %v5136 = vpack.c.b16 %v5056, %v5055
      %v5137 = vpack.c.b16 %v5058, %v5057
      %v5138 = vpack.c.b16 %v5060, %v5059
      %v5139 = vpack.c.b16 %v5062, %v5061
      %v5140 = vpack.c.b16 %v5064, %v5063
      %v5141 = vpack.c.b16 %v5066, %v5065
      %v5142 = vpack.c.b16 %v5068, %v5067
      %v5143 = vpack.c.b16 %v5070, %v5069
      %v5144 = vpack.c.b16 %v5072, %v5071
      %v5145 = vpack.c.b16 %v5074, %v5073
      %v5146 = vpack.c.b16 %v5076, %v5075
      %v5147 = vpack.c.b16 %v5078, %v5077
      %v5148 = vpack.c.b16 %v5080, %v5079
      %v5149 = vpack.c.b16 %v5082, %v5081
      %v5150 = vpack.c.b16 %v5084, %v5083
      %v5151 = vpack.c.b16 %v5086, %v5085
      %v5152 = vpack.c.b16 %v5088, %v5087
      %5217 = vmatprep.subr.bf16.mxu0 0
      %5218 = vmatpush1.bf16.msra.mxu0 %v5089
      %5219 = vmatprep.subr.bf16.mxu0 0
      %5220 = vmatpush1.bf16.msra.mxu0 %v5090
      %5221 = vmatprep.subr.bf16.mxu0 0
      %5222 = vmatpush1.bf16.msra.mxu0 %v5091
      %5223 = vmatprep.subr.bf16.mxu0 0
      %5224 = vmatpush1.bf16.msra.mxu0 %v5092
      %5225 = vmatprep.subr.bf16.mxu0 0
      %5226 = vmatpush1.bf16.msra.mxu0 %v5093
      %5227 = vmatprep.subr.bf16.mxu0 0
      %5228 = vmatpush1.bf16.msra.mxu0 %v5094
      %5229 = vmatprep.subr.bf16.mxu0 0
      %5230 = vmatpush1.bf16.msra.mxu0 %v5095
      %5231 = vmatprep.subr.bf16.mxu0 0
      %5232 = vmatpush1.bf16.msra.mxu0 %v5096
      %5233 = vmatprep.subr.bf16.mxu0 0
      %5234 = vmatpush1.bf16.msra.mxu0 %v5097
      %5235 = vmatprep.subr.bf16.mxu0 0
      %5236 = vmatpush1.bf16.msra.mxu0 %v5098
      %5237 = vmatprep.subr.bf16.mxu0 0
      %5238 = vmatpush1.bf16.msra.mxu0 %v5099
      %5239 = vmatprep.subr.bf16.mxu0 0
      %5240 = vmatpush1.bf16.msra.mxu0 %v5100
      %5241 = vmatprep.subr.bf16.mxu0 0
      %5242 = vmatpush1.bf16.msra.mxu0 %v5101
      %5243 = vmatprep.subr.bf16.mxu0 0
      %5244 = vmatpush1.bf16.msra.mxu0 %v5102
      %5245 = vmatprep.subr.bf16.mxu0 0
      %5246 = vmatpush1.bf16.msra.mxu0 %v5103
      %5247 = vmatprep.subr.bf16.mxu0 0
      %5248 = vmatpush1.bf16.msra.mxu0 %v5104
      %5249 = vmatprep.mubr.bf16.mxu0 %v4801
      %5250 = vmatmul.mubr.bf16.gmra.mrb[0].mxu0 %v4797
      %v5251 = vpop.f32.mrb[0].mxu0
      %v5252 = vadd.f32 %v4831, %v5251
      %v5253 = vpop.f32.mrb[0].mxu0
      %v5254 = vpop.f32.mrb[0].mxu0
      %v5255 = vadd.f32 %v4831, %v5254
      %v5256 = vpop.f32.mrb[0].mxu0
      %5257 = vdwg.mxu0
      %5258 = vmatprep.subr.bf16.mxu0 0
      %5259 = vmatpush1.bf16.msra.mxu0 %v5105
      %5260 = vmatprep.subr.bf16.mxu0 0
      %5261 = vmatpush1.bf16.msra.mxu0 %v5106
      %5262 = vmatprep.subr.bf16.mxu0 0
      %5263 = vmatpush1.bf16.msra.mxu0 %v5107
      %5264 = vmatprep.subr.bf16.mxu0 0
      %5265 = vmatpush1.bf16.msra.mxu0 %v5108
      %5266 = vmatprep.subr.bf16.mxu0 0
      %5267 = vmatpush1.bf16.msra.mxu0 %v5109
      %5268 = vmatprep.subr.bf16.mxu0 0
      %5269 = vmatpush1.bf16.msra.mxu0 %v5110
      %5270 = vmatprep.subr.bf16.mxu0 0
      %5271 = vmatpush1.bf16.msra.mxu0 %v5111
      %5272 = vmatprep.subr.bf16.mxu0 0
      %5273 = vmatpush1.bf16.msra.mxu0 %v5112
      %5274 = vmatprep.subr.bf16.mxu0 0
      %5275 = vmatpush1.bf16.msra.mxu0 %v5113
      %5276 = vmatprep.subr.bf16.mxu0 0
      %5277 = vmatpush1.bf16.msra.mxu0 %v5114
      %5278 = vmatprep.subr.bf16.mxu0 0
      %5279 = vmatpush1.bf16.msra.mxu0 %v5115
      %5280 = vmatprep.subr.bf16.mxu0 0
      %5281 = vmatpush1.bf16.msra.mxu0 %v5116
      %5282 = vmatprep.subr.bf16.mxu0 0
      %5283 = vmatpush1.bf16.msra.mxu0 %v5117
      %5284 = vmatprep.subr.bf16.mxu0 0
      %5285 = vmatpush1.bf16.msra.mxu0 %v5118
      %5286 = vmatprep.subr.bf16.mxu0 0
      %5287 = vmatpush1.bf16.msra.mxu0 %v5119
      %5288 = vmatprep.subr.bf16.mxu0 0
      %5289 = vmatpush1.bf16.msra.mxu0 %v5120
      %5290 = vmatprep.mubr.bf16.mxu0 %v4809
      %5291 = vmatmul.mubr.bf16.gmra.mrb[0].mxu0 %v4805
      %v5292 = vpop.f32.mrb[0].mxu0
      %v5293 = vadd.f32 %v5252, %v5292
      %v5294 = vpop.f32.mrb[0].mxu0
      %v5295 = vpop.f32.mrb[0].mxu0
      %v5296 = vadd.f32 %v5255, %v5295
      %v5297 = vpop.f32.mrb[0].mxu0
      %5298 = vdwg.mxu0
      %5299 = vmatprep.subr.bf16.mxu0 0
      %5300 = vmatpush1.bf16.msra.mxu0 %v5121
      %5301 = vmatprep.subr.bf16.mxu0 0
      %5302 = vmatpush1.bf16.msra.mxu0 %v5122
      %5303 = vmatprep.subr.bf16.mxu0 0
      %5304 = vmatpush1.bf16.msra.mxu0 %v5123
      %5305 = vmatprep.subr.bf16.mxu0 0
      %5306 = vmatpush1.bf16.msra.mxu0 %v5124
      %5307 = vmatprep.subr.bf16.mxu0 0
      %5308 = vmatpush1.bf16.msra.mxu0 %v5125
      %5309 = vmatprep.subr.bf16.mxu0 0
      %5310 = vmatpush1.bf16.msra.mxu0 %v5126
      %5311 = vmatprep.subr.bf16.mxu0 0
      %5312 = vmatpush1.bf16.msra.mxu0 %v5127
      %5313 = vmatprep.subr.bf16.mxu0 0
      %5314 = vmatpush1.bf16.msra.mxu0 %v5128
      %5315 = vmatprep.subr.bf16.mxu0 0
      %5316 = vmatpush1.bf16.msra.mxu0 %v5129
      %5317 = vmatprep.subr.bf16.mxu0 0
      %5318 = vmatpush1.bf16.msra.mxu0 %v5130
      %5319 = vmatprep.subr.bf16.mxu0 0
      %5320 = vmatpush1.bf16.msra.mxu0 %v5131
      %5321 = vmatprep.subr.bf16.mxu0 0
      %5322 = vmatpush1.bf16.msra.mxu0 %v5132
      %5323 = vmatprep.subr.bf16.mxu0 0
      %5324 = vmatpush1.bf16.msra.mxu0 %v5133
      %5325 = vmatprep.subr.bf16.mxu0 0
      %5326 = vmatpush1.bf16.msra.mxu0 %v5134
      %5327 = vmatprep.subr.bf16.mxu0 0
      %5328 = vmatpush1.bf16.msra.mxu0 %v5135
      %5329 = vmatprep.subr.bf16.mxu0 0
      %5330 = vmatpush1.bf16.msra.mxu0 %v5136
      %5331 = vmatprep.mubr.bf16.mxu0 %v4816
      %5332 = vmatmul.mubr.bf16.gmra.mrb[0].mxu0 %v4812
      %v5333 = vpop.f32.mrb[0].mxu0
      %v5334 = vadd.f32 %v5293, %v5333
      %v5335 = vpop.f32.mrb[0].mxu0
      %v5336 = vpop.f32.mrb[0].mxu0
      %v5337 = vadd.f32 %v5296, %v5336
      %v5338 = vpop.f32.mrb[0].mxu0
      %5339 = vdwg.mxu0
      %5340 = vmatprep.subr.bf16.mxu0 0
      %5341 = vmatpush1.bf16.msra.mxu0 %v5137
      %5342 = vmatprep.subr.bf16.mxu0 0
      %5343 = vmatpush1.bf16.msra.mxu0 %v5138
      %5344 = vmatprep.subr.bf16.mxu0 0
      %5345 = vmatpush1.bf16.msra.mxu0 %v5139
      %5346 = vmatprep.subr.bf16.mxu0 0
      %5347 = vmatpush1.bf16.msra.mxu0 %v5140
      %5348 = vmatprep.subr.bf16.mxu0 0
      %5349 = vmatpush1.bf16.msra.mxu0 %v5141
      %5350 = vmatprep.subr.bf16.mxu0 0
      %5351 = vmatpush1.bf16.msra.mxu0 %v5142
      %5352 = vmatprep.subr.bf16.mxu0 0
      %5353 = vmatpush1.bf16.msra.mxu0 %v5143
      %5354 = vmatprep.subr.bf16.mxu0 0
      %5355 = vmatpush1.bf16.msra.mxu0 %v5144
      %5356 = vmatprep.subr.bf16.mxu0 0
      %5357 = vmatpush1.bf16.msra.mxu0 %v5145
      %5358 = vmatprep.subr.bf16.mxu0 0
      %5359 = vmatpush1.bf16.msra.mxu0 %v5146
      %5360 = vmatprep.subr.bf16.mxu0 0
      %5361 = vmatpush1.bf16.msra.mxu0 %v5147
      %5362 = vmatprep.subr.bf16.mxu0 0
      %5363 = vmatpush1.bf16.msra.mxu0 %v5148
      %5364 = vmatprep.subr.bf16.mxu0 0
      %5365 = vmatpush1.bf16.msra.mxu0 %v5149
      %5366 = vmatprep.subr.bf16.mxu0 0
      %5367 = vmatpush1.bf16.msra.mxu0 %v5150
      %5368 = vmatprep.subr.bf16.mxu0 0
      %5369 = vmatpush1.bf16.msra.mxu0 %v5151
      %5370 = vmatprep.subr.bf16.mxu0 0
      %5371 = vmatpush1.bf16.msra.mxu0 %v5152
      %5372 = vmatprep.mubr.bf16.mxu0 %v4824
      %5373 = vmatmul.mubr.bf16.gmra.mrb[0].mxu0 %v4820
      %v5374 = vpop.f32.mrb[0].mxu0
      %v5375 = vadd.f32 %v5334, %v5374
      %v5376 = vpop.f32.mrb[0].mxu0
      %v5377 = vpop.f32.mrb[0].mxu0
      %v5378 = vadd.f32 %v5337, %v5377
      %v5379 = vpop.f32.mrb[0].mxu0
      %5380 = vdwg.mxu0
      %v5382 = vrot.slane %v5378, 5
      %vm5384 = vcmask 1042432
      %v5385 = vsel %vm5384, %v5375, %v5382
      %vm5386 = vcmask 783360
      %5387 = vst.msk [vmem:[%s222] sm:$0x3f] %vm5386, %v5385
      %p5388 = scmp.lt.s32.totalorder %s16, 1
      %s5389 = scalar_select %p5388, %s16, 1
      %s5390 = smul.addr %s5389, 8
      %s5391 = scalar_lea.vmem %s5, %s5390
      // Predicated region
      $region41: #{encoder_forward.1} parent=39 // pred_check
        %p5392 = pneg %p144
      $region42: #{encoder_forward.1} parent=39 // pred_check_branch
        %5394 = sbr.rel (%p5392) target = $region44
      $region43: #{encoder_forward.1} parent=39 // pred_region
        _
      $region44: #{encoder_forward.1} parent=39 // pred_fallthru
        _
    $region40: #{encoder_forward.1} parent=5 // pred_fallthru
      _
    %p5395 = scmp.le.s32.totalorder 2, %s11
    // Predicated region
    $region45: #{encoder_forward.1} parent=5 // pred_check
      %p5396 = pneg %p5395
    $region46: #{encoder_forward.1} parent=5 // pred_check_branch
      %5398 = sbr.rel (%p5396) target = $region48
    $region47: #{encoder_forward.1} parent=5 // pred_region
      %s5399 = ssub.s32 %s11, 2
      // Predicated region
      $region49: #{encoder_forward.1} parent=47 // pred_check
        %p5400 = pneg %p150
      $region50: #{encoder_forward.1} parent=47 // pred_check_branch
        %5402 = sbr.rel (%p5400) target = $region52
      $region51: #{encoder_forward.1} parent=47 // pred_region
        %p5403 = scmp.lt.s32.totalorder %s17, 1
        %s5404 = scalar_select %p5403, %s17, 1
        %s5405 = smul.addr %s5404, 8
        %s5406 = scalar_lea.vmem %s5, %s5405
      $region52: #{encoder_forward.1} parent=47 // pred_fallthru
        _
    $region48: #{encoder_forward.1} parent=5 // pred_fallthru
      _
  $region6: #{encoder_forward.1} parent=0 // loop_footer
    %s15 = sadd.s32 1, %s11
  $region7: #{encoder_forward.1} parent=0 // loop_footer_branch
    %10 = sbr.rel target = $region3
  $region8: #{encoder_forward.1} parent=0 // loop_exit
    _

</llo_original>
